<compile_context>
chip_gen: v7x
topology: tpu7x:2x2x1
jax: 0.10.0
libtpu: 0.0.40
codegen_flags: <defaults>
</compile_context>

<pallas_src>
import functools

import jax
import jax.numpy as jnp
from jax import lax
from jax.experimental import pallas as pl
from jax.experimental.pallas import tpu as pltpu

EPS = 1e-5


def _round_up(x, m):
    return ((x + m - 1) // m) * m


def _vmem_capacity_bytes():
    try:
        return int(pltpu.get_tpu_info().vmem_capacity_bytes)
    except Exception:
        return 64 * 1024 * 1024          # conservative default (v7x per-core)


_VMEM_CAP = _vmem_capacity_bytes()
# Scoped VMEM limit with headroom: ~96 MiB on v5e/v6e (128 MiB physical),
# ~48 MiB on v7x (64 MiB physical).
_VMEM_LIMIT = min(_VMEM_CAP * 3 // 4, 100 * 1024 * 1024)
_TILE_BUDGET = _VMEM_LIMIT // 2


# ---------------------------------------------------------------------------
# Kernel 1: features-last matmul with fused per-column affine epilogue
#           (fused node_k / node_v / node_q 1x1 conv + bias)
# ---------------------------------------------------------------------------
def _proj_affine_kernel(x_ref, w_ref, s_ref, b_ref, o_ref):
    acc = jnp.dot(x_ref[...], w_ref[...], preferred_element_type=jnp.float32)
    o_ref[...] = (acc * s_ref[...] + b_ref[...]).astype(o_ref.dtype)


def _choose_tile_m(m, k, tn, out_bytes):
    """Largest row tile within the VMEM budget; multiple of 8; prefers a divisor of m."""
    per_row = 2 * (2 * k + out_bytes * tn)            # double-buffered x + out blocks
    fixed = 2 * (2 * k * tn + 2 * 4 * tn)             # weight + scale/bias blocks
    avail = max(_TILE_BUDGET - fixed, per_row * 8)
    tm = int(min(avail // per_row, 1024, m))
    tm = max(8, (tm // 8) * 8)
    if m % 8 == 0:
        t = tm
        while t >= 8 and m % t != 0:                  # avoid pad + trailing-slice copies
            t -= 8
        if t >= 8:
            return t, False
    return tm, (m % tm != 0)


def proj_affine(x_bf, w, scale, bias, out_dtype=jnp.bfloat16):
    """out = (x @ w) * scale + bias   (per-column affine; lane-dense output)."""
    m, k = x_bf.shape
    n = w.shape[1]
    assert n % 128 == 0, "output width must be lane-padded to a multiple of 128"
    if n <= 512:
        tn = n
    else:
        tn = 512 if n % 512 == 0 else (256 if n % 256 == 0 else 128)

    out_bytes = 2 if out_dtype == jnp.bfloat16 else 4
    tm, needs_pad = _choose_tile_m(m, k, tn, out_bytes)
    grid_m = pl.cdiv(m, tm)
    m_pad = grid_m * tm

    xin = x_bf if not needs_pad else jnp.pad(x_bf, ((0, m_pad - m), (0, 0)))
    out = pl.pallas_call(
        _proj_affine_kernel,
        out_shape=jax.ShapeDtypeStruct((m_pad, n), out_dtype),
        grid=(grid_m, n // tn),
        in_specs=[
            pl.BlockSpec((tm, k), lambda i, j: (i, 0)),
            pl.BlockSpec((k, tn), lambda i, j: (0, j)),
            pl.BlockSpec((1, tn), lambda i, j: (0, j)),
            pl.BlockSpec((1, tn), lambda i, j: (0, j)),
        ],
        out_specs=pl.BlockSpec((tm, tn), lambda i, j: (i, j)),
        compiler_params=pltpu.CompilerParams(
            dimension_semantics=("parallel", "parallel"),
            vmem_limit_bytes=_VMEM_LIMIT,
        ),
    )(xin, w.astype(jnp.bfloat16),
      scale.reshape(1, n).astype(jnp.float32),
      bias.reshape(1, n).astype(jnp.float32))
    return out[:m] if needs_pad else out


# ---------------------------------------------------------------------------
# Kernel 2: fused SpatialGCN core (per batch-tile)
#   A = softmax(node_q @ node_v); AV = node_k @ A; AVW = AV @ Wwg^T; bn_wg;
#   out = relu(AVW @ Wout * s + b + residual)      -- all in one kernel.
# ---------------------------------------------------------------------------
def _sgcn_fused_kernel(kvq_ref, res_ref, wgT_ref, wgs_ref, wgb_ref,
                       ow_ref, os_ref, ob_ref, o_ref, *, ip):
    bt, hw, _ = kvq_ref.shape
    kvq = kvq_ref[...]                               # (bt, hw, Np) bf16, one DMA
    k = kvq[:, :, :ip]
    v = kvq[:, :, ip:2 * ip]
    q = kvq[:, :, 2 * ip:3 * ip]

    # A[b, i, j] = sum_s q[b, s, i] * v[b, s, j]  (== node_q @ node_v in NCHW terms)
    a = lax.dot_general(q, v, (((1,), (1,)), ((0,), (0,))),
                        preferred_element_type=jnp.float32)          # (bt, ip, ip)
    a = a - jnp.max(a, axis=-1, keepdims=True)
    e = jnp.exp(a)
    p = (e / jnp.sum(e, axis=-1, keepdims=True)).astype(jnp.bfloat16)  # exact softmax

    # AV[b, s, j] = sum_i k[b, s, i] * P[b, i, j]
    ka = lax.dot_general(k, p, (((2,), (1,)), ((0,), (0,))),
                         preferred_element_type=jnp.float32)         # (bt, hw, ip)
    ka2 = ka.reshape(bt * hw, ip).astype(jnp.bfloat16)

    # conv_wg (1x1 Conv1d, no bias) + bn_wg
    avw = jnp.dot(ka2, wgT_ref[...], preferred_element_type=jnp.float32)
    avw = avw * wgs_ref[...] + wgb_ref[...]                          # (bt*hw, ip) f32

    # out = relu( Conv1x1(ip -> plane) + BN + residual )
    out = jnp.dot(avw.astype(jnp.bfloat16), ow_ref[...],
                  preferred_element_type=jnp.float32)                # (bt*hw, Cp)
    res = res_ref[...].reshape(bt * hw, -1).astype(jnp.float32)
    out = jnp.maximum(out * os_ref[...] + ob_ref[...] + res, 0.0)
    o_ref[...] = out.reshape(bt, hw, -1).astype(o_ref.dtype)


def _choose_batch_tile(bsz, hw, npad, cp, ip):
    per_batch = (2 * (hw * npad * 2 + hw * cp * 2 + hw * cp * 4)     # double-buffered blocks
                 + 3 * hw * ip * 4 + ip * ip * 4 + hw * cp * 4)      # f32 intermediates
    bt = max(1, min(bsz, _TILE_BUDGET // max(per_batch, 1)))
    while bsz % bt != 0:
        bt -= 1
    return int(bt)


def sgcn_core_fused(kvq, res_bf, wg_T, wg_s, wg_b, out_w, out_s, out_b, ip,
                    out_dtype=jnp.float32):
    bsz, hw, npad = kvq.shape
    cp = res_bf.shape[-1]
    bt = _choose_batch_tile(bsz, hw, npad, cp, ip)
    kernel = functools.partial(_sgcn_fused_kernel, ip=ip)
    return pl.pallas_call(
        kernel,
        out_shape=jax.ShapeDtypeStruct((bsz, hw, cp), out_dtype),
        grid=(bsz // bt,),
        in_specs=[
            pl.BlockSpec((bt, hw, npad), lambda b: (b, 0, 0)),
            pl.BlockSpec((bt, hw, cp), lambda b: (b, 0, 0)),
            pl.BlockSpec((ip, ip), lambda b: (0, 0)),
            pl.BlockSpec((1, ip), lambda b: (0, 0)),
            pl.BlockSpec((1, ip), lambda b: (0, 0)),
            pl.BlockSpec((ip, cp), lambda b: (0, 0)),
            pl.BlockSpec((1, cp), lambda b: (0, 0)),
            pl.BlockSpec((1, cp), lambda b: (0, 0)),
        ],
        out_specs=pl.BlockSpec((bt, hw, cp), lambda b: (b, 0, 0)),
        compiler_params=pltpu.CompilerParams(
            dimension_semantics=("parallel",),
            vmem_limit_bytes=_VMEM_LIMIT,
        ),
    )(kvq, res_bf,
      wg_T.astype(jnp.bfloat16),
      wg_s.reshape(1, ip).astype(jnp.float32),
      wg_b.reshape(1, ip).astype(jnp.float32),
      out_w.astype(jnp.bfloat16),
      out_s.reshape(1, cp).astype(jnp.float32),
      out_b.reshape(1, cp).astype(jnp.float32))


# ---------------------------------------------------------------------------
# Forward pass
# ---------------------------------------------------------------------------
def spatial_gcn_forward_nhwc(x, p):
    n, h, w, c = x.shape
    ip = c // 2
    cp, npad = p["w_kvq"].shape          # lane-padded channel widths (x128)
    hw = h * w

    # pad channels once to lane-dense 128-multiples; padded lanes are zero and
    # stay zero through every stage, so they are sliced off once at the end.
    x_bf = x.astype(jnp.bfloat16)
    if cp != c:
        x_bf = jnp.pad(x_bf, ((0, 0), (0, 0), (0, 0), (0, cp - c)))
    flat = x_bf.reshape(n * hw, cp)

    # fused node_k / node_v / node_q 1x1 projections: one matmul, lane-dense output
    kvq = proj_affine(flat, p["w_kvq"], p["s_kvq"], p["b_kvq"],
                      out_dtype=jnp.bfloat16).reshape(n, hw, npad)

    # fused GCN core + conv_wg/bn_wg + out-projection/BN + residual + ReLU
    out = sgcn_core_fused(kvq, x_bf.reshape(n, hw, cp),
                          p["wg_T"], p["wg_s"], p["wg_b"],
                          p["out_w"], p["out_s"], p["out_b"], ip)      # (n, hw, cp) f32
    if cp != c:
        out = out[:, :, :c]
    return out.reshape(n, h, w, c)


def spatial_gcn_forward(x_nchw, p):
    """PyTorch-layout entry point: NCHW in, NCHW out."""
    x = jnp.transpose(x_nchw, (0, 2, 3, 1))
    y = spatial_gcn_forward_nhwc(x, p)
    return jnp.transpose(y, (0, 3, 1, 2))


# ---------------------------------------------------------------------------
# Deterministic synthetic parameters (BN folded to inference-mode affine,
# weights pre-padded to lane-dense widths)
# ---------------------------------------------------------------------------
def build_params(key, plane):
    ip = plane // 2
    cp = _round_up(plane, 128)
    npad = _round_up(3 * ip, 128)
    keys = iter(jax.random.split(key, 32))

    def nrm(shape, s=0.2):
        return s * jax.random.normal(next(keys), shape, dtype=jnp.float32)

    def bn(c):
        gamma = 1.0 + 0.1 * jax.random.normal(next(keys), (c,), dtype=jnp.float32)
        beta = 0.1 * jax.random.normal(next(keys), (c,), dtype=jnp.float32)
        mean = 0.1 * jax.random.normal(next(keys), (c,), dtype=jnp.float32)
        var = 1.0 + 0.1 * jnp.abs(jax.random.normal(next(keys), (c,), dtype=jnp.float32))
        return gamma, beta, mean, var

    def bn_fold(bnp, conv_bias=None):
        gamma, beta, mean, var = bnp
        scale = gamma / jnp.sqrt(var + EPS)
        base = conv_bias if conv_bias is not None else 0.0
        return scale, beta + (base - mean) * scale

    def conv1x1_w(wmat):           # (Cout, Cin, 1, 1) -> (Cin, Cout)
        return jnp.transpose(wmat[:, :, 0, 0], (1, 0))

    p = {}
    # node_k / node_v / node_q : Conv2d(plane, ip, 1) with bias, fused + lane-padded.
    w_k = conv1x1_w(nrm((ip, plane, 1, 1)))
    w_v = conv1x1_w(nrm((ip, plane, 1, 1)))
    w_q = conv1x1_w(nrm((ip, plane, 1, 1)))
    b_k, b_v, b_q = nrm((ip,), 0.1), nrm((ip,), 0.1), nrm((ip,), 0.1)
    w_kvq = jnp.concatenate([w_k, w_v, w_q], axis=1)                  # (plane, 3*ip)
    p["w_kvq"] = jnp.pad(w_kvq, ((0, cp - plane), (0, npad - 3 * ip)))  # (cp, npad)
    p["b_kvq"] = jnp.pad(jnp.concatenate([b_k, b_v, b_q]), (0, npad - 3 * ip))
    p["s_kvq"] = jnp.ones((npad,), jnp.float32)
    # conv_wg (Conv1d kernel 1, no bias) + bn_wg   -> applied as (AV) @ W^T
    p["wg_T"] = nrm((ip, ip, 1))[:, :, 0].T                           # (ip, ip)
    p["wg_s"], p["wg_b"] = bn_fold(bn(ip))
    # out = Conv2d(ip, plane, 1, bias=True) + BatchNorm2d(plane), lane-padded to cp
    out_w = conv1x1_w(nrm((plane, ip, 1, 1)))                         # (ip, plane)
    out_s, out_b = bn_fold(bn(plane), conv_bias=nrm((plane,), 0.1))
    p["out_w"] = jnp.pad(out_w, ((0, 0), (0, cp - plane)))
    p["out_s"] = jnp.pad(out_s, (0, cp - plane), constant_values=1.0)
    p["out_b"] = jnp.pad(out_b, (0, cp - plane))
    return p


# ---------------------------------------------------------------------------
if __name__ == "__main__":
    plane, n, h, w = 32, 2, 16, 16

    key = jax.random.PRNGKey(0)
    kx, kp = jax.random.split(key)
    x = jax.random.normal(kx, (n, plane, h, w), dtype=jnp.float32)    # NCHW like PyTorch
    params = build_params(kp, plane)

    fwd = jax.jit(spatial_gcn_forward)
    out = jax.block_until_ready(fwd(x, params))
    assert out.shape == (n, plane, h, w), out.shape
    assert bool(jnp.all(jnp.isfinite(out)))
    print("KERNEL_OK")
</pallas_src>

<mosaic_0001>
module attributes {stable_mosaic.version = 11 : i64} {
  func.func @_proj_affine_kernel(%arg0: i32, %arg1: i32, %arg2: memref<512x128xbf16, #tpu.memory_space<vmem>>, %arg3: memref<128x128xbf16, #tpu.memory_space<vmem>>, %arg4: memref<1x128xf32, #tpu.memory_space<vmem>>, %arg5: memref<1x128xf32, #tpu.memory_space<vmem>>, %arg6: memref<512x128xbf16, #tpu.memory_space<vmem>>) attributes {dimension_semantics = [#tpu.dimension_semantics<parallel>, #tpu.dimension_semantics<parallel>], iteration_bounds = array<i64: 1, 1>, scalar_prefetch = 0 : i64, scratch_operands = 0 : i64, tpu.core_type = #tpu.core_type<tc>, window_params = [{transform_indices = @transform_0, window_bounds = array<i64: 512, 128>}, {transform_indices = @transform_1, window_bounds = array<i64: 128, 128>}, {transform_indices = @transform_2, window_bounds = array<i64: 1, 128>}, {transform_indices = @transform_3, window_bounds = array<i64: 1, 128>}, {transform_indices = @transform_4, window_bounds = array<i64: 512, 128>}]} {
    %c0 = arith.constant 0 : index
    %c0_0 = arith.constant 0 : index
    %0 = vector.load %arg2[%c0, %c0_0] : memref<512x128xbf16, #tpu.memory_space<vmem>>, vector<512x128xbf16>
    %c0_1 = arith.constant 0 : index
    %c0_2 = arith.constant 0 : index
    %1 = vector.load %arg3[%c0_1, %c0_2] : memref<128x128xbf16, #tpu.memory_space<vmem>>, vector<128x128xbf16>
    %cst = arith.constant dense<0.000000e+00> : vector<512x128xf32>
    %2 = tpu.matmul %0, %1, %cst {dimension_numbers = #tpu.dot_dimension_numbers<[1], [0], [0], [1], [0, 0, 1, 1], [], []>} : vector<512x128xbf16>, vector<128x128xbf16>, vector<512x128xf32> -> vector<512x128xf32>
    %c0_3 = arith.constant 0 : index
    %c0_4 = arith.constant 0 : index
    %3 = vector.load %arg4[%c0_3, %c0_4] : memref<1x128xf32, #tpu.memory_space<vmem>>, vector<1x128xf32>
    %4 = vector.broadcast %3 : vector<1x128xf32> to vector<512x128xf32>
    %5 = arith.mulf %2, %4 : vector<512x128xf32>
    %c0_5 = arith.constant 0 : index
    %c0_6 = arith.constant 0 : index
    %6 = vector.load %arg5[%c0_5, %c0_6] : memref<1x128xf32, #tpu.memory_space<vmem>>, vector<1x128xf32>
    %7 = vector.broadcast %6 : vector<1x128xf32> to vector<512x128xf32>
    %8 = arith.addf %5, %7 : vector<512x128xf32>
    %9 = arith.truncf %8 : vector<512x128xf32> to vector<512x128xbf16>
    %c0_7 = arith.constant 0 : index
    %c0_8 = arith.constant 0 : index
    %10 = vector.load %arg6[%c0_7, %c0_8] : memref<512x128xbf16, #tpu.memory_space<vmem>>, vector<512x128xbf16>
    tpu.vector_store %arg6[%c0_7, %c0_8], %9 {strides = array<i32>} : memref<512x128xbf16, #tpu.memory_space<vmem>>, vector<512x128xbf16>,
    return
  }
  func.func @transform_0(%arg0: i32, %arg1: i32) -> (i32, i32) {
    %c0_i32 = arith.constant 0 : i32
    %c0_i32_0 = arith.constant 0 : i32
    return %arg0, %c0_i32 : i32, i32
  }
  func.func @transform_1(%arg0: i32, %arg1: i32) -> (i32, i32) {
    %c0_i32 = arith.constant 0 : i32
    %c0_i32_0 = arith.constant 0 : i32
    return %c0_i32, %arg1 : i32, i32
  }
  func.func @transform_2(%arg0: i32, %arg1: i32) -> (i32, i32) {
    %c0_i32 = arith.constant 0 : i32
    %c0_i32_0 = arith.constant 0 : i32
    return %c0_i32, %arg1 : i32, i32
  }
  func.func @transform_3(%arg0: i32, %arg1: i32) -> (i32, i32) {
    %c0_i32 = arith.constant 0 : i32
    %c0_i32_0 = arith.constant 0 : i32
    return %c0_i32, %arg1 : i32, i32
  }
  func.func @transform_4(%arg0: i32, %arg1: i32) -> (i32, i32) {
    %c0_i32 = arith.constant 0 : i32
    return %arg0, %arg1 : i32, i32
  }
}

module attributes {stable_mosaic.version = 11 : i64} {
  func.func @_sgcn_fused_kernel(%arg0: i32, %arg1: memref<2x256x128xbf16, #tpu.memory_space<vmem>>, %arg2: memref<2x256x128xbf16, #tpu.memory_space<vmem>>, %arg3: memref<16x16xbf16, #tpu.memory_space<vmem>>, %arg4: memref<1x16xf32, #tpu.memory_space<vmem>>, %arg5: memref<1x16xf32, #tpu.memory_space<vmem>>, %arg6: memref<16x128xbf16, #tpu.memory_space<vmem>>, %arg7: memref<1x128xf32, #tpu.memory_space<vmem>>, %arg8: memref<1x128xf32, #tpu.memory_space<vmem>>, %arg9: memref<2x256x128xf32, #tpu.memory_space<vmem>>) attributes {dimension_semantics = [#tpu.dimension_semantics<parallel>], iteration_bounds = array<i64: 1>, scalar_prefetch = 0 : i64, scratch_operands = 0 : i64, tpu.core_type = #tpu.core_type<tc>, window_params = [{transform_indices = @transform_0, window_bounds = array<i64: 2, 256, 128>}, {transform_indices = @transform_1, window_bounds = array<i64: 2, 256, 128>}, {pipeline_mode = #tpu.pipeline_mode<synchronous>, transform_indices = @transform_2, window_bounds = array<i64: 16, 16>}, {pipeline_mode = #tpu.pipeline_mode<synchronous>, transform_indices = @transform_3, window_bounds = array<i64: 1, 16>}, {pipeline_mode = #tpu.pipeline_mode<synchronous>, transform_indices = @transform_4, window_bounds = array<i64: 1, 16>}, {pipeline_mode = #tpu.pipeline_mode<synchronous>, transform_indices = @transform_5, window_bounds = array<i64: 16, 128>}, {pipeline_mode = #tpu.pipeline_mode<synchronous>, transform_indices = @transform_6, window_bounds = array<i64: 1, 128>}, {pipeline_mode = #tpu.pipeline_mode<synchronous>, transform_indices = @transform_7, window_bounds = array<i64: 1, 128>}, {transform_indices = @transform_8, window_bounds = array<i64: 2, 256, 128>}]} {
    %c0 = arith.constant 0 : index
    %c0_0 = arith.constant 0 : index
    %c0_1 = arith.constant 0 : index
    %0 = vector.load %arg1[%c0, %c0_0, %c0_1] : memref<2x256x128xbf16, #tpu.memory_space<vmem>>, vector<2x256x128xbf16>
    %1 = vector.extract_strided_slice %0 {offsets = [0, 0, 0], sizes = [2, 256, 16], strides = [1, 1, 1]} : vector<2x256x128xbf16> to vector<2x256x16xbf16>
    %2 = vector.extract_strided_slice %0 {offsets = [0, 0, 16], sizes = [2, 256, 16], strides = [1, 1, 1]} : vector<2x256x128xbf16> to vector<2x256x16xbf16>
    %3 = vector.extract_strided_slice %0 {offsets = [0, 0, 32], sizes = [2, 256, 16], strides = [1, 1, 1]} : vector<2x256x128xbf16> to vector<2x256x16xbf16>
    %cst = arith.constant dense<0.000000e+00> : vector<2x16x16xf32>
    %4 = tpu.matmul %3, %2, %cst {dimension_numbers = #tpu.dot_dimension_numbers<[1], [1], [2], [2], [0, 0, 0, 2, 1, 2], [0], [0]>} : vector<2x256x16xbf16>, vector<2x256x16xbf16>, vector<2x16x16xf32> -> vector<2x16x16xf32>
    %cst_2 = arith.constant dense<0xFF800000> : vector<2x16xf32>
    %5 = vector.multi_reduction <maximumf>, %4, %cst_2 [2] : vector<2x16x16xf32> to vector<2x16xf32>
    %6 = vector.shape_cast %5 : vector<2x16xf32> to vector<2x16x1xf32>
    %7 = vector.broadcast %6 : vector<2x16x1xf32> to vector<2x16x16xf32>
    %8 = arith.subf %4, %7 : vector<2x16x16xf32>
    %9 = math.exp %8 : vector<2x16x16xf32>
    %cst_3 = arith.constant dense<0.000000e+00> : vector<2x16xf32>
    %10 = vector.multi_reduction <add>, %9, %cst_3 [2] : vector<2x16x16xf32> to vector<2x16xf32>
    %11 = vector.shape_cast %10 : vector<2x16xf32> to vector<2x16x1xf32>
    %12 = vector.broadcast %11 : vector<2x16x1xf32> to vector<2x16x16xf32>
    %13 = arith.divf %9, %12 : vector<2x16x16xf32>
    %14 = arith.truncf %13 : vector<2x16x16xf32> to vector<2x16x16xbf16>
    %cst_4 = arith.constant dense<0.000000e+00> : vector<2x256x16xf32>
    %15 = tpu.matmul %1, %14, %cst_4 {dimension_numbers = #tpu.dot_dimension_numbers<[2], [1], [1], [2], [0, 0, 0, 1, 1, 2], [0], [0]>} : vector<2x256x16xbf16>, vector<2x16x16xbf16>, vector<2x256x16xf32> -> vector<2x256x16xf32>
    %16 = vector.shape_cast %15 : vector<2x256x16xf32> to vector<512x16xf32>
    %17 = arith.truncf %16 : vector<512x16xf32> to vector<512x16xbf16>
    %c0_5 = arith.constant 0 : index
    %c0_6 = arith.constant 0 : index
    %18 = vector.load %arg3[%c0_5, %c0_6] : memref<16x16xbf16, #tpu.memory_space<vmem>>, vector<16x16xbf16>
    %cst_7 = arith.constant dense<0.000000e+00> : vector<512x16xf32>
    %19 = tpu.matmul %17, %18, %cst_7 {dimension_numbers = #tpu.dot_dimension_numbers<[1], [0], [0], [1], [0, 0, 1, 1], [], []>} : vector<512x16xbf16>, vector<16x16xbf16>, vector<512x16xf32> -> vector<512x16xf32>
    %c0_8 = arith.constant 0 : index
    %c0_9 = arith.constant 0 : index
    %20 = vector.load %arg4[%c0_8, %c0_9] : memref<1x16xf32, #tpu.memory_space<vmem>>, vector<1x16xf32>
    %21 = vector.broadcast %20 : vector<1x16xf32> to vector<512x16xf32>
    %22 = arith.mulf %19, %21 : vector<512x16xf32>
    %c0_10 = arith.constant 0 : index
    %c0_11 = arith.constant 0 : index
    %23 = vector.load %arg5[%c0_10, %c0_11] : memref<1x16xf32, #tpu.memory_space<vmem>>, vector<1x16xf32>
    %24 = vector.broadcast %23 : vector<1x16xf32> to vector<512x16xf32>
    %25 = arith.addf %22, %24 : vector<512x16xf32>
    %26 = arith.truncf %25 : vector<512x16xf32> to vector<512x16xbf16>
    %c0_12 = arith.constant 0 : index
    %c0_13 = arith.constant 0 : index
    %27 = vector.load %arg6[%c0_12, %c0_13] : memref<16x128xbf16, #tpu.memory_space<vmem>>, vector<16x128xbf16>
    %cst_14 = arith.constant dense<0.000000e+00> : vector<512x128xf32>
    %28 = tpu.matmul %26, %27, %cst_14 {dimension_numbers = #tpu.dot_dimension_numbers<[1], [0], [0], [1], [0, 0, 1, 1], [], []>} : vector<512x16xbf16>, vector<16x128xbf16>, vector<512x128xf32> -> vector<512x128xf32>
    %c0_15 = arith.constant 0 : index
    %c0_16 = arith.constant 0 : index
    %c0_17 = arith.constant 0 : index
    %29 = vector.load %arg2[%c0_15, %c0_16, %c0_17] : memref<2x256x128xbf16, #tpu.memory_space<vmem>>, vector<2x256x128xbf16>
    %30 = vector.shape_cast %29 : vector<2x256x128xbf16> to vector<512x128xbf16>
    %31 = arith.extf %30 : vector<512x128xbf16> to vector<512x128xf32>
    %c0_18 = arith.constant 0 : index
    %c0_19 = arith.constant 0 : index
    %32 = vector.load %arg7[%c0_18, %c0_19] : memref<1x128xf32, #tpu.memory_space<vmem>>, vector<1x128xf32>
    %33 = vector.broadcast %32 : vector<1x128xf32> to vector<512x128xf32>
    %34 = arith.mulf %28, %33 : vector<512x128xf32>
    %c0_20 = arith.constant 0 : index
    %c0_21 = arith.constant 0 : index
    %35 = vector.load %arg8[%c0_20, %c0_21] : memref<1x128xf32, #tpu.memory_space<vmem>>, vector<1x128xf32>
    %36 = vector.broadcast %35 : vector<1x128xf32> to vector<512x128xf32>
    %37 = arith.addf %34, %36 : vector<512x128xf32>
    %38 = arith.addf %37, %31 : vector<512x128xf32>
    %cst_22 = arith.constant 0.000000e+00 : f32
    %39 = vector.broadcast %cst_22 : f32 to vector<512x128xf32>
    %40 = arith.maximumf %38, %39 : vector<512x128xf32>
    %41 = vector.shape_cast %40 : vector<512x128xf32> to vector<2x256x128xf32>
    %c0_23 = arith.constant 0 : index
    %c0_24 = arith.constant 0 : index
    %c0_25 = arith.constant 0 : index
    %42 = vector.load %arg9[%c0_23, %c0_24, %c0_25] : memref<2x256x128xf32, #tpu.memory_space<vmem>>, vector<2x256x128xf32>
    tpu.vector_store %arg9[%c0_23, %c0_24, %c0_25], %41 {strides = array<i32>} : memref<2x256x128xf32, #tpu.memory_space<vmem>>, vector<2x256x128xf32>,
    return
  }
  func.func @transform_0(%arg0: i32) -> (i32, i32, i32) {
    %c0_i32 = arith.constant 0 : i32
    %c0_i32_0 = arith.constant 0 : i32
    %c0_i32_1 = arith.constant 0 : i32
    return %arg0, %c0_i32, %c0_i32_0 : i32, i32, i32
  }
  func.func @transform_1(%arg0: i32) -> (i32, i32, i32) {
    %c0_i32 = arith.constant 0 : i32
    %c0_i32_0 = arith.constant 0 : i32
    %c0_i32_1 = arith.constant 0 : i32
    return %arg0, %c0_i32, %c0_i32_0 : i32, i32, i32
  }
  func.func @transform_2(%arg0: i32) -> (i32, i32) {
    %c0_i32 = arith.constant 0 : i32
    %c0_i32_0 = arith.constant 0 : i32
    %c0_i32_1 = arith.constant 0 : i32
    return %c0_i32, %c0_i32_0 : i32, i32
  }
  func.func @transform_3(%arg0: i32) -> (i32, i32) {
    %c0_i32 = arith.constant 0 : i32
    %c0_i32_0 = arith.constant 0 : i32
    %c0_i32_1 = arith.constant 0 : i32
    return %c0_i32, %c0_i32_0 : i32, i32
  }
  func.func @transform_4(%arg0: i32) -> (i32, i32) {
    %c0_i32 = arith.constant 0 : i32
    %c0_i32_0 = arith.constant 0 : i32
    %c0_i32_1 = arith.constant 0 : i32
    return %c0_i32, %c0_i32_0 : i32, i32
  }
  func.func @transform_5(%arg0: i32) -> (i32, i32) {
    %c0_i32 = arith.constant 0 : i32
    %c0_i32_0 = arith.constant 0 : i32
    %c0_i32_1 = arith.constant 0 : i32
    return %c0_i32, %c0_i32_0 : i32, i32
  }
  func.func @transform_6(%arg0: i32) -> (i32, i32) {
    %c0_i32 = arith.constant 0 : i32
    %c0_i32_0 = arith.constant 0 : i32
    %c0_i32_1 = arith.constant 0 : i32
    return %c0_i32, %c0_i32_0 : i32, i32
  }
  func.func @transform_7(%arg0: i32) -> (i32, i32) {
    %c0_i32 = arith.constant 0 : i32
    %c0_i32_0 = arith.constant 0 : i32
    %c0_i32_1 = arith.constant 0 : i32
    return %c0_i32, %c0_i32_0 : i32, i32
  }
  func.func @transform_8(%arg0: i32) -> (i32, i32, i32) {
    %c0_i32 = arith.constant 0 : i32
    %c0_i32_0 = arith.constant 0 : i32
    %c0_i32_1 = arith.constant 0 : i32
    return %arg0, %c0_i32, %c0_i32_0 : i32, i32, i32
  }
}

</mosaic_0001>

<llo_original>
// kernel: spatial_gcn_forward.2
$region0: #{spatial_gcn_forward.2}
  #allocation0 [shape = 'u32[]', space=smem, size = 0x4, offset = 0x4, fixed_abs, tag = 'smem constant byte address 0x4 - core index']
  #allocation1 [shape = 'u32[144,128]{1,0:T(1,128)}', space=vmem, size = 0x12000, scoped, tag = 'internal scratch']
  %s0 = inlined_call_operand.vmem [shape: bf16[512,128], index: 0, kind: input, shape index: {}]
  %s1 = inlined_call_operand.vmem [shape: bf16[128,128], index: 1, kind: input, shape index: {}]
  %s2 = inlined_call_operand.vmem [shape: f32[1,128], index: 2, kind: input, shape index: {}]
  %s3 = inlined_call_operand.vmem [shape: f32[1,128], index: 3, kind: input, shape index: {}]
  %s4 = inlined_call_operand.vmem [shape: bf16[512,128], index: 4, kind: output, shape index: {}]
  %s5 = sld [smem:[#allocation0]]
  $region26: #{spatial_gcn_forward.2} parent=0
    _
  %s7 = ssub.s32 1, %s5
  %s8 = scalar_select 0, %s7, %s5
  // Predicated region
  $region2: #{spatial_gcn_forward.2} parent=0 // pred_check
    _
  $region3: #{spatial_gcn_forward.2} parent=0 // pred_check_branch
    %10 = sbr.rel (0) target = $region5
  $region4: #{spatial_gcn_forward.2} parent=0 // pred_region
    _
  $region5: #{spatial_gcn_forward.2} parent=0 // pred_fallthru
    _
  // Predicated region
  $region6: #{spatial_gcn_forward.2} parent=0 // pred_check
    _
  $region7: #{spatial_gcn_forward.2} parent=0 // pred_check_branch
    %12 = sbr.rel (0) target = $region9
  $region8: #{spatial_gcn_forward.2} parent=0 // pred_region
    _
  $region9: #{spatial_gcn_forward.2} parent=0 // pred_fallthru
    _
  // Predicated region
  $region10: #{spatial_gcn_forward.2} parent=0 // pred_check
    _
  $region11: #{spatial_gcn_forward.2} parent=0 // pred_check_branch
    %14 = sbr.rel (0) target = $region13
  $region12: #{spatial_gcn_forward.2} parent=0 // pred_region
    _
  $region13: #{spatial_gcn_forward.2} parent=0 // pred_fallthru
    _
  // Predicated region
  $region14: #{spatial_gcn_forward.2} parent=0 // pred_check
    _
  $region15: #{spatial_gcn_forward.2} parent=0 // pred_check_branch
    %16 = sbr.rel (0) target = $region17
  $region16: #{spatial_gcn_forward.2} parent=0 // pred_region
    _
  $region17: #{spatial_gcn_forward.2} parent=0 // pred_fallthru
    _
  %v18 = vld [vmem:[%s0] sm:$0xf]
  %v19 = vld [vmem:[%s0 + $0x4] sm:$0xf]
  %v20 = vld [vmem:[%s0 + $0x8] sm:$0xf]
  %v21 = vld [vmem:[%s0 + $0xc] sm:$0xf]
  %v22 = vld [vmem:[%s0 + $0x10] sm:$0xf]
  %v23 = vld [vmem:[%s0 + $0x14] sm:$0xf]
  %v24 = vld [vmem:[%s0 + $0x18] sm:$0xf]
  %v25 = vld [vmem:[%s0 + $0x1c] sm:$0xf]
  %v26 = vld [vmem:[%s0 + $0x20] sm:$0xf]
  %v27 = vld [vmem:[%s0 + $0x24] sm:$0xf]
  %v28 = vld [vmem:[%s0 + $0x28] sm:$0xf]
  %v29 = vld [vmem:[%s0 + $0x2c] sm:$0xf]
  %v30 = vld [vmem:[%s0 + $0x30] sm:$0xf]
  %v31 = vld [vmem:[%s0 + $0x34] sm:$0xf]
  %v32 = vld [vmem:[%s0 + $0x38] sm:$0xf]
  %v33 = vld [vmem:[%s0 + $0x3c] sm:$0xf]
  %v34 = vld [vmem:[%s0 + $0x40] sm:$0xf]
  %v35 = vld [vmem:[%s0 + $0x44] sm:$0xf]
  %v36 = vld [vmem:[%s0 + $0x48] sm:$0xf]
  %v37 = vld [vmem:[%s0 + $0x4c] sm:$0xf]
  %v38 = vld [vmem:[%s0 + $0x50] sm:$0xf]
  %v39 = vld [vmem:[%s0 + $0x54] sm:$0xf]
  %v40 = vld [vmem:[%s0 + $0x58] sm:$0xf]
  %v41 = vld [vmem:[%s0 + $0x5c] sm:$0xf]
  %v42 = vld [vmem:[%s0 + $0x60] sm:$0xf]
  %v43 = vld [vmem:[%s0 + $0x64] sm:$0xf]
  %v44 = vld [vmem:[%s0 + $0x68] sm:$0xf]
  %v45 = vld [vmem:[%s0 + $0x6c] sm:$0xf]
  %v46 = vld [vmem:[%s0 + $0x70] sm:$0xf]
  %v47 = vld [vmem:[%s0 + $0x74] sm:$0xf]
  %v48 = vld [vmem:[%s0 + $0x78] sm:$0xf]
  %v49 = vld [vmem:[%s0 + $0x7c] sm:$0xf]
  %v50 = vld [vmem:[%s0 + $0x80] sm:$0xf]
  %v51 = vld [vmem:[%s0 + $0x84] sm:$0xf]
  %v52 = vld [vmem:[%s0 + $0x88] sm:$0xf]
  %v53 = vld [vmem:[%s0 + $0x8c] sm:$0xf]
  %v54 = vld [vmem:[%s0 + $0x90] sm:$0xf]
  %v55 = vld [vmem:[%s0 + $0x94] sm:$0xf]
  %v56 = vld [vmem:[%s0 + $0x98] sm:$0xf]
  %v57 = vld [vmem:[%s0 + $0x9c] sm:$0xf]
  %v58 = vld [vmem:[%s0 + $0xa0] sm:$0xf]
  %v59 = vld [vmem:[%s0 + $0xa4] sm:$0xf]
  %v60 = vld [vmem:[%s0 + $0xa8] sm:$0xf]
  %v61 = vld [vmem:[%s0 + $0xac] sm:$0xf]
  %v62 = vld [vmem:[%s0 + $0xb0] sm:$0xf]
  %v63 = vld [vmem:[%s0 + $0xb4] sm:$0xf]
  %v64 = vld [vmem:[%s0 + $0xb8] sm:$0xf]
  %v65 = vld [vmem:[%s0 + $0xbc] sm:$0xf]
  %v66 = vld [vmem:[%s0 + $0xc0] sm:$0xf]
  %v67 = vld [vmem:[%s0 + $0xc4] sm:$0xf]
  %v68 = vld [vmem:[%s0 + $0xc8] sm:$0xf]
  %v69 = vld [vmem:[%s0 + $0xcc] sm:$0xf]
  %v70 = vld [vmem:[%s0 + $0xd0] sm:$0xf]
  %v71 = vld [vmem:[%s0 + $0xd4] sm:$0xf]
  %v72 = vld [vmem:[%s0 + $0xd8] sm:$0xf]
  %v73 = vld [vmem:[%s0 + $0xdc] sm:$0xf]
  %v74 = vld [vmem:[%s0 + $0xe0] sm:$0xf]
  %v75 = vld [vmem:[%s0 + $0xe4] sm:$0xf]
  %v76 = vld [vmem:[%s0 + $0xe8] sm:$0xf]
  %v77 = vld [vmem:[%s0 + $0xec] sm:$0xf]
  %v78 = vld [vmem:[%s0 + $0xf0] sm:$0xf]
  %v79 = vld [vmem:[%s0 + $0xf4] sm:$0xf]
  %v80 = vld [vmem:[%s0 + $0xf8] sm:$0xf]
  %v81 = vld [vmem:[%s0 + $0xfc] sm:$0xf]
  %v82 = vld [vmem:[%s1] sm:$0xf]
  %v83 = vld [vmem:[%s1 + $0x4] sm:$0xf]
  %v84 = vld [vmem:[%s1 + $0x8] sm:$0xf]
  %v85 = vld [vmem:[%s1 + $0xc] sm:$0xf]
  %v86 = vld [vmem:[%s1 + $0x10] sm:$0xf]
  %v87 = vld [vmem:[%s1 + $0x14] sm:$0xf]
  %v88 = vld [vmem:[%s1 + $0x18] sm:$0xf]
  %v89 = vld [vmem:[%s1 + $0x1c] sm:$0xf]
  %v90 = vld [vmem:[%s1 + $0x20] sm:$0xf]
  %v91 = vld [vmem:[%s1 + $0x24] sm:$0xf]
  %v92 = vld [vmem:[%s1 + $0x28] sm:$0xf]
  %v93 = vld [vmem:[%s1 + $0x2c] sm:$0xf]
  %v94 = vld [vmem:[%s1 + $0x30] sm:$0xf]
  %v95 = vld [vmem:[%s1 + $0x34] sm:$0xf]
  %v96 = vld [vmem:[%s1 + $0x38] sm:$0xf]
  %v97 = vld [vmem:[%s1 + $0x3c] sm:$0xf]
  %v162 = vunpack.c.l.b16 %v18
  %v163 = vunpack.c.l.b16 %v19
  %v164 = vunpack.c.l.b16 %v20
  %v165 = vunpack.c.l.b16 %v21
  %v166 = vunpack.c.l.b16 %v22
  %v167 = vunpack.c.l.b16 %v23
  %v168 = vunpack.c.l.b16 %v24
  %v169 = vunpack.c.l.b16 %v25
  %v170 = vunpack.c.l.b16 %v26
  %v171 = vunpack.c.l.b16 %v27
  %v172 = vunpack.c.l.b16 %v28
  %v173 = vunpack.c.l.b16 %v29
  %v174 = vunpack.c.l.b16 %v30
  %v175 = vunpack.c.l.b16 %v31
  %v176 = vunpack.c.l.b16 %v32
  %v177 = vunpack.c.l.b16 %v33
  %v178 = vunpack.c.l.b16 %v34
  %v179 = vunpack.c.l.b16 %v35
  %v180 = vunpack.c.l.b16 %v36
  %v181 = vunpack.c.l.b16 %v37
  %v182 = vunpack.c.l.b16 %v38
  %v183 = vunpack.c.l.b16 %v39
  %v184 = vunpack.c.l.b16 %v40
  %v185 = vunpack.c.l.b16 %v41
  %v186 = vunpack.c.l.b16 %v42
  %v187 = vunpack.c.l.b16 %v43
  %v188 = vunpack.c.l.b16 %v44
  %v189 = vunpack.c.l.b16 %v45
  %v190 = vunpack.c.l.b16 %v46
  %v191 = vunpack.c.l.b16 %v47
  %v192 = vunpack.c.l.b16 %v48
  %v193 = vunpack.c.l.b16 %v49
  %v194 = vunpack.c.l.b16 %v50
  %v195 = vunpack.c.l.b16 %v51
  %v196 = vunpack.c.l.b16 %v52
  %v197 = vunpack.c.l.b16 %v53
  %v198 = vunpack.c.l.b16 %v54
  %v199 = vunpack.c.l.b16 %v55
  %v200 = vunpack.c.l.b16 %v56
  %v201 = vunpack.c.l.b16 %v57
  %v202 = vunpack.c.l.b16 %v58
  %v203 = vunpack.c.l.b16 %v59
  %v204 = vunpack.c.l.b16 %v60
  %v205 = vunpack.c.l.b16 %v61
  %v206 = vunpack.c.l.b16 %v62
  %v207 = vunpack.c.l.b16 %v63
  %v208 = vunpack.c.l.b16 %v64
  %v209 = vunpack.c.l.b16 %v65
  %v210 = vunpack.c.l.b16 %v66
  %v211 = vunpack.c.l.b16 %v67
  %v212 = vunpack.c.l.b16 %v68
  %v213 = vunpack.c.l.b16 %v69
  %v214 = vunpack.c.l.b16 %v70
  %v215 = vunpack.c.l.b16 %v71
  %v216 = vunpack.c.l.b16 %v72
  %v217 = vunpack.c.l.b16 %v73
  %v218 = vunpack.c.l.b16 %v74
  %v219 = vunpack.c.l.b16 %v75
  %v220 = vunpack.c.l.b16 %v76
  %v221 = vunpack.c.l.b16 %v77
  %v222 = vunpack.c.l.b16 %v78
  %v223 = vunpack.c.l.b16 %v79
  %v224 = vunpack.c.l.b16 %v80
  %v225 = vunpack.c.l.b16 %v81
  %v226 = vpack.c.b16 %v163, %v162
  %v227 = vpack.c.b16 %v165, %v164
  %v228 = vpack.c.b16 %v167, %v166
  %v229 = vpack.c.b16 %v169, %v168
  %v230 = vpack.c.b16 %v171, %v170
  %v231 = vpack.c.b16 %v173, %v172
  %v232 = vpack.c.b16 %v175, %v174
  %v233 = vpack.c.b16 %v177, %v176
  %v234 = vpack.c.b16 %v179, %v178
  %v235 = vpack.c.b16 %v181, %v180
  %v236 = vpack.c.b16 %v183, %v182
  %v237 = vpack.c.b16 %v185, %v184
  %v238 = vpack.c.b16 %v187, %v186
  %v239 = vpack.c.b16 %v189, %v188
  %v240 = vpack.c.b16 %v191, %v190
  %v241 = vpack.c.b16 %v193, %v192
  %v242 = vpack.c.b16 %v195, %v194
  %v243 = vpack.c.b16 %v197, %v196
  %v244 = vpack.c.b16 %v199, %v198
  %v245 = vpack.c.b16 %v201, %v200
  %v246 = vpack.c.b16 %v203, %v202
  %v247 = vpack.c.b16 %v205, %v204
  %v248 = vpack.c.b16 %v207, %v206
  %v249 = vpack.c.b16 %v209, %v208
  %v250 = vpack.c.b16 %v211, %v210
  %v251 = vpack.c.b16 %v213, %v212
  %v252 = vpack.c.b16 %v215, %v214
  %v253 = vpack.c.b16 %v217, %v216
  %v254 = vpack.c.b16 %v219, %v218
  %v255 = vpack.c.b16 %v221, %v220
  %v256 = vpack.c.b16 %v223, %v222
  %v257 = vpack.c.b16 %v225, %v224
  %v306 = vunpack.c.l.b16 %v82
  %v307 = vunpack.c.l.b16 %v83
  %v308 = vunpack.c.l.b16 %v84
  %v309 = vunpack.c.l.b16 %v85
  %v310 = vunpack.c.l.b16 %v86
  %v311 = vunpack.c.l.b16 %v87
  %v312 = vunpack.c.l.b16 %v88
  %v313 = vunpack.c.l.b16 %v89
  %v314 = vunpack.c.l.b16 %v90
  %v315 = vunpack.c.l.b16 %v91
  %v316 = vunpack.c.l.b16 %v92
  %v317 = vunpack.c.l.b16 %v93
  %v318 = vunpack.c.l.b16 %v94
  %v319 = vunpack.c.l.b16 %v95
  %v320 = vunpack.c.l.b16 %v96
  %v321 = vunpack.c.l.b16 %v97
  %v322 = vpack.c.b16 %v307, %v306
  %v323 = vpack.c.b16 %v309, %v308
  %v324 = vpack.c.b16 %v311, %v310
  %v325 = vpack.c.b16 %v313, %v312
  %v326 = vpack.c.b16 %v315, %v314
  %v327 = vpack.c.b16 %v317, %v316
  %v328 = vpack.c.b16 %v319, %v318
  %v329 = vpack.c.b16 %v321, %v320
  %338 = vmatprep.subr.bf16.mxu0 0
  %339 = vmatpush1.bf16.msra.mxu0 %v322
  %340 = vmatprep.subr.bf16.mxu0 0
  %341 = vmatpush1.bf16.msra.mxu0 %v323
  %342 = vmatprep.subr.bf16.mxu0 0
  %343 = vmatpush1.bf16.msra.mxu0 %v324
  %344 = vmatprep.subr.bf16.mxu0 0
  %345 = vmatpush1.bf16.msra.mxu0 %v325
  %346 = vmatprep.subr.bf16.mxu0 0
  %347 = vmatpush1.bf16.msra.mxu0 %v326
  %348 = vmatprep.subr.bf16.mxu0 0
  %349 = vmatpush1.bf16.msra.mxu0 %v327
  %350 = vmatprep.subr.bf16.mxu0 0
  %351 = vmatpush1.bf16.msra.mxu0 %v328
  %352 = vmatprep.subr.bf16.mxu0 0
  %353 = vmatpush1.bf16.msra.mxu0 %v329
  %354 = vmatprep.subr.bf16.mxu0 0
  %355 = vmatpush1.bf16.msra.mxu0 0
  %356 = vmatprep.subr.bf16.mxu0 0
  %357 = vmatpush1.bf16.msra.mxu0 0
  %358 = vmatprep.subr.bf16.mxu0 0
  %359 = vmatpush1.bf16.msra.mxu0 0
  %360 = vmatprep.subr.bf16.mxu0 0
  %361 = vmatpush1.bf16.msra.mxu0 0
  %362 = vmatprep.subr.bf16.mxu0 0
  %363 = vmatpush1.bf16.msra.mxu0 0
  %364 = vmatprep.subr.bf16.mxu0 0
  %365 = vmatpush1.bf16.msra.mxu0 0
  %366 = vmatprep.subr.bf16.mxu0 0
  %367 = vmatpush1.bf16.msra.mxu0 0
  %368 = vmatprep.subr.bf16.mxu0 0
  %369 = vmatpush1.bf16.msra.mxu0 0
  %370 = vmatprep.mubr.bf16.mxu0 0
  %371 = vmatmul.mubr.bf16.gmra.mrb[0].mxu0 %v226
  %v372 = vpop.f32.mrb[0].mxu0
  %v373 = vadd.f32 0.0, %v372
  %v374 = vpop.f32.mrb[0].mxu0
  %v375 = vpop.f32.mrb[0].mxu0
  %v376 = vadd.f32 0.0, %v375
  %v377 = vpop.f32.mrb[0].mxu0
  %378 = vmatprep.mubr.bf16.mxu0 0
  %379 = vmatmul.mubr.bf16.gmra.mrb[0].mxu0 %v227
  %v380 = vpop.f32.mrb[0].mxu0
  %v381 = vadd.f32 0.0, %v380
  %v382 = vpop.f32.mrb[0].mxu0
  %v383 = vpop.f32.mrb[0].mxu0
  %v384 = vadd.f32 0.0, %v383
  %v385 = vpop.f32.mrb[0].mxu0
  %386 = vmatprep.mubr.bf16.mxu0 0
  %387 = vmatmul.mubr.bf16.gmra.mrb[0].mxu0 %v228
  %v388 = vpop.f32.mrb[0].mxu0
  %v389 = vadd.f32 0.0, %v388
  %v390 = vpop.f32.mrb[0].mxu0
  %v391 = vpop.f32.mrb[0].mxu0
  %v392 = vadd.f32 0.0, %v391
  %v393 = vpop.f32.mrb[0].mxu0
  %394 = vmatprep.mubr.bf16.mxu0 0
  %395 = vmatmul.mubr.bf16.gmra.mrb[0].mxu0 %v229
  %v396 = vpop.f32.mrb[0].mxu0
  %v397 = vadd.f32 0.0, %v396
  %v398 = vpop.f32.mrb[0].mxu0
  %v399 = vpop.f32.mrb[0].mxu0
  %v400 = vadd.f32 0.0, %v399
  %v401 = vpop.f32.mrb[0].mxu0
  %402 = vmatprep.mubr.bf16.mxu0 0
  %403 = vmatmul.mubr.bf16.gmra.mrb[0].mxu0 %v230
  %v404 = vpop.f32.mrb[0].mxu0
  %v405 = vadd.f32 0.0, %v404
  %v406 = vpop.f32.mrb[0].mxu0
  %v407 = vpop.f32.mrb[0].mxu0
  %v408 = vadd.f32 0.0, %v407
  %v409 = vpop.f32.mrb[0].mxu0
  %410 = vmatprep.mubr.bf16.mxu0 0
  %411 = vmatmul.mubr.bf16.gmra.mrb[0].mxu0 %v231
  %v412 = vpop.f32.mrb[0].mxu0
  %v413 = vadd.f32 0.0, %v412
  %v414 = vpop.f32.mrb[0].mxu0
  %v415 = vpop.f32.mrb[0].mxu0
  %v416 = vadd.f32 0.0, %v415
  %v417 = vpop.f32.mrb[0].mxu0
  %418 = vmatprep.mubr.bf16.mxu0 0
  %419 = vmatmul.mubr.bf16.gmra.mrb[0].mxu0 %v232
  %v420 = vpop.f32.mrb[0].mxu0
  %v421 = vadd.f32 0.0, %v420
  %v422 = vpop.f32.mrb[0].mxu0
  %v423 = vpop.f32.mrb[0].mxu0
  %v424 = vadd.f32 0.0, %v423
  %v425 = vpop.f32.mrb[0].mxu0
  %426 = vmatprep.mubr.bf16.mxu0 0
  %427 = vmatmul.mubr.bf16.gmra.mrb[0].mxu0 %v233
  %v428 = vpop.f32.mrb[0].mxu0
  %v429 = vadd.f32 0.0, %v428
  %v430 = vpop.f32.mrb[0].mxu0
  %v431 = vpop.f32.mrb[0].mxu0
  %v432 = vadd.f32 0.0, %v431
  %v433 = vpop.f32.mrb[0].mxu0
  %434 = vmatprep.mubr.bf16.mxu0 0
  %435 = vmatmul.mubr.bf16.gmra.mrb[0].mxu0 %v234
  %v436 = vpop.f32.mrb[0].mxu0
  %v437 = vadd.f32 0.0, %v436
  %v438 = vpop.f32.mrb[0].mxu0
  %v439 = vpop.f32.mrb[0].mxu0
  %v440 = vadd.f32 0.0, %v439
  %v441 = vpop.f32.mrb[0].mxu0
  %442 = vmatprep.mubr.bf16.mxu0 0
  %443 = vmatmul.mubr.bf16.gmra.mrb[0].mxu0 %v235
  %v444 = vpop.f32.mrb[0].mxu0
  %v445 = vadd.f32 0.0, %v444
  %v446 = vpop.f32.mrb[0].mxu0
  %v447 = vpop.f32.mrb[0].mxu0
  %v448 = vadd.f32 0.0, %v447
  %v449 = vpop.f32.mrb[0].mxu0
  %450 = vmatprep.mubr.bf16.mxu0 0
  %451 = vmatmul.mubr.bf16.gmra.mrb[0].mxu0 %v236
  %v452 = vpop.f32.mrb[0].mxu0
  %v453 = vadd.f32 0.0, %v452
  %v454 = vpop.f32.mrb[0].mxu0
  %v455 = vpop.f32.mrb[0].mxu0
  %v456 = vadd.f32 0.0, %v455
  %v457 = vpop.f32.mrb[0].mxu0
  %458 = vmatprep.mubr.bf16.mxu0 0
  %459 = vmatmul.mubr.bf16.gmra.mrb[0].mxu0 %v237
  %v460 = vpop.f32.mrb[0].mxu0
  %v461 = vadd.f32 0.0, %v460
  %v462 = vpop.f32.mrb[0].mxu0
  %v463 = vpop.f32.mrb[0].mxu0
  %v464 = vadd.f32 0.0, %v463
  %v465 = vpop.f32.mrb[0].mxu0
  %466 = vmatprep.mubr.bf16.mxu0 0
  %467 = vmatmul.mubr.bf16.gmra.mrb[0].mxu0 %v238
  %v468 = vpop.f32.mrb[0].mxu0
  %v469 = vadd.f32 0.0, %v468
  %v470 = vpop.f32.mrb[0].mxu0
  %v471 = vpop.f32.mrb[0].mxu0
  %v472 = vadd.f32 0.0, %v471
  %v473 = vpop.f32.mrb[0].mxu0
  %474 = vmatprep.mubr.bf16.mxu0 0
  %475 = vmatmul.mubr.bf16.gmra.mrb[0].mxu0 %v239
  %v476 = vpop.f32.mrb[0].mxu0
  %v477 = vadd.f32 0.0, %v476
  %v478 = vpop.f32.mrb[0].mxu0
  %v479 = vpop.f32.mrb[0].mxu0
  %v480 = vadd.f32 0.0, %v479
  %v481 = vpop.f32.mrb[0].mxu0
  %482 = vmatprep.mubr.bf16.mxu0 0
  %483 = vmatmul.mubr.bf16.gmra.mrb[0].mxu0 %v240
  %v484 = vpop.f32.mrb[0].mxu0
  %v485 = vadd.f32 0.0, %v484
  %v486 = vpop.f32.mrb[0].mxu0
  %v487 = vpop.f32.mrb[0].mxu0
  %v488 = vadd.f32 0.0, %v487
  %v489 = vpop.f32.mrb[0].mxu0
  %490 = vmatprep.mubr.bf16.mxu0 0
  %491 = vmatmul.mubr.bf16.gmra.mrb[0].mxu0 %v241
  %v492 = vpop.f32.mrb[0].mxu0
  %v493 = vadd.f32 0.0, %v492
  %v494 = vpop.f32.mrb[0].mxu0
  %v495 = vpop.f32.mrb[0].mxu0
  %v496 = vadd.f32 0.0, %v495
  %v497 = vpop.f32.mrb[0].mxu0
  %498 = vmatprep.mubr.bf16.mxu0 0
  %499 = vmatmul.mubr.bf16.gmra.mrb[0].mxu0 %v242
  %v500 = vpop.f32.mrb[0].mxu0
  %v501 = vadd.f32 0.0, %v500
  %v502 = vpop.f32.mrb[0].mxu0
  %v503 = vpop.f32.mrb[0].mxu0
  %v504 = vadd.f32 0.0, %v503
  %v505 = vpop.f32.mrb[0].mxu0
  %506 = vmatprep.mubr.bf16.mxu0 0
  %507 = vmatmul.mubr.bf16.gmra.mrb[0].mxu0 %v243
  %v508 = vpop.f32.mrb[0].mxu0
  %v509 = vadd.f32 0.0, %v508
  %v510 = vpop.f32.mrb[0].mxu0
  %v511 = vpop.f32.mrb[0].mxu0
  %v512 = vadd.f32 0.0, %v511
  %v513 = vpop.f32.mrb[0].mxu0
  %514 = vmatprep.mubr.bf16.mxu0 0
  %515 = vmatmul.mubr.bf16.gmra.mrb[0].mxu0 %v244
  %v516 = vpop.f32.mrb[0].mxu0
  %v517 = vadd.f32 0.0, %v516
  %v518 = vpop.f32.mrb[0].mxu0
  %v519 = vpop.f32.mrb[0].mxu0
  %v520 = vadd.f32 0.0, %v519
  %v521 = vpop.f32.mrb[0].mxu0
  %522 = vmatprep.mubr.bf16.mxu0 0
  %523 = vmatmul.mubr.bf16.gmra.mrb[0].mxu0 %v245
  %v524 = vpop.f32.mrb[0].mxu0
  %v525 = vadd.f32 0.0, %v524
  %v526 = vpop.f32.mrb[0].mxu0
  %v527 = vpop.f32.mrb[0].mxu0
  %v528 = vadd.f32 0.0, %v527
  %v529 = vpop.f32.mrb[0].mxu0
  %530 = vmatprep.mubr.bf16.mxu0 0
  %531 = vmatmul.mubr.bf16.gmra.mrb[0].mxu0 %v246
  %v532 = vpop.f32.mrb[0].mxu0
  %v533 = vadd.f32 0.0, %v532
  %v534 = vpop.f32.mrb[0].mxu0
  %v535 = vpop.f32.mrb[0].mxu0
  %v536 = vadd.f32 0.0, %v535
  %v537 = vpop.f32.mrb[0].mxu0
  %538 = vmatprep.mubr.bf16.mxu0 0
  %539 = vmatmul.mubr.bf16.gmra.mrb[0].mxu0 %v247
  %v540 = vpop.f32.mrb[0].mxu0
  %v541 = vadd.f32 0.0, %v540
  %v542 = vpop.f32.mrb[0].mxu0
  %v543 = vpop.f32.mrb[0].mxu0
  %v544 = vadd.f32 0.0, %v543
  %v545 = vpop.f32.mrb[0].mxu0
  %546 = vmatprep.mubr.bf16.mxu0 0
  %547 = vmatmul.mubr.bf16.gmra.mrb[0].mxu0 %v248
  %v548 = vpop.f32.mrb[0].mxu0
  %v549 = vadd.f32 0.0, %v548
  %v550 = vpop.f32.mrb[0].mxu0
  %v551 = vpop.f32.mrb[0].mxu0
  %v552 = vadd.f32 0.0, %v551
  %v553 = vpop.f32.mrb[0].mxu0
  %554 = vmatprep.mubr.bf16.mxu0 0
  %555 = vmatmul.mubr.bf16.gmra.mrb[0].mxu0 %v249
  %v556 = vpop.f32.mrb[0].mxu0
  %v557 = vadd.f32 0.0, %v556
  %v558 = vpop.f32.mrb[0].mxu0
  %v559 = vpop.f32.mrb[0].mxu0
  %v560 = vadd.f32 0.0, %v559
  %v561 = vpop.f32.mrb[0].mxu0
  %562 = vmatprep.mubr.bf16.mxu0 0
  %563 = vmatmul.mubr.bf16.gmra.mrb[0].mxu0 %v250
  %v564 = vpop.f32.mrb[0].mxu0
  %v565 = vadd.f32 0.0, %v564
  %v566 = vpop.f32.mrb[0].mxu0
  %v567 = vpop.f32.mrb[0].mxu0
  %v568 = vadd.f32 0.0, %v567
  %v569 = vpop.f32.mrb[0].mxu0
  %570 = vmatprep.mubr.bf16.mxu0 0
  %571 = vmatmul.mubr.bf16.gmra.mrb[0].mxu0 %v251
  %v572 = vpop.f32.mrb[0].mxu0
  %v573 = vadd.f32 0.0, %v572
  %v574 = vpop.f32.mrb[0].mxu0
  %v575 = vpop.f32.mrb[0].mxu0
  %v576 = vadd.f32 0.0, %v575
  %v577 = vpop.f32.mrb[0].mxu0
  %578 = vmatprep.mubr.bf16.mxu0 0
  %579 = vmatmul.mubr.bf16.gmra.mrb[0].mxu0 %v252
  %v580 = vpop.f32.mrb[0].mxu0
  %v581 = vadd.f32 0.0, %v580
  %v582 = vpop.f32.mrb[0].mxu0
  %v583 = vpop.f32.mrb[0].mxu0
  %v584 = vadd.f32 0.0, %v583
  %v585 = vpop.f32.mrb[0].mxu0
  %586 = vmatprep.mubr.bf16.mxu0 0
  %587 = vmatmul.mubr.bf16.gmra.mrb[0].mxu0 %v253
  %v588 = vpop.f32.mrb[0].mxu0
  %v589 = vadd.f32 0.0, %v588
  %v590 = vpop.f32.mrb[0].mxu0
  %v591 = vpop.f32.mrb[0].mxu0
  %v592 = vadd.f32 0.0, %v591
  %v593 = vpop.f32.mrb[0].mxu0
  %594 = vmatprep.mubr.bf16.mxu0 0
  %595 = vmatmul.mubr.bf16.gmra.mrb[0].mxu0 %v254
  %v596 = vpop.f32.mrb[0].mxu0
  %v597 = vadd.f32 0.0, %v596
  %v598 = vpop.f32.mrb[0].mxu0
  %v599 = vpop.f32.mrb[0].mxu0
  %v600 = vadd.f32 0.0, %v599
  %v601 = vpop.f32.mrb[0].mxu0
  %602 = vmatprep.mubr.bf16.mxu0 0
  %603 = vmatmul.mubr.bf16.gmra.mrb[0].mxu0 %v255
  %v604 = vpop.f32.mrb[0].mxu0
  %v605 = vadd.f32 0.0, %v604
  %v606 = vpop.f32.mrb[0].mxu0
  %v607 = vpop.f32.mrb[0].mxu0
  %v608 = vadd.f32 0.0, %v607
  %v609 = vpop.f32.mrb[0].mxu0
  %610 = vmatprep.mubr.bf16.mxu0 0
  %611 = vmatmul.mubr.bf16.gmra.mrb[0].mxu0 %v256
  %v612 = vpop.f32.mrb[0].mxu0
  %v613 = vadd.f32 0.0, %v612
  %v614 = vpop.f32.mrb[0].mxu0
  %v615 = vpop.f32.mrb[0].mxu0
  %v616 = vadd.f32 0.0, %v615
  %v617 = vpop.f32.mrb[0].mxu0
  %618 = vmatprep.mubr.bf16.mxu0 0
  %619 = vmatmul.mubr.bf16.gmra.mrb[0].mxu0 %v257
  %v620 = vpop.f32.mrb[0].mxu0
  %v621 = vadd.f32 0.0, %v620
  %v622 = vpop.f32.mrb[0].mxu0
  %v623 = vpop.f32.mrb[0].mxu0
  %v624 = vadd.f32 0.0, %v623
  %v625 = vpop.f32.mrb[0].mxu0
  %626 = vdwg.mxu0
  %v627 = vld [vmem:[%s2] sm:$0x1]
  %v629 = vlaneseq
  %v630 = vshrl.u32 %v629, 7
  %v631 = vsub.s32 0, %v630
  %v632 = vrot.slane %v627, %v631
  %v634 = vmul.f32 %v373, %v632
  %v635 = vmul.f32 %v376, %v632
  %v636 = vmul.f32 %v381, %v632
  %v637 = vmul.f32 %v384, %v632
  %v638 = vmul.f32 %v389, %v632
  %v639 = vmul.f32 %v392, %v632
  %v640 = vmul.f32 %v397, %v632
  %v641 = vmul.f32 %v400, %v632
  %v642 = vmul.f32 %v405, %v632
  %v643 = vmul.f32 %v408, %v632
  %v644 = vmul.f32 %v413, %v632
  %v645 = vmul.f32 %v416, %v632
  %v646 = vmul.f32 %v421, %v632
  %v647 = vmul.f32 %v424, %v632
  %v648 = vmul.f32 %v429, %v632
  %v649 = vmul.f32 %v432, %v632
  %v650 = vmul.f32 %v437, %v632
  %v651 = vmul.f32 %v440, %v632
  %v652 = vmul.f32 %v445, %v632
  %v653 = vmul.f32 %v448, %v632
  %v654 = vmul.f32 %v453, %v632
  %v655 = vmul.f32 %v456, %v632
  %v656 = vmul.f32 %v461, %v632
  %v657 = vmul.f32 %v464, %v632
  %v658 = vmul.f32 %v469, %v632
  %v659 = vmul.f32 %v472, %v632
  %v660 = vmul.f32 %v477, %v632
  %v661 = vmul.f32 %v480, %v632
  %v662 = vmul.f32 %v485, %v632
  %v663 = vmul.f32 %v488, %v632
  %v664 = vmul.f32 %v493, %v632
  %v665 = vmul.f32 %v496, %v632
  %v666 = vmul.f32 %v501, %v632
  %v667 = vmul.f32 %v504, %v632
  %v668 = vmul.f32 %v509, %v632
  %v669 = vmul.f32 %v512, %v632
  %v670 = vmul.f32 %v517, %v632
  %v671 = vmul.f32 %v520, %v632
  %v672 = vmul.f32 %v525, %v632
  %v673 = vmul.f32 %v528, %v632
  %v674 = vmul.f32 %v533, %v632
  %v675 = vmul.f32 %v536, %v632
  %v676 = vmul.f32 %v541, %v632
  %v677 = vmul.f32 %v544, %v632
  %v678 = vmul.f32 %v549, %v632
  %v679 = vmul.f32 %v552, %v632
  %v680 = vmul.f32 %v557, %v632
  %v681 = vmul.f32 %v560, %v632
  %v682 = vmul.f32 %v565, %v632
  %v683 = vmul.f32 %v568, %v632
  %v684 = vmul.f32 %v573, %v632
  %v685 = vmul.f32 %v576, %v632
  %v686 = vmul.f32 %v581, %v632
  %v687 = vmul.f32 %v584, %v632
  %v688 = vmul.f32 %v589, %v632
  %v689 = vmul.f32 %v592, %v632
  %v690 = vmul.f32 %v597, %v632
  %v691 = vmul.f32 %v600, %v632
  %v692 = vmul.f32 %v605, %v632
  %v693 = vmul.f32 %v608, %v632
  %v694 = vmul.f32 %v613, %v632
  %v695 = vmul.f32 %v616, %v632
  %v696 = vmul.f32 %v621, %v632
  %v697 = vmul.f32 %v624, %v632
  %v698 = vld [vmem:[%s3] sm:$0x1]
  %v700 = vlaneseq
  %v701 = vshrl.u32 %v700, 7
  %v702 = vsub.s32 0, %v701
  %v703 = vrot.slane %v698, %v702
  %v705 = vadd.f32 %v634, %v703
  %v706 = vadd.f32 %v635, %v703
  %v707 = vadd.f32 %v636, %v703
  %v708 = vadd.f32 %v637, %v703
  %v709 = vadd.f32 %v638, %v703
  %v710 = vadd.f32 %v639, %v703
  %v711 = vadd.f32 %v640, %v703
  %v712 = vadd.f32 %v641, %v703
  %v713 = vadd.f32 %v642, %v703
  %v714 = vadd.f32 %v643, %v703
  %v715 = vadd.f32 %v644, %v703
  %v716 = vadd.f32 %v645, %v703
  %v717 = vadd.f32 %v646, %v703
  %v718 = vadd.f32 %v647, %v703
  %v719 = vadd.f32 %v648, %v703
  %v720 = vadd.f32 %v649, %v703
  %v721 = vadd.f32 %v650, %v703
  %v722 = vadd.f32 %v651, %v703
  %v723 = vadd.f32 %v652, %v703
  %v724 = vadd.f32 %v653, %v703
  %v725 = vadd.f32 %v654, %v703
  %v726 = vadd.f32 %v655, %v703
  %v727 = vadd.f32 %v656, %v703
  %v728 = vadd.f32 %v657, %v703
  %v729 = vadd.f32 %v658, %v703
  %v730 = vadd.f32 %v659, %v703
  %v731 = vadd.f32 %v660, %v703
  %v732 = vadd.f32 %v661, %v703
  %v733 = vadd.f32 %v662, %v703
  %v734 = vadd.f32 %v663, %v703
  %v735 = vadd.f32 %v664, %v703
  %v736 = vadd.f32 %v665, %v703
  %v737 = vadd.f32 %v666, %v703
  %v738 = vadd.f32 %v667, %v703
  %v739 = vadd.f32 %v668, %v703
  %v740 = vadd.f32 %v669, %v703
  %v741 = vadd.f32 %v670, %v703
  %v742 = vadd.f32 %v671, %v703
  %v743 = vadd.f32 %v672, %v703
  %v744 = vadd.f32 %v673, %v703
  %v745 = vadd.f32 %v674, %v703
  %v746 = vadd.f32 %v675, %v703
  %v747 = vadd.f32 %v676, %v703
  %v748 = vadd.f32 %v677, %v703
  %v749 = vadd.f32 %v678, %v703
  %v750 = vadd.f32 %v679, %v703
  %v751 = vadd.f32 %v680, %v703
  %v752 = vadd.f32 %v681, %v703
  %v753 = vadd.f32 %v682, %v703
  %v754 = vadd.f32 %v683, %v703
  %v755 = vadd.f32 %v684, %v703
  %v756 = vadd.f32 %v685, %v703
  %v757 = vadd.f32 %v686, %v703
  %v758 = vadd.f32 %v687, %v703
  %v759 = vadd.f32 %v688, %v703
  %v760 = vadd.f32 %v689, %v703
  %v761 = vadd.f32 %v690, %v703
  %v762 = vadd.f32 %v691, %v703
  %v763 = vadd.f32 %v692, %v703
  %v764 = vadd.f32 %v693, %v703
  %v765 = vadd.f32 %v694, %v703
  %v766 = vadd.f32 %v695, %v703
  %v767 = vadd.f32 %v696, %v703
  %v768 = vadd.f32 %v697, %v703
  %v769 = vpack.c.bf16 %v706, %v705
  %v770 = vpack.c.bf16 %v708, %v707
  %v771 = vpack.c.bf16 %v710, %v709
  %v772 = vpack.c.bf16 %v712, %v711
  %v773 = vpack.c.bf16 %v714, %v713
  %v774 = vpack.c.bf16 %v716, %v715
  %v775 = vpack.c.bf16 %v718, %v717
  %v776 = vpack.c.bf16 %v720, %v719
  %v777 = vpack.c.bf16 %v722, %v721
  %v778 = vpack.c.bf16 %v724, %v723
  %v779 = vpack.c.bf16 %v726, %v725
  %v780 = vpack.c.bf16 %v728, %v727
  %v781 = vpack.c.bf16 %v730, %v729
  %v782 = vpack.c.bf16 %v732, %v731
  %v783 = vpack.c.bf16 %v734, %v733
  %v784 = vpack.c.bf16 %v736, %v735
  %v785 = vpack.c.bf16 %v738, %v737
  %v786 = vpack.c.bf16 %v740, %v739
  %v787 = vpack.c.bf16 %v742, %v741
  %v788 = vpack.c.bf16 %v744, %v743
  %v789 = vpack.c.bf16 %v746, %v745
  %v790 = vpack.c.bf16 %v748, %v747
  %v791 = vpack.c.bf16 %v750, %v749
  %v792 = vpack.c.bf16 %v752, %v751
  %v793 = vpack.c.bf16 %v754, %v753
  %v794 = vpack.c.bf16 %v756, %v755
  %v795 = vpack.c.bf16 %v758, %v757
  %v796 = vpack.c.bf16 %v760, %v759
  %v797 = vpack.c.bf16 %v762, %v761
  %v798 = vpack.c.bf16 %v764, %v763
  %v799 = vpack.c.bf16 %v766, %v765
  %v800 = vpack.c.bf16 %v768, %v767
  %v833 = vunpack.c.l.b16 %v769
  %v834 = vunpack.c.h.b16 %v769
  %v835 = vunpack.c.l.b16 %v770
  %v836 = vunpack.c.h.b16 %v770
  %v837 = vunpack.c.l.b16 %v771
  %v838 = vunpack.c.h.b16 %v771
  %v839 = vunpack.c.l.b16 %v772
  %v840 = vunpack.c.h.b16 %v772
  %v841 = vunpack.c.l.b16 %v773
  %v842 = vunpack.c.h.b16 %v773
  %v843 = vunpack.c.l.b16 %v774
  %v844 = vunpack.c.h.b16 %v774
  %v845 = vunpack.c.l.b16 %v775
  %v846 = vunpack.c.h.b16 %v775
  %v847 = vunpack.c.l.b16 %v776
  %v848 = vunpack.c.h.b16 %v776
  %v849 = vunpack.c.l.b16 %v777
  %v850 = vunpack.c.h.b16 %v777
  %v851 = vunpack.c.l.b16 %v778
  %v852 = vunpack.c.h.b16 %v778
  %v853 = vunpack.c.l.b16 %v779
  %v854 = vunpack.c.h.b16 %v779
  %v855 = vunpack.c.l.b16 %v780
  %v856 = vunpack.c.h.b16 %v780
  %v857 = vunpack.c.l.b16 %v781
  %v858 = vunpack.c.h.b16 %v781
  %v859 = vunpack.c.l.b16 %v782
  %v860 = vunpack.c.h.b16 %v782
  %v861 = vunpack.c.l.b16 %v783
  %v862 = vunpack.c.h.b16 %v783
  %v863 = vunpack.c.l.b16 %v784
  %v864 = vunpack.c.h.b16 %v784
  %v865 = vunpack.c.l.b16 %v785
  %v866 = vunpack.c.h.b16 %v785
  %v867 = vunpack.c.l.b16 %v786
  %v868 = vunpack.c.h.b16 %v786
  %v869 = vunpack.c.l.b16 %v787
  %v870 = vunpack.c.h.b16 %v787
  %v871 = vunpack.c.l.b16 %v788
  %v872 = vunpack.c.h.b16 %v788
  %v873 = vunpack.c.l.b16 %v789
  %v874 = vunpack.c.h.b16 %v789
  %v875 = vunpack.c.l.b16 %v790
  %v876 = vunpack.c.h.b16 %v790
  %v877 = vunpack.c.l.b16 %v791
  %v878 = vunpack.c.h.b16 %v791
  %v879 = vunpack.c.l.b16 %v792
  %v880 = vunpack.c.h.b16 %v792
  %v881 = vunpack.c.l.b16 %v793
  %v882 = vunpack.c.h.b16 %v793
  %v883 = vunpack.c.l.b16 %v794
  %v884 = vunpack.c.h.b16 %v794
  %v885 = vunpack.c.l.b16 %v795
  %v886 = vunpack.c.h.b16 %v795
  %v887 = vunpack.c.l.b16 %v796
  %v888 = vunpack.c.h.b16 %v796
  %v889 = vunpack.c.l.b16 %v797
  %v890 = vunpack.c.h.b16 %v797
  %v891 = vunpack.c.l.b16 %v798
  %v892 = vunpack.c.h.b16 %v798
  %v893 = vunpack.c.l.b16 %v799
  %v894 = vunpack.c.h.b16 %v799
  %v895 = vunpack.c.l.b16 %v800
  %v896 = vunpack.c.h.b16 %v800
  %v897 = vpack.c.b16 %v833, %v833
  %v898 = vpack.c.b16 %v834, %v834
  %v899 = vpack.c.b16 %v835, %v835
  %v900 = vpack.c.b16 %v836, %v836
  %v901 = vpack.c.b16 %v837, %v837
  %v902 = vpack.c.b16 %v838, %v838
  %v903 = vpack.c.b16 %v839, %v839
  %v904 = vpack.c.b16 %v840, %v840
  %v905 = vpack.c.b16 %v841, %v841
  %v906 = vpack.c.b16 %v842, %v842
  %v907 = vpack.c.b16 %v843, %v843
  %v908 = vpack.c.b16 %v844, %v844
  %v909 = vpack.c.b16 %v845, %v845
  %v910 = vpack.c.b16 %v846, %v846
  %v911 = vpack.c.b16 %v847, %v847
  %v912 = vpack.c.b16 %v848, %v848
  %v913 = vpack.c.b16 %v849, %v849
  %v914 = vpack.c.b16 %v850, %v850
  %v915 = vpack.c.b16 %v851, %v851
  %v916 = vpack.c.b16 %v852, %v852
  %v917 = vpack.c.b16 %v853, %v853
  %v918 = vpack.c.b16 %v854, %v854
  %v919 = vpack.c.b16 %v855, %v855
  %v920 = vpack.c.b16 %v856, %v856
  %v921 = vpack.c.b16 %v857, %v857
  %v922 = vpack.c.b16 %v858, %v858
  %v923 = vpack.c.b16 %v859, %v859
  %v924 = vpack.c.b16 %v860, %v860
  %v925 = vpack.c.b16 %v861, %v861
  %v926 = vpack.c.b16 %v862, %v862
  %v927 = vpack.c.b16 %v863, %v863
  %v928 = vpack.c.b16 %v864, %v864
  %v929 = vpack.c.b16 %v865, %v865
  %v930 = vpack.c.b16 %v866, %v866
  %v931 = vpack.c.b16 %v867, %v867
  %v932 = vpack.c.b16 %v868, %v868
  %v933 = vpack.c.b16 %v869, %v869
  %v934 = vpack.c.b16 %v870, %v870
  %v935 = vpack.c.b16 %v871, %v871
  %v936 = vpack.c.b16 %v872, %v872
  %v937 = vpack.c.b16 %v873, %v873
  %v938 = vpack.c.b16 %v874, %v874
  %v939 = vpack.c.b16 %v875, %v875
  %v940 = vpack.c.b16 %v876, %v876
  %v941 = vpack.c.b16 %v877, %v877
  %v942 = vpack.c.b16 %v878, %v878
  %v943 = vpack.c.b16 %v879, %v879
  %v944 = vpack.c.b16 %v880, %v880
  %v945 = vpack.c.b16 %v881, %v881
  %v946 = vpack.c.b16 %v882, %v882
  %v947 = vpack.c.b16 %v883, %v883
  %v948 = vpack.c.b16 %v884, %v884
  %v949 = vpack.c.b16 %v885, %v885
  %v950 = vpack.c.b16 %v886, %v886
  %v951 = vpack.c.b16 %v887, %v887
  %v952 = vpack.c.b16 %v888, %v888
  %v953 = vpack.c.b16 %v889, %v889
  %v954 = vpack.c.b16 %v890, %v890
  %v955 = vpack.c.b16 %v891, %v891
  %v956 = vpack.c.b16 %v892, %v892
  %v957 = vpack.c.b16 %v893, %v893
  %v958 = vpack.c.b16 %v894, %v894
  %v959 = vpack.c.b16 %v895, %v895
  %v960 = vpack.c.b16 %v896, %v896
  %1025 = vst [vmem:[%s4] sm:$0xf] %v897
  %1026 = vst [vmem:[%s4 + $0x4] sm:$0xf] %v898
  %1027 = vst [vmem:[%s4 + $0x8] sm:$0xf] %v899
  %1028 = vst [vmem:[%s4 + $0xc] sm:$0xf] %v900
  %1029 = vst [vmem:[%s4 + $0x10] sm:$0xf] %v901
  %1030 = vst [vmem:[%s4 + $0x14] sm:$0xf] %v902
  %1031 = vst [vmem:[%s4 + $0x18] sm:$0xf] %v903
  %1032 = vst [vmem:[%s4 + $0x1c] sm:$0xf] %v904
  %1033 = vst [vmem:[%s4 + $0x20] sm:$0xf] %v905
  %1034 = vst [vmem:[%s4 + $0x24] sm:$0xf] %v906
  %1035 = vst [vmem:[%s4 + $0x28] sm:$0xf] %v907
  %1036 = vst [vmem:[%s4 + $0x2c] sm:$0xf] %v908
  %1037 = vst [vmem:[%s4 + $0x30] sm:$0xf] %v909
  %1038 = vst [vmem:[%s4 + $0x34] sm:$0xf] %v910
  %1039 = vst [vmem:[%s4 + $0x38] sm:$0xf] %v911
  %1040 = vst [vmem:[%s4 + $0x3c] sm:$0xf] %v912
  %1041 = vst [vmem:[%s4 + $0x40] sm:$0xf] %v913
  %1042 = vst [vmem:[%s4 + $0x44] sm:$0xf] %v914
  %1043 = vst [vmem:[%s4 + $0x48] sm:$0xf] %v915
  %1044 = vst [vmem:[%s4 + $0x4c] sm:$0xf] %v916
  %1045 = vst [vmem:[%s4 + $0x50] sm:$0xf] %v917
  %1046 = vst [vmem:[%s4 + $0x54] sm:$0xf] %v918
  %1047 = vst [vmem:[%s4 + $0x58] sm:$0xf] %v919
  %1048 = vst [vmem:[%s4 + $0x5c] sm:$0xf] %v920
  %1049 = vst [vmem:[%s4 + $0x60] sm:$0xf] %v921
  %1050 = vst [vmem:[%s4 + $0x64] sm:$0xf] %v922
  %1051 = vst [vmem:[%s4 + $0x68] sm:$0xf] %v923
  %1052 = vst [vmem:[%s4 + $0x6c] sm:$0xf] %v924
  %1053 = vst [vmem:[%s4 + $0x70] sm:$0xf] %v925
  %1054 = vst [vmem:[%s4 + $0x74] sm:$0xf] %v926
  %1055 = vst [vmem:[%s4 + $0x78] sm:$0xf] %v927
  %1056 = vst [vmem:[%s4 + $0x7c] sm:$0xf] %v928
  %1057 = vst [vmem:[%s4 + $0x80] sm:$0xf] %v929
  %1058 = vst [vmem:[%s4 + $0x84] sm:$0xf] %v930
  %1059 = vst [vmem:[%s4 + $0x88] sm:$0xf] %v931
  %1060 = vst [vmem:[%s4 + $0x8c] sm:$0xf] %v932
  %1061 = vst [vmem:[%s4 + $0x90] sm:$0xf] %v933
  %1062 = vst [vmem:[%s4 + $0x94] sm:$0xf] %v934
  %1063 = vst [vmem:[%s4 + $0x98] sm:$0xf] %v935
  %1064 = vst [vmem:[%s4 + $0x9c] sm:$0xf] %v936
  %1065 = vst [vmem:[%s4 + $0xa0] sm:$0xf] %v937
  %1066 = vst [vmem:[%s4 + $0xa4] sm:$0xf] %v938
  %1067 = vst [vmem:[%s4 + $0xa8] sm:$0xf] %v939
  %1068 = vst [vmem:[%s4 + $0xac] sm:$0xf] %v940
  %1069 = vst [vmem:[%s4 + $0xb0] sm:$0xf] %v941
  %1070 = vst [vmem:[%s4 + $0xb4] sm:$0xf] %v942
  %1071 = vst [vmem:[%s4 + $0xb8] sm:$0xf] %v943
  %1072 = vst [vmem:[%s4 + $0xbc] sm:$0xf] %v944
  %1073 = vst [vmem:[%s4 + $0xc0] sm:$0xf] %v945
  %1074 = vst [vmem:[%s4 + $0xc4] sm:$0xf] %v946
  %1075 = vst [vmem:[%s4 + $0xc8] sm:$0xf] %v947
  %1076 = vst [vmem:[%s4 + $0xcc] sm:$0xf] %v948
  %1077 = vst [vmem:[%s4 + $0xd0] sm:$0xf] %v949
  %1078 = vst [vmem:[%s4 + $0xd4] sm:$0xf] %v950
  %1079 = vst [vmem:[%s4 + $0xd8] sm:$0xf] %v951
  %1080 = vst [vmem:[%s4 + $0xdc] sm:$0xf] %v952
  %1081 = vst [vmem:[%s4 + $0xe0] sm:$0xf] %v953
  %1082 = vst [vmem:[%s4 + $0xe4] sm:$0xf] %v954
  %1083 = vst [vmem:[%s4 + $0xe8] sm:$0xf] %v955
  %1084 = vst [vmem:[%s4 + $0xec] sm:$0xf] %v956
  %1085 = vst [vmem:[%s4 + $0xf0] sm:$0xf] %v957
  %1086 = vst [vmem:[%s4 + $0xf4] sm:$0xf] %v958
  %1087 = vst [vmem:[%s4 + $0xf8] sm:$0xf] %v959
  %1088 = vst [vmem:[%s4 + $0xfc] sm:$0xf] %v960
  // Predicated region
  $region18: #{spatial_gcn_forward.2} parent=0 // pred_check
    _
  $region19: #{spatial_gcn_forward.2} parent=0 // pred_check_branch
    %1090 = sbr.rel (0) target = $region21
  $region20: #{spatial_gcn_forward.2} parent=0 // pred_region
    _
  $region21: #{spatial_gcn_forward.2} parent=0 // pred_fallthru
    _
  // Predicated region
  $region22: #{spatial_gcn_forward.2} parent=0 // pred_check
    _
  $region23: #{spatial_gcn_forward.2} parent=0 // pred_check_branch
    %1092 = sbr.rel (0) target = $region25
  $region24: #{spatial_gcn_forward.2} parent=0 // pred_region
    _
  $region25: #{spatial_gcn_forward.2} parent=0 // pred_fallthru
    _

// kernel: spatial_gcn_forward.3
$region0: #{spatial_gcn_forward.3}
  #allocation0 [shape = 'u32[]', space=smem, size = 0x4, offset = 0x4, fixed_abs, tag = 'smem constant byte address 0x4 - core index']
  #allocation1 [shape = 'u32[144,128]{1,0:T(1,128)}', space=vmem, size = 0x12000, scoped, tag = 'internal scratch']
  %s0 = inlined_call_operand.vmem [shape: bf16[2,256,128], index: 0, kind: input, shape index: {}]
  %s1 = inlined_call_operand.vmem [shape: bf16[2,256,128], index: 1, kind: input, shape index: {}]
  %s2 = inlined_call_operand.vmem [shape: bf16[16,16], index: 2, kind: input, shape index: {}]
  %s3 = inlined_call_operand.vmem [shape: f32[1,16], index: 3, kind: input, shape index: {}]
  %s4 = inlined_call_operand.vmem [shape: f32[1,16], index: 4, kind: input, shape index: {}]
  %s5 = inlined_call_operand.vmem [shape: bf16[16,128], index: 5, kind: input, shape index: {}]
  %s6 = inlined_call_operand.vmem [shape: f32[1,128], index: 6, kind: input, shape index: {}]
  %s7 = inlined_call_operand.vmem [shape: f32[1,128], index: 7, kind: input, shape index: {}]
  %s8 = inlined_call_operand.hbm [shape: f32[2,256,128], index: 8, kind: output, shape index: {}]
  %s9 = sld [smem:[#allocation0]]
  $region42: #{spatial_gcn_forward.3} parent=0
    _
  %s11 = ssub.s32 1, %s9
  %s12 = scalar_select 0, %s11, %s9
  $region1: #{spatial_gcn_forward.3} parent=0
    #allocation2 [shape = 'u8[262144]{0}', space=vmem, size = 0x40000, scoped, tag = 'output window, operand 0, single buffered']
    #allocation3 [shape = 's32[1]{0}', space=sflag, size = 0x4, scoped, tag = 'scoped memory for spatial_gcn_forward.3']
    %13 = vsyncpa [#allocation3], 0
    // Predicated region
    $region2: #{spatial_gcn_forward.3} parent=1 // pred_check
      _
    $region3: #{spatial_gcn_forward.3} parent=1 // pred_check_branch
      %15 = sbr.rel (0) target = $region5
    $region4: #{spatial_gcn_forward.3} parent=1 // pred_region
      _
    $region5: #{spatial_gcn_forward.3} parent=1 // pred_fallthru
      _
    // Predicated region
    $region6: #{spatial_gcn_forward.3} parent=1 // pred_check
      _
    $region7: #{spatial_gcn_forward.3} parent=1 // pred_check_branch
      %17 = sbr.rel (0) target = $region9
    $region8: #{spatial_gcn_forward.3} parent=1 // pred_region
      _
    $region9: #{spatial_gcn_forward.3} parent=1 // pred_fallthru
      _
    // Predicated region
    $region10: #{spatial_gcn_forward.3} parent=1 // pred_check
      _
    $region11: #{spatial_gcn_forward.3} parent=1 // pred_check_branch
      %19 = sbr.rel (0) target = $region13
    $region12: #{spatial_gcn_forward.3} parent=1 // pred_region
      _
    $region13: #{spatial_gcn_forward.3} parent=1 // pred_fallthru
      _
    // Predicated region
    $region14: #{spatial_gcn_forward.3} parent=1 // pred_check
      _
    $region15: #{spatial_gcn_forward.3} parent=1 // pred_check_branch
      %21 = sbr.rel (0) target = $region17
    $region16: #{spatial_gcn_forward.3} parent=1 // pred_region
      _
    $region17: #{spatial_gcn_forward.3} parent=1 // pred_fallthru
      _
    // Predicated region
    $region18: #{spatial_gcn_forward.3} parent=1 // pred_check
      _
    $region19: #{spatial_gcn_forward.3} parent=1 // pred_check_branch
      %23 = sbr.rel (0) target = $region21
    $region20: #{spatial_gcn_forward.3} parent=1 // pred_region
      _
    $region21: #{spatial_gcn_forward.3} parent=1 // pred_fallthru
      _
    // Predicated region
    $region22: #{spatial_gcn_forward.3} parent=1 // pred_check
      _
    $region23: #{spatial_gcn_forward.3} parent=1 // pred_check_branch
      %25 = sbr.rel (0) target = $region25
    $region24: #{spatial_gcn_forward.3} parent=1 // pred_region
      _
    $region25: #{spatial_gcn_forward.3} parent=1 // pred_fallthru
      _
    // Predicated region
    $region26: #{spatial_gcn_forward.3} parent=1 // pred_check
      _
    $region27: #{spatial_gcn_forward.3} parent=1 // pred_check_branch
      %27 = sbr.rel (0) target = $region29
    $region28: #{spatial_gcn_forward.3} parent=1 // pred_region
      _
    $region29: #{spatial_gcn_forward.3} parent=1 // pred_fallthru
      _
    // Predicated region
    $region30: #{spatial_gcn_forward.3} parent=1 // pred_check
      _
    $region31: #{spatial_gcn_forward.3} parent=1 // pred_check_branch
      %29 = sbr.rel (0) target = $region33
    $region32: #{spatial_gcn_forward.3} parent=1 // pred_region
      _
    $region33: #{spatial_gcn_forward.3} parent=1 // pred_fallthru
      _
    %v31 = vld [vmem:[%s0] sm:$0xf]
    %v32 = vld [vmem:[%s0 + $0x4] sm:$0xf]
    %v33 = vld [vmem:[%s0 + $0x8] sm:$0xf]
    %v34 = vld [vmem:[%s0 + $0xc] sm:$0xf]
    %v35 = vld [vmem:[%s0 + $0x10] sm:$0xf]
    %v36 = vld [vmem:[%s0 + $0x14] sm:$0xf]
    %v37 = vld [vmem:[%s0 + $0x18] sm:$0xf]
    %v38 = vld [vmem:[%s0 + $0x1c] sm:$0xf]
    %v39 = vld [vmem:[%s0 + $0x20] sm:$0xf]
    %v40 = vld [vmem:[%s0 + $0x24] sm:$0xf]
    %v41 = vld [vmem:[%s0 + $0x28] sm:$0xf]
    %v42 = vld [vmem:[%s0 + $0x2c] sm:$0xf]
    %v43 = vld [vmem:[%s0 + $0x30] sm:$0xf]
    %v44 = vld [vmem:[%s0 + $0x34] sm:$0xf]
    %v45 = vld [vmem:[%s0 + $0x38] sm:$0xf]
    %v46 = vld [vmem:[%s0 + $0x3c] sm:$0xf]
    %v47 = vld [vmem:[%s0 + $0x40] sm:$0xf]
    %v48 = vld [vmem:[%s0 + $0x44] sm:$0xf]
    %v49 = vld [vmem:[%s0 + $0x48] sm:$0xf]
    %v50 = vld [vmem:[%s0 + $0x4c] sm:$0xf]
    %v51 = vld [vmem:[%s0 + $0x50] sm:$0xf]
    %v52 = vld [vmem:[%s0 + $0x54] sm:$0xf]
    %v53 = vld [vmem:[%s0 + $0x58] sm:$0xf]
    %v54 = vld [vmem:[%s0 + $0x5c] sm:$0xf]
    %v55 = vld [vmem:[%s0 + $0x60] sm:$0xf]
    %v56 = vld [vmem:[%s0 + $0x64] sm:$0xf]
    %v57 = vld [vmem:[%s0 + $0x68] sm:$0xf]
    %v58 = vld [vmem:[%s0 + $0x6c] sm:$0xf]
    %v59 = vld [vmem:[%s0 + $0x70] sm:$0xf]
    %v60 = vld [vmem:[%s0 + $0x74] sm:$0xf]
    %v61 = vld [vmem:[%s0 + $0x78] sm:$0xf]
    %v62 = vld [vmem:[%s0 + $0x7c] sm:$0xf]
    %v63 = vld [vmem:[%s0 + $0x80] sm:$0xf]
    %v64 = vld [vmem:[%s0 + $0x84] sm:$0xf]
    %v65 = vld [vmem:[%s0 + $0x88] sm:$0xf]
    %v66 = vld [vmem:[%s0 + $0x8c] sm:$0xf]
    %v67 = vld [vmem:[%s0 + $0x90] sm:$0xf]
    %v68 = vld [vmem:[%s0 + $0x94] sm:$0xf]
    %v69 = vld [vmem:[%s0 + $0x98] sm:$0xf]
    %v70 = vld [vmem:[%s0 + $0x9c] sm:$0xf]
    %v71 = vld [vmem:[%s0 + $0xa0] sm:$0xf]
    %v72 = vld [vmem:[%s0 + $0xa4] sm:$0xf]
    %v73 = vld [vmem:[%s0 + $0xa8] sm:$0xf]
    %v74 = vld [vmem:[%s0 + $0xac] sm:$0xf]
    %v75 = vld [vmem:[%s0 + $0xb0] sm:$0xf]
    %v76 = vld [vmem:[%s0 + $0xb4] sm:$0xf]
    %v77 = vld [vmem:[%s0 + $0xb8] sm:$0xf]
    %v78 = vld [vmem:[%s0 + $0xbc] sm:$0xf]
    %v79 = vld [vmem:[%s0 + $0xc0] sm:$0xf]
    %v80 = vld [vmem:[%s0 + $0xc4] sm:$0xf]
    %v81 = vld [vmem:[%s0 + $0xc8] sm:$0xf]
    %v82 = vld [vmem:[%s0 + $0xcc] sm:$0xf]
    %v83 = vld [vmem:[%s0 + $0xd0] sm:$0xf]
    %v84 = vld [vmem:[%s0 + $0xd4] sm:$0xf]
    %v85 = vld [vmem:[%s0 + $0xd8] sm:$0xf]
    %v86 = vld [vmem:[%s0 + $0xdc] sm:$0xf]
    %v87 = vld [vmem:[%s0 + $0xe0] sm:$0xf]
    %v88 = vld [vmem:[%s0 + $0xe4] sm:$0xf]
    %v89 = vld [vmem:[%s0 + $0xe8] sm:$0xf]
    %v90 = vld [vmem:[%s0 + $0xec] sm:$0xf]
    %v91 = vld [vmem:[%s0 + $0xf0] sm:$0xf]
    %v92 = vld [vmem:[%s0 + $0xf4] sm:$0xf]
    %v93 = vld [vmem:[%s0 + $0xf8] sm:$0xf]
    %v94 = vld [vmem:[%s0 + $0xfc] sm:$0xf]
    %v127 = vunpack.c.l.b16 %v31
    %v128 = vunpack.c.l.b16 %v32
    %v129 = vunpack.c.l.b16 %v33
    %v130 = vunpack.c.l.b16 %v34
    %v131 = vunpack.c.l.b16 %v35
    %v132 = vunpack.c.l.b16 %v36
    %v133 = vunpack.c.l.b16 %v37
    %v134 = vunpack.c.l.b16 %v38
    %v135 = vunpack.c.l.b16 %v39
    %v136 = vunpack.c.l.b16 %v40
    %v137 = vunpack.c.l.b16 %v41
    %v138 = vunpack.c.l.b16 %v42
    %v139 = vunpack.c.l.b16 %v43
    %v140 = vunpack.c.l.b16 %v44
    %v141 = vunpack.c.l.b16 %v45
    %v142 = vunpack.c.l.b16 %v46
    %v143 = vunpack.c.l.b16 %v47
    %v144 = vunpack.c.l.b16 %v48
    %v145 = vunpack.c.l.b16 %v49
    %v146 = vunpack.c.l.b16 %v50
    %v147 = vunpack.c.l.b16 %v51
    %v148 = vunpack.c.l.b16 %v52
    %v149 = vunpack.c.l.b16 %v53
    %v150 = vunpack.c.l.b16 %v54
    %v151 = vunpack.c.l.b16 %v55
    %v152 = vunpack.c.l.b16 %v56
    %v153 = vunpack.c.l.b16 %v57
    %v154 = vunpack.c.l.b16 %v58
    %v155 = vunpack.c.l.b16 %v59
    %v156 = vunpack.c.l.b16 %v60
    %v157 = vunpack.c.l.b16 %v61
    %v158 = vunpack.c.l.b16 %v62
    %v159 = vpack.c.b16 %v128, %v127
    %v160 = vpack.c.b16 %v130, %v129
    %v161 = vpack.c.b16 %v132, %v131
    %v162 = vpack.c.b16 %v134, %v133
    %v163 = vpack.c.b16 %v136, %v135
    %v164 = vpack.c.b16 %v138, %v137
    %v165 = vpack.c.b16 %v140, %v139
    %v166 = vpack.c.b16 %v142, %v141
    %v167 = vpack.c.b16 %v144, %v143
    %v168 = vpack.c.b16 %v146, %v145
    %v169 = vpack.c.b16 %v148, %v147
    %v170 = vpack.c.b16 %v150, %v149
    %v171 = vpack.c.b16 %v152, %v151
    %v172 = vpack.c.b16 %v154, %v153
    %v173 = vpack.c.b16 %v156, %v155
    %v174 = vpack.c.b16 %v158, %v157
    %175 = vrot.lane.b32.xlu0 %v159, 96
    %v176 = vpop.permute.xlu0 %175
    %177 = vrot.lane.b32.xlu0 %v160, 96
    %v178 = vpop.permute.xlu0 %177
    %179 = vrot.lane.b32.xlu0 %v161, 96
    %v180 = vpop.permute.xlu0 %179
    %181 = vrot.lane.b32.xlu0 %v162, 96
    %v182 = vpop.permute.xlu0 %181
    %183 = vrot.lane.b32.xlu0 %v163, 96
    %v184 = vpop.permute.xlu0 %183
    %185 = vrot.lane.b32.xlu0 %v164, 96
    %v186 = vpop.permute.xlu0 %185
    %187 = vrot.lane.b32.xlu0 %v165, 96
    %v188 = vpop.permute.xlu0 %187
    %189 = vrot.lane.b32.xlu0 %v166, 96
    %v190 = vpop.permute.xlu0 %189
    %191 = vrot.lane.b32.xlu0 %v167, 96
    %v192 = vpop.permute.xlu0 %191
    %193 = vrot.lane.b32.xlu0 %v168, 96
    %v194 = vpop.permute.xlu0 %193
    %195 = vrot.lane.b32.xlu0 %v169, 96
    %v196 = vpop.permute.xlu0 %195
    %197 = vrot.lane.b32.xlu0 %v170, 96
    %v198 = vpop.permute.xlu0 %197
    %199 = vrot.lane.b32.xlu0 %v171, 96
    %v200 = vpop.permute.xlu0 %199
    %201 = vrot.lane.b32.xlu0 %v172, 96
    %v202 = vpop.permute.xlu0 %201
    %203 = vrot.lane.b32.xlu0 %v173, 96
    %v204 = vpop.permute.xlu0 %203
    %205 = vrot.lane.b32.xlu0 %v174, 96
    %v206 = vpop.permute.xlu0 %205
    %223 = vxpose.xlu0.c.b16.start [1/8] %v176, 128
    %224 = vxpose.xlu0.c.b16.cont [2/8] %v178, 128
    %225 = vxpose.xlu0.c.b16.cont [3/8] %v180, 128
    %226 = vxpose.xlu0.c.b16.cont [4/8] %v182, 128
    %227 = vxpose.xlu0.c.b16.cont [5/8] %v184, 128
    %228 = vxpose.xlu0.c.b16.cont [6/8] %v186, 128
    %229 = vxpose.xlu0.c.b16.cont [7/8] %v188, 128
    %230 = vxpose.xlu0.c.b16.end [8/8] %v190, 128
    %v231 = vpop.trf.xlu0
    %v232 = vpop.trf.xlu0
    %v233 = vpop.trf.xlu0
    %v234 = vpop.trf.xlu0
    %v235 = vpop.trf.xlu0
    %v236 = vpop.trf.xlu0
    %v237 = vpop.trf.xlu0
    %v238 = vpop.trf.xlu0
    %239 = vxpose.xlu0.c.b16.start [1/8] %v192, 128
    %240 = vxpose.xlu0.c.b16.cont [2/8] %v194, 128
    %241 = vxpose.xlu0.c.b16.cont [3/8] %v196, 128
    %242 = vxpose.xlu0.c.b16.cont [4/8] %v198, 128
    %243 = vxpose.xlu0.c.b16.cont [5/8] %v200, 128
    %244 = vxpose.xlu0.c.b16.cont [6/8] %v202, 128
    %245 = vxpose.xlu0.c.b16.cont [7/8] %v204, 128
    %246 = vxpose.xlu0.c.b16.end [8/8] %v206, 128
    %v247 = vpop.trf.xlu0
    %v248 = vpop.trf.xlu0
    %v249 = vpop.trf.xlu0
    %v250 = vpop.trf.xlu0
    %v251 = vpop.trf.xlu0
    %v252 = vpop.trf.xlu0
    %v253 = vpop.trf.xlu0
    %v254 = vpop.trf.xlu0
    %255 = vrot.lane.b32.xlu0 %v159, 112
    %v256 = vpop.permute.xlu0 %255
    %257 = vrot.lane.b32.xlu0 %v160, 112
    %v258 = vpop.permute.xlu0 %257
    %259 = vrot.lane.b32.xlu0 %v161, 112
    %v260 = vpop.permute.xlu0 %259
    %261 = vrot.lane.b32.xlu0 %v162, 112
    %v262 = vpop.permute.xlu0 %261
    %263 = vrot.lane.b32.xlu0 %v163, 112
    %v264 = vpop.permute.xlu0 %263
    %265 = vrot.lane.b32.xlu0 %v164, 112
    %v266 = vpop.permute.xlu0 %265
    %267 = vrot.lane.b32.xlu0 %v165, 112
    %v268 = vpop.permute.xlu0 %267
    %269 = vrot.lane.b32.xlu0 %v166, 112
    %v270 = vpop.permute.xlu0 %269
    %271 = vrot.lane.b32.xlu0 %v167, 112
    %v272 = vpop.permute.xlu0 %271
    %273 = vrot.lane.b32.xlu0 %v168, 112
    %v274 = vpop.permute.xlu0 %273
    %275 = vrot.lane.b32.xlu0 %v169, 112
    %v276 = vpop.permute.xlu0 %275
    %277 = vrot.lane.b32.xlu0 %v170, 112
    %v278 = vpop.permute.xlu0 %277
    %279 = vrot.lane.b32.xlu0 %v171, 112
    %v280 = vpop.permute.xlu0 %279
    %281 = vrot.lane.b32.xlu0 %v172, 112
    %v282 = vpop.permute.xlu0 %281
    %283 = vrot.lane.b32.xlu0 %v173, 112
    %v284 = vpop.permute.xlu0 %283
    %285 = vrot.lane.b32.xlu0 %v174, 112
    %v286 = vpop.permute.xlu0 %285
    %303 = vmatprep.subr.bf16.mxu0 0
    %304 = vmatpush1.bf16.msra.mxu0 %v256
    %305 = vmatprep.subr.bf16.mxu0 0
    %306 = vmatpush1.bf16.msra.mxu0 %v258
    %307 = vmatprep.subr.bf16.mxu0 0
    %308 = vmatpush1.bf16.msra.mxu0 %v260
    %309 = vmatprep.subr.bf16.mxu0 0
    %310 = vmatpush1.bf16.msra.mxu0 %v262
    %311 = vmatprep.subr.bf16.mxu0 0
    %312 = vmatpush1.bf16.msra.mxu0 %v264
    %313 = vmatprep.subr.bf16.mxu0 0
    %314 = vmatpush1.bf16.msra.mxu0 %v266
    %315 = vmatprep.subr.bf16.mxu0 0
    %316 = vmatpush1.bf16.msra.mxu0 %v268
    %317 = vmatprep.subr.bf16.mxu0 0
    %318 = vmatpush1.bf16.msra.mxu0 %v270
    %319 = vmatprep.subr.bf16.mxu0 0
    %320 = vmatpush1.bf16.msra.mxu0 %v272
    %321 = vmatprep.subr.bf16.mxu0 0
    %322 = vmatpush1.bf16.msra.mxu0 %v274
    %323 = vmatprep.subr.bf16.mxu0 0
    %324 = vmatpush1.bf16.msra.mxu0 %v276
    %325 = vmatprep.subr.bf16.mxu0 0
    %326 = vmatpush1.bf16.msra.mxu0 %v278
    %327 = vmatprep.subr.bf16.mxu0 0
    %328 = vmatpush1.bf16.msra.mxu0 %v280
    %329 = vmatprep.subr.bf16.mxu0 0
    %330 = vmatpush1.bf16.msra.mxu0 %v282
    %331 = vmatprep.subr.bf16.mxu0 0
    %332 = vmatpush1.bf16.msra.mxu0 %v284
    %333 = vmatprep.subr.bf16.mxu0 0
    %334 = vmatpush1.bf16.msra.mxu0 %v286
    %335 = vmatprep.mubr.bf16.mxu0 %v247
    %336 = vmatmul.mubr.bf16.gmra.mrb[0].mxu0 %v231
    %v337 = vpop.f32.mrb[0].mxu0
    %v338 = vadd.f32 0.0, %v337
    %v339 = vpop.f32.mrb[0].mxu0
    %v340 = vpop.f32.mrb[0].mxu0
    %v341 = vadd.f32 0.0, %v340
    %v342 = vpop.f32.mrb[0].mxu0
    %343 = vdwg.mxu0
    %v376 = vunpack.c.l.b16 %v63
    %v377 = vunpack.c.l.b16 %v64
    %v378 = vunpack.c.l.b16 %v65
    %v379 = vunpack.c.l.b16 %v66
    %v380 = vunpack.c.l.b16 %v67
    %v381 = vunpack.c.l.b16 %v68
    %v382 = vunpack.c.l.b16 %v69
    %v383 = vunpack.c.l.b16 %v70
    %v384 = vunpack.c.l.b16 %v71
    %v385 = vunpack.c.l.b16 %v72
    %v386 = vunpack.c.l.b16 %v73
    %v387 = vunpack.c.l.b16 %v74
    %v388 = vunpack.c.l.b16 %v75
    %v389 = vunpack.c.l.b16 %v76
    %v390 = vunpack.c.l.b16 %v77
    %v391 = vunpack.c.l.b16 %v78
    %v392 = vunpack.c.l.b16 %v79
    %v393 = vunpack.c.l.b16 %v80
    %v394 = vunpack.c.l.b16 %v81
    %v395 = vunpack.c.l.b16 %v82
    %v396 = vunpack.c.l.b16 %v83
    %v397 = vunpack.c.l.b16 %v84
    %v398 = vunpack.c.l.b16 %v85
    %v399 = vunpack.c.l.b16 %v86
    %v400 = vunpack.c.l.b16 %v87
    %v401 = vunpack.c.l.b16 %v88
    %v402 = vunpack.c.l.b16 %v89
    %v403 = vunpack.c.l.b16 %v90
    %v404 = vunpack.c.l.b16 %v91
    %v405 = vunpack.c.l.b16 %v92
    %v406 = vunpack.c.l.b16 %v93
    %v407 = vunpack.c.l.b16 %v94
    %v408 = vpack.c.b16 %v377, %v376
    %v409 = vpack.c.b16 %v379, %v378
    %v410 = vpack.c.b16 %v381, %v380
    %v411 = vpack.c.b16 %v383, %v382
    %v412 = vpack.c.b16 %v385, %v384
    %v413 = vpack.c.b16 %v387, %v386
    %v414 = vpack.c.b16 %v389, %v388
    %v415 = vpack.c.b16 %v391, %v390
    %v416 = vpack.c.b16 %v393, %v392
    %v417 = vpack.c.b16 %v395, %v394
    %v418 = vpack.c.b16 %v397, %v396
    %v419 = vpack.c.b16 %v399, %v398
    %v420 = vpack.c.b16 %v401, %v400
    %v421 = vpack.c.b16 %v403, %v402
    %v422 = vpack.c.b16 %v405, %v404
    %v423 = vpack.c.b16 %v407, %v406
    %424 = vrot.lane.b32.xlu0 %v408, 96
    %v425 = vpop.permute.xlu0 %424
    %426 = vrot.lane.b32.xlu0 %v409, 96
    %v427 = vpop.permute.xlu0 %426
    %428 = vrot.lane.b32.xlu0 %v410, 96
    %v429 = vpop.permute.xlu0 %428
    %430 = vrot.lane.b32.xlu0 %v411, 96
    %v431 = vpop.permute.xlu0 %430
    %432 = vrot.lane.b32.xlu0 %v412, 96
    %v433 = vpop.permute.xlu0 %432
    %434 = vrot.lane.b32.xlu0 %v413, 96
    %v435 = vpop.permute.xlu0 %434
    %436 = vrot.lane.b32.xlu0 %v414, 96
    %v437 = vpop.permute.xlu0 %436
    %438 = vrot.lane.b32.xlu0 %v415, 96
    %v439 = vpop.permute.xlu0 %438
    %440 = vrot.lane.b32.xlu0 %v416, 96
    %v441 = vpop.permute.xlu0 %440
    %442 = vrot.lane.b32.xlu0 %v417, 96
    %v443 = vpop.permute.xlu0 %442
    %444 = vrot.lane.b32.xlu0 %v418, 96
    %v445 = vpop.permute.xlu0 %444
    %446 = vrot.lane.b32.xlu0 %v419, 96
    %v447 = vpop.permute.xlu0 %446
    %448 = vrot.lane.b32.xlu0 %v420, 96
    %v449 = vpop.permute.xlu0 %448
    %450 = vrot.lane.b32.xlu0 %v421, 96
    %v451 = vpop.permute.xlu0 %450
    %452 = vrot.lane.b32.xlu0 %v422, 96
    %v453 = vpop.permute.xlu0 %452
    %454 = vrot.lane.b32.xlu0 %v423, 96
    %v455 = vpop.permute.xlu0 %454
    %472 = vxpose.xlu0.c.b16.start [1/8] %v425, 128
    %473 = vxpose.xlu0.c.b16.cont [2/8] %v427, 128
    %474 = vxpose.xlu0.c.b16.cont [3/8] %v429, 128
    %475 = vxpose.xlu0.c.b16.cont [4/8] %v431, 128
    %476 = vxpose.xlu0.c.b16.cont [5/8] %v433, 128
    %477 = vxpose.xlu0.c.b16.cont [6/8] %v435, 128
    %478 = vxpose.xlu0.c.b16.cont [7/8] %v437, 128
    %479 = vxpose.xlu0.c.b16.end [8/8] %v439, 128
    %v480 = vpop.trf.xlu0
    %v481 = vpop.trf.xlu0
    %v482 = vpop.trf.xlu0
    %v483 = vpop.trf.xlu0
    %v484 = vpop.trf.xlu0
    %v485 = vpop.trf.xlu0
    %v486 = vpop.trf.xlu0
    %v487 = vpop.trf.xlu0
    %488 = vxpose.xlu0.c.b16.start [1/8] %v441, 128
    %489 = vxpose.xlu0.c.b16.cont [2/8] %v443, 128
    %490 = vxpose.xlu0.c.b16.cont [3/8] %v445, 128
    %491 = vxpose.xlu0.c.b16.cont [4/8] %v447, 128
    %492 = vxpose.xlu0.c.b16.cont [5/8] %v449, 128
    %493 = vxpose.xlu0.c.b16.cont [6/8] %v451, 128
    %494 = vxpose.xlu0.c.b16.cont [7/8] %v453, 128
    %495 = vxpose.xlu0.c.b16.end [8/8] %v455, 128
    %v496 = vpop.trf.xlu0
    %v497 = vpop.trf.xlu0
    %v498 = vpop.trf.xlu0
    %v499 = vpop.trf.xlu0
    %v500 = vpop.trf.xlu0
    %v501 = vpop.trf.xlu0
    %v502 = vpop.trf.xlu0
    %v503 = vpop.trf.xlu0
    %504 = vrot.lane.b32.xlu0 %v408, 112
    %v505 = vpop.permute.xlu0 %504
    %506 = vrot.lane.b32.xlu0 %v409, 112
    %v507 = vpop.permute.xlu0 %506
    %508 = vrot.lane.b32.xlu0 %v410, 112
    %v509 = vpop.permute.xlu0 %508
    %510 = vrot.lane.b32.xlu0 %v411, 112
    %v511 = vpop.permute.xlu0 %510
    %512 = vrot.lane.b32.xlu0 %v412, 112
    %v513 = vpop.permute.xlu0 %512
    %514 = vrot.lane.b32.xlu0 %v413, 112
    %v515 = vpop.permute.xlu0 %514
    %516 = vrot.lane.b32.xlu0 %v414, 112
    %v517 = vpop.permute.xlu0 %516
    %518 = vrot.lane.b32.xlu0 %v415, 112
    %v519 = vpop.permute.xlu0 %518
    %520 = vrot.lane.b32.xlu0 %v416, 112
    %v521 = vpop.permute.xlu0 %520
    %522 = vrot.lane.b32.xlu0 %v417, 112
    %v523 = vpop.permute.xlu0 %522
    %524 = vrot.lane.b32.xlu0 %v418, 112
    %v525 = vpop.permute.xlu0 %524
    %526 = vrot.lane.b32.xlu0 %v419, 112
    %v527 = vpop.permute.xlu0 %526
    %528 = vrot.lane.b32.xlu0 %v420, 112
    %v529 = vpop.permute.xlu0 %528
    %530 = vrot.lane.b32.xlu0 %v421, 112
    %v531 = vpop.permute.xlu0 %530
    %532 = vrot.lane.b32.xlu0 %v422, 112
    %v533 = vpop.permute.xlu0 %532
    %534 = vrot.lane.b32.xlu0 %v423, 112
    %v535 = vpop.permute.xlu0 %534
    %552 = vmatprep.subr.bf16.mxu0 0
    %553 = vmatpush1.bf16.msra.mxu0 %v505
    %554 = vmatprep.subr.bf16.mxu0 0
    %555 = vmatpush1.bf16.msra.mxu0 %v507
    %556 = vmatprep.subr.bf16.mxu0 0
    %557 = vmatpush1.bf16.msra.mxu0 %v509
    %558 = vmatprep.subr.bf16.mxu0 0
    %559 = vmatpush1.bf16.msra.mxu0 %v511
    %560 = vmatprep.subr.bf16.mxu0 0
    %561 = vmatpush1.bf16.msra.mxu0 %v513
    %562 = vmatprep.subr.bf16.mxu0 0
    %563 = vmatpush1.bf16.msra.mxu0 %v515
    %564 = vmatprep.subr.bf16.mxu0 0
    %565 = vmatpush1.bf16.msra.mxu0 %v517
    %566 = vmatprep.subr.bf16.mxu0 0
    %567 = vmatpush1.bf16.msra.mxu0 %v519
    %568 = vmatprep.subr.bf16.mxu0 0
    %569 = vmatpush1.bf16.msra.mxu0 %v521
    %570 = vmatprep.subr.bf16.mxu0 0
    %571 = vmatpush1.bf16.msra.mxu0 %v523
    %572 = vmatprep.subr.bf16.mxu0 0
    %573 = vmatpush1.bf16.msra.mxu0 %v525
    %574 = vmatprep.subr.bf16.mxu0 0
    %575 = vmatpush1.bf16.msra.mxu0 %v527
    %576 = vmatprep.subr.bf16.mxu0 0
    %577 = vmatpush1.bf16.msra.mxu0 %v529
    %578 = vmatprep.subr.bf16.mxu0 0
    %579 = vmatpush1.bf16.msra.mxu0 %v531
    %580 = vmatprep.subr.bf16.mxu0 0
    %581 = vmatpush1.bf16.msra.mxu0 %v533
    %582 = vmatprep.subr.bf16.mxu0 0
    %583 = vmatpush1.bf16.msra.mxu0 %v535
    %584 = vmatprep.mubr.bf16.mxu0 %v496
    %585 = vmatmul.mubr.bf16.gmra.mrb[0].mxu0 %v480
    %v586 = vpop.f32.mrb[0].mxu0
    %v587 = vadd.f32 0.0, %v586
    %v588 = vpop.f32.mrb[0].mxu0
    %v589 = vpop.f32.mrb[0].mxu0
    %v590 = vadd.f32 0.0, %v589
    %v591 = vpop.f32.mrb[0].mxu0
    %592 = vdwg.mxu0
    %vm593 = vcmask 130048
    %v594 = vsel %vm593, %v338, -inf
    %595 = vmax.xlane.f32.xlu0 %v594
    %v596 = vpop.xlane.xlu0 %595
    %v597 = vsel %vm593, %v341, -inf
    %598 = vmax.xlane.f32.xlu0 %v597
    %v599 = vpop.xlane.xlu0 %598
    %v600 = vsel %vm593, %v587, -inf
    %601 = vmax.xlane.f32.xlu0 %v600
    %v602 = vpop.xlane.xlu0 %601
    %v603 = vsel %vm593, %v590, -inf
    %604 = vmax.xlane.f32.xlu0 %v603
    %v605 = vpop.xlane.xlu0 %604
    %v606 = vsub.f32 %v338, %v596
    %v607 = vsub.f32 %v341, %v599
    %v608 = vsub.f32 %v587, %v602
    %v609 = vsub.f32 %v590, %v605
    %v610 = vmul.f32 %v606, 1.442695
    %v611 = vpow.pop %v610
    %v612 = vmul.f32 %v607, 1.442695
    %v613 = vpow.pop %v612
    %v614 = vmul.f32 %v608, 1.442695
    %v615 = vpow.pop %v614
    %v616 = vmul.f32 %v609, 1.442695
    %v617 = vpow.pop %v616
    %v618 = vsel %vm593, %v611, 0.0
    %619 = vadd.xlane.f32.xlu0 %v618
    %v620 = vpop.xlane.xlu0 %619
    %v621 = vsel %vm593, %v613, 0.0
    %622 = vadd.xlane.f32.xlu0 %v621
    %v623 = vpop.xlane.xlu0 %622
    %v624 = vsel %vm593, %v615, 0.0
    %625 = vadd.xlane.f32.xlu0 %v624
    %v626 = vpop.xlane.xlu0 %625
    %v627 = vsel %vm593, %v617, 0.0
    %628 = vadd.xlane.f32.xlu0 %v627
    %v629 = vpop.xlane.xlu0 %628
    %v630 = vrcp.pop %v620
    %v631 = vmul.f32 %v611, %v630
    %v632 = vrcp.pop %v623
    %v633 = vmul.f32 %v613, %v632
    %v634 = vrcp.pop %v626
    %v635 = vmul.f32 %v615, %v634
    %v636 = vrcp.pop %v629
    %v637 = vmul.f32 %v617, %v636
    %v638 = vpack.c.bf16 %v633, %v631
    %v639 = vpack.c.bf16 %v637, %v635
    %v641 = vsel %vm593, %v159, 0
    %v644 = vsel %vm593, %v160, 0
    %v647 = vsel %vm593, %v161, 0
    %v650 = vsel %vm593, %v162, 0
    %v653 = vsel %vm593, %v163, 0
    %v656 = vsel %vm593, %v164, 0
    %v659 = vsel %vm593, %v165, 0
    %v662 = vsel %vm593, %v166, 0
    %v665 = vsel %vm593, %v167, 0
    %v668 = vsel %vm593, %v168, 0
    %v671 = vsel %vm593, %v169, 0
    %v674 = vsel %vm593, %v170, 0
    %v677 = vsel %vm593, %v171, 0
    %v680 = vsel %vm593, %v172, 0
    %v683 = vsel %vm593, %v173, 0
    %v686 = vsel %vm593, %v174, 0
    %688 = vmatprep.subr.bf16.mxu0 0
    %689 = vmatpush1.bf16.msra.mxu0 %v638
    %690 = vmatprep.subr.bf16.mxu0 0
    %691 = vmatpush1.bf16.msra.mxu0 0
    %692 = vmatprep.subr.bf16.mxu0 0
    %693 = vmatpush1.bf16.msra.mxu0 0
    %694 = vmatprep.subr.bf16.mxu0 0
    %695 = vmatpush1.bf16.msra.mxu0 0
    %696 = vmatprep.subr.bf16.mxu0 0
    %697 = vmatpush1.bf16.msra.mxu0 0
    %698 = vmatprep.subr.bf16.mxu0 0
    %699 = vmatpush1.bf16.msra.mxu0 0
    %700 = vmatprep.subr.bf16.mxu0 0
    %701 = vmatpush1.bf16.msra.mxu0 0
    %702 = vmatprep.subr.bf16.mxu0 0
    %703 = vmatpush1.bf16.msra.mxu0 0
    %704 = vmatprep.subr.bf16.mxu0 0
    %705 = vmatpush1.bf16.msra.mxu0 0
    %706 = vmatprep.subr.bf16.mxu0 0
    %707 = vmatpush1.bf16.msra.mxu0 0
    %708 = vmatprep.subr.bf16.mxu0 0
    %709 = vmatpush1.bf16.msra.mxu0 0
    %710 = vmatprep.subr.bf16.mxu0 0
    %711 = vmatpush1.bf16.msra.mxu0 0
    %712 = vmatprep.subr.bf16.mxu0 0
    %713 = vmatpush1.bf16.msra.mxu0 0
    %714 = vmatprep.subr.bf16.mxu0 0
    %715 = vmatpush1.bf16.msra.mxu0 0
    %716 = vmatprep.subr.bf16.mxu0 0
    %717 = vmatpush1.bf16.msra.mxu0 0
    %718 = vmatprep.subr.bf16.mxu0 0
    %719 = vmatpush1.bf16.msra.mxu0 0
    %720 = vmatprep.mubr.bf16.mxu0 0
    %721 = vmatmul.mubr.bf16.gmra.mrb[0].mxu0 %v641
    %v722 = vpop.f32.mrb[0].mxu0
    %v723 = vadd.f32 0.0, %v722
    %v724 = vpop.f32.mrb[0].mxu0
    %v725 = vpop.f32.mrb[0].mxu0
    %v726 = vadd.f32 0.0, %v725
    %v727 = vpop.f32.mrb[0].mxu0
    %728 = vmatprep.mubr.bf16.mxu0 0
    %729 = vmatmul.mubr.bf16.gmra.mrb[0].mxu0 %v644
    %v730 = vpop.f32.mrb[0].mxu0
    %v731 = vadd.f32 0.0, %v730
    %v732 = vpop.f32.mrb[0].mxu0
    %v733 = vpop.f32.mrb[0].mxu0
    %v734 = vadd.f32 0.0, %v733
    %v735 = vpop.f32.mrb[0].mxu0
    %736 = vmatprep.mubr.bf16.mxu0 0
    %737 = vmatmul.mubr.bf16.gmra.mrb[0].mxu0 %v647
    %v738 = vpop.f32.mrb[0].mxu0
    %v739 = vadd.f32 0.0, %v738
    %v740 = vpop.f32.mrb[0].mxu0
    %v741 = vpop.f32.mrb[0].mxu0
    %v742 = vadd.f32 0.0, %v741
    %v743 = vpop.f32.mrb[0].mxu0
    %744 = vmatprep.mubr.bf16.mxu0 0
    %745 = vmatmul.mubr.bf16.gmra.mrb[0].mxu0 %v650
    %v746 = vpop.f32.mrb[0].mxu0
    %v747 = vadd.f32 0.0, %v746
    %v748 = vpop.f32.mrb[0].mxu0
    %v749 = vpop.f32.mrb[0].mxu0
    %v750 = vadd.f32 0.0, %v749
    %v751 = vpop.f32.mrb[0].mxu0
    %752 = vmatprep.mubr.bf16.mxu0 0
    %753 = vmatmul.mubr.bf16.gmra.mrb[0].mxu0 %v653
    %v754 = vpop.f32.mrb[0].mxu0
    %v755 = vadd.f32 0.0, %v754
    %v756 = vpop.f32.mrb[0].mxu0
    %v757 = vpop.f32.mrb[0].mxu0
    %v758 = vadd.f32 0.0, %v757
    %v759 = vpop.f32.mrb[0].mxu0
    %760 = vmatprep.mubr.bf16.mxu0 0
    %761 = vmatmul.mubr.bf16.gmra.mrb[0].mxu0 %v656
    %v762 = vpop.f32.mrb[0].mxu0
    %v763 = vadd.f32 0.0, %v762
    %v764 = vpop.f32.mrb[0].mxu0
    %v765 = vpop.f32.mrb[0].mxu0
    %v766 = vadd.f32 0.0, %v765
    %v767 = vpop.f32.mrb[0].mxu0
    %768 = vmatprep.mubr.bf16.mxu0 0
    %769 = vmatmul.mubr.bf16.gmra.mrb[0].mxu0 %v659
    %v770 = vpop.f32.mrb[0].mxu0
    %v771 = vadd.f32 0.0, %v770
    %v772 = vpop.f32.mrb[0].mxu0
    %v773 = vpop.f32.mrb[0].mxu0
    %v774 = vadd.f32 0.0, %v773
    %v775 = vpop.f32.mrb[0].mxu0
    %776 = vmatprep.mubr.bf16.mxu0 0
    %777 = vmatmul.mubr.bf16.gmra.mrb[0].mxu0 %v662
    %v778 = vpop.f32.mrb[0].mxu0
    %v779 = vadd.f32 0.0, %v778
    %v780 = vpop.f32.mrb[0].mxu0
    %v781 = vpop.f32.mrb[0].mxu0
    %v782 = vadd.f32 0.0, %v781
    %v783 = vpop.f32.mrb[0].mxu0
    %784 = vmatprep.mubr.bf16.mxu0 0
    %785 = vmatmul.mubr.bf16.gmra.mrb[0].mxu0 %v665
    %v786 = vpop.f32.mrb[0].mxu0
    %v787 = vadd.f32 0.0, %v786
    %v788 = vpop.f32.mrb[0].mxu0
    %v789 = vpop.f32.mrb[0].mxu0
    %v790 = vadd.f32 0.0, %v789
    %v791 = vpop.f32.mrb[0].mxu0
    %792 = vmatprep.mubr.bf16.mxu0 0
    %793 = vmatmul.mubr.bf16.gmra.mrb[0].mxu0 %v668
    %v794 = vpop.f32.mrb[0].mxu0
    %v795 = vadd.f32 0.0, %v794
    %v796 = vpop.f32.mrb[0].mxu0
    %v797 = vpop.f32.mrb[0].mxu0
    %v798 = vadd.f32 0.0, %v797
    %v799 = vpop.f32.mrb[0].mxu0
    %800 = vmatprep.mubr.bf16.mxu0 0
    %801 = vmatmul.mubr.bf16.gmra.mrb[0].mxu0 %v671
    %v802 = vpop.f32.mrb[0].mxu0
    %v803 = vadd.f32 0.0, %v802
    %v804 = vpop.f32.mrb[0].mxu0
    %v805 = vpop.f32.mrb[0].mxu0
    %v806 = vadd.f32 0.0, %v805
    %v807 = vpop.f32.mrb[0].mxu0
    %808 = vmatprep.mubr.bf16.mxu0 0
    %809 = vmatmul.mubr.bf16.gmra.mrb[0].mxu0 %v674
    %v810 = vpop.f32.mrb[0].mxu0
    %v811 = vadd.f32 0.0, %v810
    %v812 = vpop.f32.mrb[0].mxu0
    %v813 = vpop.f32.mrb[0].mxu0
    %v814 = vadd.f32 0.0, %v813
    %v815 = vpop.f32.mrb[0].mxu0
    %816 = vmatprep.mubr.bf16.mxu0 0
    %817 = vmatmul.mubr.bf16.gmra.mrb[0].mxu0 %v677
    %v818 = vpop.f32.mrb[0].mxu0
    %v819 = vadd.f32 0.0, %v818
    %v820 = vpop.f32.mrb[0].mxu0
    %v821 = vpop.f32.mrb[0].mxu0
    %v822 = vadd.f32 0.0, %v821
    %v823 = vpop.f32.mrb[0].mxu0
    %824 = vmatprep.mubr.bf16.mxu0 0
    %825 = vmatmul.mubr.bf16.gmra.mrb[0].mxu0 %v680
    %v826 = vpop.f32.mrb[0].mxu0
    %v827 = vadd.f32 0.0, %v826
    %v828 = vpop.f32.mrb[0].mxu0
    %v829 = vpop.f32.mrb[0].mxu0
    %v830 = vadd.f32 0.0, %v829
    %v831 = vpop.f32.mrb[0].mxu0
    %832 = vmatprep.mubr.bf16.mxu0 0
    %833 = vmatmul.mubr.bf16.gmra.mrb[0].mxu0 %v683
    %v834 = vpop.f32.mrb[0].mxu0
    %v835 = vadd.f32 0.0, %v834
    %v836 = vpop.f32.mrb[0].mxu0
    %v837 = vpop.f32.mrb[0].mxu0
    %v838 = vadd.f32 0.0, %v837
    %v839 = vpop.f32.mrb[0].mxu0
    %840 = vmatprep.mubr.bf16.mxu0 0
    %841 = vmatmul.mubr.bf16.gmra.mrb[0].mxu0 %v686
    %v842 = vpop.f32.mrb[0].mxu0
    %v843 = vadd.f32 0.0, %v842
    %v844 = vpop.f32.mrb[0].mxu0
    %v845 = vpop.f32.mrb[0].mxu0
    %v846 = vadd.f32 0.0, %v845
    %v847 = vpop.f32.mrb[0].mxu0
    %848 = vdwg.mxu0
    %v850 = vsel %vm593, %v408, 0
    %v853 = vsel %vm593, %v409, 0
    %v856 = vsel %vm593, %v410, 0
    %v859 = vsel %vm593, %v411, 0
    %v862 = vsel %vm593, %v412, 0
    %v865 = vsel %vm593, %v413, 0
    %v868 = vsel %vm593, %v414, 0
    %v871 = vsel %vm593, %v415, 0
    %v874 = vsel %vm593, %v416, 0
    %v877 = vsel %vm593, %v417, 0
    %v880 = vsel %vm593, %v418, 0
    %v883 = vsel %vm593, %v419, 0
    %v886 = vsel %vm593, %v420, 0
    %v889 = vsel %vm593, %v421, 0
    %v892 = vsel %vm593, %v422, 0
    %v895 = vsel %vm593, %v423, 0
    %897 = vmatprep.subr.bf16.mxu0 0
    %898 = vmatpush1.bf16.msra.mxu0 %v639
    %899 = vmatprep.subr.bf16.mxu0 0
    %900 = vmatpush1.bf16.msra.mxu0 0
    %901 = vmatprep.subr.bf16.mxu0 0
    %902 = vmatpush1.bf16.msra.mxu0 0
    %903 = vmatprep.subr.bf16.mxu0 0
    %904 = vmatpush1.bf16.msra.mxu0 0
    %905 = vmatprep.subr.bf16.mxu0 0
    %906 = vmatpush1.bf16.msra.mxu0 0
    %907 = vmatprep.subr.bf16.mxu0 0
    %908 = vmatpush1.bf16.msra.mxu0 0
    %909 = vmatprep.subr.bf16.mxu0 0
    %910 = vmatpush1.bf16.msra.mxu0 0
    %911 = vmatprep.subr.bf16.mxu0 0
    %912 = vmatpush1.bf16.msra.mxu0 0
    %913 = vmatprep.subr.bf16.mxu0 0
    %914 = vmatpush1.bf16.msra.mxu0 0
    %915 = vmatprep.subr.bf16.mxu0 0
    %916 = vmatpush1.bf16.msra.mxu0 0
    %917 = vmatprep.subr.bf16.mxu0 0
    %918 = vmatpush1.bf16.msra.mxu0 0
    %919 = vmatprep.subr.bf16.mxu0 0
    %920 = vmatpush1.bf16.msra.mxu0 0
    %921 = vmatprep.subr.bf16.mxu0 0
    %922 = vmatpush1.bf16.msra.mxu0 0
    %923 = vmatprep.subr.bf16.mxu0 0
    %924 = vmatpush1.bf16.msra.mxu0 0
    %925 = vmatprep.subr.bf16.mxu0 0
    %926 = vmatpush1.bf16.msra.mxu0 0
    %927 = vmatprep.subr.bf16.mxu0 0
    %928 = vmatpush1.bf16.msra.mxu0 0
    %929 = vmatprep.mubr.bf16.mxu0 0
    %930 = vmatmul.mubr.bf16.gmra.mrb[0].mxu0 %v850
    %v931 = vpop.f32.mrb[0].mxu0
    %v932 = vadd.f32 0.0, %v931
    %v933 = vpop.f32.mrb[0].mxu0
    %v934 = vpop.f32.mrb[0].mxu0
    %v935 = vadd.f32 0.0, %v934
    %v936 = vpop.f32.mrb[0].mxu0
    %937 = vmatprep.mubr.bf16.mxu0 0
    %938 = vmatmul.mubr.bf16.gmra.mrb[0].mxu0 %v853
    %v939 = vpop.f32.mrb[0].mxu0
    %v940 = vadd.f32 0.0, %v939
    %v941 = vpop.f32.mrb[0].mxu0
    %v942 = vpop.f32.mrb[0].mxu0
    %v943 = vadd.f32 0.0, %v942
    %v944 = vpop.f32.mrb[0].mxu0
    %945 = vmatprep.mubr.bf16.mxu0 0
    %946 = vmatmul.mubr.bf16.gmra.mrb[0].mxu0 %v856
    %v947 = vpop.f32.mrb[0].mxu0
    %v948 = vadd.f32 0.0, %v947
    %v949 = vpop.f32.mrb[0].mxu0
    %v950 = vpop.f32.mrb[0].mxu0
    %v951 = vadd.f32 0.0, %v950
    %v952 = vpop.f32.mrb[0].mxu0
    %953 = vmatprep.mubr.bf16.mxu0 0
    %954 = vmatmul.mubr.bf16.gmra.mrb[0].mxu0 %v859
    %v955 = vpop.f32.mrb[0].mxu0
    %v956 = vadd.f32 0.0, %v955
    %v957 = vpop.f32.mrb[0].mxu0
    %v958 = vpop.f32.mrb[0].mxu0
    %v959 = vadd.f32 0.0, %v958
    %v960 = vpop.f32.mrb[0].mxu0
    %961 = vmatprep.mubr.bf16.mxu0 0
    %962 = vmatmul.mubr.bf16.gmra.mrb[0].mxu0 %v862
    %v963 = vpop.f32.mrb[0].mxu0
    %v964 = vadd.f32 0.0, %v963
    %v965 = vpop.f32.mrb[0].mxu0
    %v966 = vpop.f32.mrb[0].mxu0
    %v967 = vadd.f32 0.0, %v966
    %v968 = vpop.f32.mrb[0].mxu0
    %969 = vmatprep.mubr.bf16.mxu0 0
    %970 = vmatmul.mubr.bf16.gmra.mrb[0].mxu0 %v865
    %v971 = vpop.f32.mrb[0].mxu0
    %v972 = vadd.f32 0.0, %v971
    %v973 = vpop.f32.mrb[0].mxu0
    %v974 = vpop.f32.mrb[0].mxu0
    %v975 = vadd.f32 0.0, %v974
    %v976 = vpop.f32.mrb[0].mxu0
    %977 = vmatprep.mubr.bf16.mxu0 0
    %978 = vmatmul.mubr.bf16.gmra.mrb[0].mxu0 %v868
    %v979 = vpop.f32.mrb[0].mxu0
    %v980 = vadd.f32 0.0, %v979
    %v981 = vpop.f32.mrb[0].mxu0
    %v982 = vpop.f32.mrb[0].mxu0
    %v983 = vadd.f32 0.0, %v982
    %v984 = vpop.f32.mrb[0].mxu0
    %985 = vmatprep.mubr.bf16.mxu0 0
    %986 = vmatmul.mubr.bf16.gmra.mrb[0].mxu0 %v871
    %v987 = vpop.f32.mrb[0].mxu0
    %v988 = vadd.f32 0.0, %v987
    %v989 = vpop.f32.mrb[0].mxu0
    %v990 = vpop.f32.mrb[0].mxu0
    %v991 = vadd.f32 0.0, %v990
    %v992 = vpop.f32.mrb[0].mxu0
    %993 = vmatprep.mubr.bf16.mxu0 0
    %994 = vmatmul.mubr.bf16.gmra.mrb[0].mxu0 %v874
    %v995 = vpop.f32.mrb[0].mxu0
    %v996 = vadd.f32 0.0, %v995
    %v997 = vpop.f32.mrb[0].mxu0
    %v998 = vpop.f32.mrb[0].mxu0
    %v999 = vadd.f32 0.0, %v998
    %v1000 = vpop.f32.mrb[0].mxu0
    %1001 = vmatprep.mubr.bf16.mxu0 0
    %1002 = vmatmul.mubr.bf16.gmra.mrb[0].mxu0 %v877
    %v1003 = vpop.f32.mrb[0].mxu0
    %v1004 = vadd.f32 0.0, %v1003
    %v1005 = vpop.f32.mrb[0].mxu0
    %v1006 = vpop.f32.mrb[0].mxu0
    %v1007 = vadd.f32 0.0, %v1006
    %v1008 = vpop.f32.mrb[0].mxu0
    %1009 = vmatprep.mubr.bf16.mxu0 0
    %1010 = vmatmul.mubr.bf16.gmra.mrb[0].mxu0 %v880
    %v1011 = vpop.f32.mrb[0].mxu0
    %v1012 = vadd.f32 0.0, %v1011
    %v1013 = vpop.f32.mrb[0].mxu0
    %v1014 = vpop.f32.mrb[0].mxu0
    %v1015 = vadd.f32 0.0, %v1014
    %v1016 = vpop.f32.mrb[0].mxu0
    %1017 = vmatprep.mubr.bf16.mxu0 0
    %1018 = vmatmul.mubr.bf16.gmra.mrb[0].mxu0 %v883
    %v1019 = vpop.f32.mrb[0].mxu0
    %v1020 = vadd.f32 0.0, %v1019
    %v1021 = vpop.f32.mrb[0].mxu0
    %v1022 = vpop.f32.mrb[0].mxu0
    %v1023 = vadd.f32 0.0, %v1022
    %v1024 = vpop.f32.mrb[0].mxu0
    %1025 = vmatprep.mubr.bf16.mxu0 0
    %1026 = vmatmul.mubr.bf16.gmra.mrb[0].mxu0 %v886
    %v1027 = vpop.f32.mrb[0].mxu0
    %v1028 = vadd.f32 0.0, %v1027
    %v1029 = vpop.f32.mrb[0].mxu0
    %v1030 = vpop.f32.mrb[0].mxu0
    %v1031 = vadd.f32 0.0, %v1030
    %v1032 = vpop.f32.mrb[0].mxu0
    %1033 = vmatprep.mubr.bf16.mxu0 0
    %1034 = vmatmul.mubr.bf16.gmra.mrb[0].mxu0 %v889
    %v1035 = vpop.f32.mrb[0].mxu0
    %v1036 = vadd.f32 0.0, %v1035
    %v1037 = vpop.f32.mrb[0].mxu0
    %v1038 = vpop.f32.mrb[0].mxu0
    %v1039 = vadd.f32 0.0, %v1038
    %v1040 = vpop.f32.mrb[0].mxu0
    %1041 = vmatprep.mubr.bf16.mxu0 0
    %1042 = vmatmul.mubr.bf16.gmra.mrb[0].mxu0 %v892
    %v1043 = vpop.f32.mrb[0].mxu0
    %v1044 = vadd.f32 0.0, %v1043
    %v1045 = vpop.f32.mrb[0].mxu0
    %v1046 = vpop.f32.mrb[0].mxu0
    %v1047 = vadd.f32 0.0, %v1046
    %v1048 = vpop.f32.mrb[0].mxu0
    %1049 = vmatprep.mubr.bf16.mxu0 0
    %1050 = vmatmul.mubr.bf16.gmra.mrb[0].mxu0 %v895
    %v1051 = vpop.f32.mrb[0].mxu0
    %v1052 = vadd.f32 0.0, %v1051
    %v1053 = vpop.f32.mrb[0].mxu0
    %v1054 = vpop.f32.mrb[0].mxu0
    %v1055 = vadd.f32 0.0, %v1054
    %v1056 = vpop.f32.mrb[0].mxu0
    %1057 = vdwg.mxu0
    %v1058 = vpack.c.bf16 %v726, %v723
    %v1059 = vpack.c.bf16 %v734, %v731
    %v1060 = vpack.c.bf16 %v742, %v739
    %v1061 = vpack.c.bf16 %v750, %v747
    %v1062 = vpack.c.bf16 %v758, %v755
    %v1063 = vpack.c.bf16 %v766, %v763
    %v1064 = vpack.c.bf16 %v774, %v771
    %v1065 = vpack.c.bf16 %v782, %v779
    %v1066 = vpack.c.bf16 %v790, %v787
    %v1067 = vpack.c.bf16 %v798, %v795
    %v1068 = vpack.c.bf16 %v806, %v803
    %v1069 = vpack.c.bf16 %v814, %v811
    %v1070 = vpack.c.bf16 %v822, %v819
    %v1071 = vpack.c.bf16 %v830, %v827
    %v1072 = vpack.c.bf16 %v838, %v835
    %v1073 = vpack.c.bf16 %v846, %v843
    %v1074 = vpack.c.bf16 %v935, %v932
    %v1075 = vpack.c.bf16 %v943, %v940
    %v1076 = vpack.c.bf16 %v951, %v948
    %v1077 = vpack.c.bf16 %v959, %v956
    %v1078 = vpack.c.bf16 %v967, %v964
    %v1079 = vpack.c.bf16 %v975, %v972
    %v1080 = vpack.c.bf16 %v983, %v980
    %v1081 = vpack.c.bf16 %v991, %v988
    %v1082 = vpack.c.bf16 %v999, %v996
    %v1083 = vpack.c.bf16 %v1007, %v1004
    %v1084 = vpack.c.bf16 %v1015, %v1012
    %v1085 = vpack.c.bf16 %v1023, %v1020
    %v1086 = vpack.c.bf16 %v1031, %v1028
    %v1087 = vpack.c.bf16 %v1039, %v1036
    %v1088 = vpack.c.bf16 %v1047, %v1044
    %v1089 = vpack.c.bf16 %v1055, %v1052
    %v1090 = vld [vmem:[%s2] sm:$0xf]
    %v1091 = vld [vmem:[%s2 + $0x4] sm:$0xf]
    %v1094 = vunpack.c.l.b16 %v1090
    %v1095 = vunpack.c.l.b16 %v1091
    %v1096 = vpack.c.b16 %v1095, %v1094
    %v1099 = vsel %vm593, %v1058, 0
    %v1102 = vsel %vm593, %v1059, 0
    %v1105 = vsel %vm593, %v1060, 0
    %v1108 = vsel %vm593, %v1061, 0
    %v1111 = vsel %vm593, %v1062, 0
    %v1114 = vsel %vm593, %v1063, 0
    %v1117 = vsel %vm593, %v1064, 0
    %v1120 = vsel %vm593, %v1065, 0
    %v1123 = vsel %vm593, %v1066, 0
    %v1126 = vsel %vm593, %v1067, 0
    %v1129 = vsel %vm593, %v1068, 0
    %v1132 = vsel %vm593, %v1069, 0
    %v1135 = vsel %vm593, %v1070, 0
    %v1138 = vsel %vm593, %v1071, 0
    %v1141 = vsel %vm593, %v1072, 0
    %v1144 = vsel %vm593, %v1073, 0
    %v1147 = vsel %vm593, %v1074, 0
    %v1150 = vsel %vm593, %v1075, 0
    %v1153 = vsel %vm593, %v1076, 0
    %v1156 = vsel %vm593, %v1077, 0
    %v1159 = vsel %vm593, %v1078, 0
    %v1162 = vsel %vm593, %v1079, 0
    %v1165 = vsel %vm593, %v1080, 0
    %v1168 = vsel %vm593, %v1081, 0
    %v1171 = vsel %vm593, %v1082, 0
    %v1174 = vsel %vm593, %v1083, 0
    %v1177 = vsel %vm593, %v1084, 0
    %v1180 = vsel %vm593, %v1085, 0
    %v1183 = vsel %vm593, %v1086, 0
    %v1186 = vsel %vm593, %v1087, 0
    %v1189 = vsel %vm593, %v1088, 0
    %v1192 = vsel %vm593, %v1089, 0
    %1194 = vmatprep.subr.bf16.mxu0 0
    %1195 = vmatpush1.bf16.msra.mxu0 %v1096
    %1196 = vmatprep.subr.bf16.mxu0 0
    %1197 = vmatpush1.bf16.msra.mxu0 0
    %1198 = vmatprep.subr.bf16.mxu0 0
    %1199 = vmatpush1.bf16.msra.mxu0 0
    %1200 = vmatprep.subr.bf16.mxu0 0
    %1201 = vmatpush1.bf16.msra.mxu0 0
    %1202 = vmatprep.subr.bf16.mxu0 0
    %1203 = vmatpush1.bf16.msra.mxu0 0
    %1204 = vmatprep.subr.bf16.mxu0 0
    %1205 = vmatpush1.bf16.msra.mxu0 0
    %1206 = vmatprep.subr.bf16.mxu0 0
    %1207 = vmatpush1.bf16.msra.mxu0 0
    %1208 = vmatprep.subr.bf16.mxu0 0
    %1209 = vmatpush1.bf16.msra.mxu0 0
    %1210 = vmatprep.subr.bf16.mxu0 0
    %1211 = vmatpush1.bf16.msra.mxu0 0
    %1212 = vmatprep.subr.bf16.mxu0 0
    %1213 = vmatpush1.bf16.msra.mxu0 0
    %1214 = vmatprep.subr.bf16.mxu0 0
    %1215 = vmatpush1.bf16.msra.mxu0 0
    %1216 = vmatprep.subr.bf16.mxu0 0
    %1217 = vmatpush1.bf16.msra.mxu0 0
    %1218 = vmatprep.subr.bf16.mxu0 0
    %1219 = vmatpush1.bf16.msra.mxu0 0
    %1220 = vmatprep.subr.bf16.mxu0 0
    %1221 = vmatpush1.bf16.msra.mxu0 0
    %1222 = vmatprep.subr.bf16.mxu0 0
    %1223 = vmatpush1.bf16.msra.mxu0 0
    %1224 = vmatprep.subr.bf16.mxu0 0
    %1225 = vmatpush1.bf16.msra.mxu0 0
    %1226 = vmatprep.mubr.bf16.mxu0 0
    %1227 = vmatmul.mubr.bf16.gmra.mrb[0].mxu0 %v1099
    %v1228 = vpop.f32.mrb[0].mxu0
    %v1229 = vadd.f32 0.0, %v1228
    %v1230 = vpop.f32.mrb[0].mxu0
    %v1231 = vpop.f32.mrb[0].mxu0
    %v1232 = vadd.f32 0.0, %v1231
    %v1233 = vpop.f32.mrb[0].mxu0
    %1234 = vmatprep.mubr.bf16.mxu0 0
    %1235 = vmatmul.mubr.bf16.gmra.mrb[0].mxu0 %v1102
    %v1236 = vpop.f32.mrb[0].mxu0
    %v1237 = vadd.f32 0.0, %v1236
    %v1238 = vpop.f32.mrb[0].mxu0
    %v1239 = vpop.f32.mrb[0].mxu0
    %v1240 = vadd.f32 0.0, %v1239
    %v1241 = vpop.f32.mrb[0].mxu0
    %1242 = vmatprep.mubr.bf16.mxu0 0
    %1243 = vmatmul.mubr.bf16.gmra.mrb[0].mxu0 %v1105
    %v1244 = vpop.f32.mrb[0].mxu0
    %v1245 = vadd.f32 0.0, %v1244
    %v1246 = vpop.f32.mrb[0].mxu0
    %v1247 = vpop.f32.mrb[0].mxu0
    %v1248 = vadd.f32 0.0, %v1247
    %v1249 = vpop.f32.mrb[0].mxu0
    %1250 = vmatprep.mubr.bf16.mxu0 0
    %1251 = vmatmul.mubr.bf16.gmra.mrb[0].mxu0 %v1108
    %v1252 = vpop.f32.mrb[0].mxu0
    %v1253 = vadd.f32 0.0, %v1252
    %v1254 = vpop.f32.mrb[0].mxu0
    %v1255 = vpop.f32.mrb[0].mxu0
    %v1256 = vadd.f32 0.0, %v1255
    %v1257 = vpop.f32.mrb[0].mxu0
    %1258 = vmatprep.mubr.bf16.mxu0 0
    %1259 = vmatmul.mubr.bf16.gmra.mrb[0].mxu0 %v1111
    %v1260 = vpop.f32.mrb[0].mxu0
    %v1261 = vadd.f32 0.0, %v1260
    %v1262 = vpop.f32.mrb[0].mxu0
    %v1263 = vpop.f32.mrb[0].mxu0
    %v1264 = vadd.f32 0.0, %v1263
    %v1265 = vpop.f32.mrb[0].mxu0
    %1266 = vmatprep.mubr.bf16.mxu0 0
    %1267 = vmatmul.mubr.bf16.gmra.mrb[0].mxu0 %v1114
    %v1268 = vpop.f32.mrb[0].mxu0
    %v1269 = vadd.f32 0.0, %v1268
    %v1270 = vpop.f32.mrb[0].mxu0
    %v1271 = vpop.f32.mrb[0].mxu0
    %v1272 = vadd.f32 0.0, %v1271
    %v1273 = vpop.f32.mrb[0].mxu0
    %1274 = vmatprep.mubr.bf16.mxu0 0
    %1275 = vmatmul.mubr.bf16.gmra.mrb[0].mxu0 %v1117
    %v1276 = vpop.f32.mrb[0].mxu0
    %v1277 = vadd.f32 0.0, %v1276
    %v1278 = vpop.f32.mrb[0].mxu0
    %v1279 = vpop.f32.mrb[0].mxu0
    %v1280 = vadd.f32 0.0, %v1279
    %v1281 = vpop.f32.mrb[0].mxu0
    %1282 = vmatprep.mubr.bf16.mxu0 0
    %1283 = vmatmul.mubr.bf16.gmra.mrb[0].mxu0 %v1120
    %v1284 = vpop.f32.mrb[0].mxu0
    %v1285 = vadd.f32 0.0, %v1284
    %v1286 = vpop.f32.mrb[0].mxu0
    %v1287 = vpop.f32.mrb[0].mxu0
    %v1288 = vadd.f32 0.0, %v1287
    %v1289 = vpop.f32.mrb[0].mxu0
    %1290 = vmatprep.mubr.bf16.mxu0 0
    %1291 = vmatmul.mubr.bf16.gmra.mrb[0].mxu0 %v1123
    %v1292 = vpop.f32.mrb[0].mxu0
    %v1293 = vadd.f32 0.0, %v1292
    %v1294 = vpop.f32.mrb[0].mxu0
    %v1295 = vpop.f32.mrb[0].mxu0
    %v1296 = vadd.f32 0.0, %v1295
    %v1297 = vpop.f32.mrb[0].mxu0
    %1298 = vmatprep.mubr.bf16.mxu0 0
    %1299 = vmatmul.mubr.bf16.gmra.mrb[0].mxu0 %v1126
    %v1300 = vpop.f32.mrb[0].mxu0
    %v1301 = vadd.f32 0.0, %v1300
    %v1302 = vpop.f32.mrb[0].mxu0
    %v1303 = vpop.f32.mrb[0].mxu0
    %v1304 = vadd.f32 0.0, %v1303
    %v1305 = vpop.f32.mrb[0].mxu0
    %1306 = vmatprep.mubr.bf16.mxu0 0
    %1307 = vmatmul.mubr.bf16.gmra.mrb[0].mxu0 %v1129
    %v1308 = vpop.f32.mrb[0].mxu0
    %v1309 = vadd.f32 0.0, %v1308
    %v1310 = vpop.f32.mrb[0].mxu0
    %v1311 = vpop.f32.mrb[0].mxu0
    %v1312 = vadd.f32 0.0, %v1311
    %v1313 = vpop.f32.mrb[0].mxu0
    %1314 = vmatprep.mubr.bf16.mxu0 0
    %1315 = vmatmul.mubr.bf16.gmra.mrb[0].mxu0 %v1132
    %v1316 = vpop.f32.mrb[0].mxu0
    %v1317 = vadd.f32 0.0, %v1316
    %v1318 = vpop.f32.mrb[0].mxu0
    %v1319 = vpop.f32.mrb[0].mxu0
    %v1320 = vadd.f32 0.0, %v1319
    %v1321 = vpop.f32.mrb[0].mxu0
    %1322 = vmatprep.mubr.bf16.mxu0 0
    %1323 = vmatmul.mubr.bf16.gmra.mrb[0].mxu0 %v1135
    %v1324 = vpop.f32.mrb[0].mxu0
    %v1325 = vadd.f32 0.0, %v1324
    %v1326 = vpop.f32.mrb[0].mxu0
    %v1327 = vpop.f32.mrb[0].mxu0
    %v1328 = vadd.f32 0.0, %v1327
    %v1329 = vpop.f32.mrb[0].mxu0
    %1330 = vmatprep.mubr.bf16.mxu0 0
    %1331 = vmatmul.mubr.bf16.gmra.mrb[0].mxu0 %v1138
    %v1332 = vpop.f32.mrb[0].mxu0
    %v1333 = vadd.f32 0.0, %v1332
    %v1334 = vpop.f32.mrb[0].mxu0
    %v1335 = vpop.f32.mrb[0].mxu0
    %v1336 = vadd.f32 0.0, %v1335
    %v1337 = vpop.f32.mrb[0].mxu0
    %1338 = vmatprep.mubr.bf16.mxu0 0
    %1339 = vmatmul.mubr.bf16.gmra.mrb[0].mxu0 %v1141
    %v1340 = vpop.f32.mrb[0].mxu0
    %v1341 = vadd.f32 0.0, %v1340
    %v1342 = vpop.f32.mrb[0].mxu0
    %v1343 = vpop.f32.mrb[0].mxu0
    %v1344 = vadd.f32 0.0, %v1343
    %v1345 = vpop.f32.mrb[0].mxu0
    %1346 = vmatprep.mubr.bf16.mxu0 0
    %1347 = vmatmul.mubr.bf16.gmra.mrb[0].mxu0 %v1144
    %v1348 = vpop.f32.mrb[0].mxu0
    %v1349 = vadd.f32 0.0, %v1348
    %v1350 = vpop.f32.mrb[0].mxu0
    %v1351 = vpop.f32.mrb[0].mxu0
    %v1352 = vadd.f32 0.0, %v1351
    %v1353 = vpop.f32.mrb[0].mxu0
    %1354 = vmatprep.mubr.bf16.mxu0 0
    %1355 = vmatmul.mubr.bf16.gmra.mrb[0].mxu0 %v1147
    %v1356 = vpop.f32.mrb[0].mxu0
    %v1357 = vadd.f32 0.0, %v1356
    %v1358 = vpop.f32.mrb[0].mxu0
    %v1359 = vpop.f32.mrb[0].mxu0
    %v1360 = vadd.f32 0.0, %v1359
    %v1361 = vpop.f32.mrb[0].mxu0
    %1362 = vmatprep.mubr.bf16.mxu0 0
    %1363 = vmatmul.mubr.bf16.gmra.mrb[0].mxu0 %v1150
    %v1364 = vpop.f32.mrb[0].mxu0
    %v1365 = vadd.f32 0.0, %v1364
    %v1366 = vpop.f32.mrb[0].mxu0
    %v1367 = vpop.f32.mrb[0].mxu0
    %v1368 = vadd.f32 0.0, %v1367
    %v1369 = vpop.f32.mrb[0].mxu0
    %1370 = vmatprep.mubr.bf16.mxu0 0
    %1371 = vmatmul.mubr.bf16.gmra.mrb[0].mxu0 %v1153
    %v1372 = vpop.f32.mrb[0].mxu0
    %v1373 = vadd.f32 0.0, %v1372
    %v1374 = vpop.f32.mrb[0].mxu0
    %v1375 = vpop.f32.mrb[0].mxu0
    %v1376 = vadd.f32 0.0, %v1375
    %v1377 = vpop.f32.mrb[0].mxu0
    %1378 = vmatprep.mubr.bf16.mxu0 0
    %1379 = vmatmul.mubr.bf16.gmra.mrb[0].mxu0 %v1156
    %v1380 = vpop.f32.mrb[0].mxu0
    %v1381 = vadd.f32 0.0, %v1380
    %v1382 = vpop.f32.mrb[0].mxu0
    %v1383 = vpop.f32.mrb[0].mxu0
    %v1384 = vadd.f32 0.0, %v1383
    %v1385 = vpop.f32.mrb[0].mxu0
    %1386 = vmatprep.mubr.bf16.mxu0 0
    %1387 = vmatmul.mubr.bf16.gmra.mrb[0].mxu0 %v1159
    %v1388 = vpop.f32.mrb[0].mxu0
    %v1389 = vadd.f32 0.0, %v1388
    %v1390 = vpop.f32.mrb[0].mxu0
    %v1391 = vpop.f32.mrb[0].mxu0
    %v1392 = vadd.f32 0.0, %v1391
    %v1393 = vpop.f32.mrb[0].mxu0
    %1394 = vmatprep.mubr.bf16.mxu0 0
    %1395 = vmatmul.mubr.bf16.gmra.mrb[0].mxu0 %v1162
    %v1396 = vpop.f32.mrb[0].mxu0
    %v1397 = vadd.f32 0.0, %v1396
    %v1398 = vpop.f32.mrb[0].mxu0
    %v1399 = vpop.f32.mrb[0].mxu0
    %v1400 = vadd.f32 0.0, %v1399
    %v1401 = vpop.f32.mrb[0].mxu0
    %1402 = vmatprep.mubr.bf16.mxu0 0
    %1403 = vmatmul.mubr.bf16.gmra.mrb[0].mxu0 %v1165
    %v1404 = vpop.f32.mrb[0].mxu0
    %v1405 = vadd.f32 0.0, %v1404
    %v1406 = vpop.f32.mrb[0].mxu0
    %v1407 = vpop.f32.mrb[0].mxu0
    %v1408 = vadd.f32 0.0, %v1407
    %v1409 = vpop.f32.mrb[0].mxu0
    %1410 = vmatprep.mubr.bf16.mxu0 0
    %1411 = vmatmul.mubr.bf16.gmra.mrb[0].mxu0 %v1168
    %v1412 = vpop.f32.mrb[0].mxu0
    %v1413 = vadd.f32 0.0, %v1412
    %v1414 = vpop.f32.mrb[0].mxu0
    %v1415 = vpop.f32.mrb[0].mxu0
    %v1416 = vadd.f32 0.0, %v1415
    %v1417 = vpop.f32.mrb[0].mxu0
    %1418 = vmatprep.mubr.bf16.mxu0 0
    %1419 = vmatmul.mubr.bf16.gmra.mrb[0].mxu0 %v1171
    %v1420 = vpop.f32.mrb[0].mxu0
    %v1421 = vadd.f32 0.0, %v1420
    %v1422 = vpop.f32.mrb[0].mxu0
    %v1423 = vpop.f32.mrb[0].mxu0
    %v1424 = vadd.f32 0.0, %v1423
    %v1425 = vpop.f32.mrb[0].mxu0
    %1426 = vmatprep.mubr.bf16.mxu0 0
    %1427 = vmatmul.mubr.bf16.gmra.mrb[0].mxu0 %v1174
    %v1428 = vpop.f32.mrb[0].mxu0
    %v1429 = vadd.f32 0.0, %v1428
    %v1430 = vpop.f32.mrb[0].mxu0
    %v1431 = vpop.f32.mrb[0].mxu0
    %v1432 = vadd.f32 0.0, %v1431
    %v1433 = vpop.f32.mrb[0].mxu0
    %1434 = vmatprep.mubr.bf16.mxu0 0
    %1435 = vmatmul.mubr.bf16.gmra.mrb[0].mxu0 %v1177
    %v1436 = vpop.f32.mrb[0].mxu0
    %v1437 = vadd.f32 0.0, %v1436
    %v1438 = vpop.f32.mrb[0].mxu0
    %v1439 = vpop.f32.mrb[0].mxu0
    %v1440 = vadd.f32 0.0, %v1439
    %v1441 = vpop.f32.mrb[0].mxu0
    %1442 = vmatprep.mubr.bf16.mxu0 0
    %1443 = vmatmul.mubr.bf16.gmra.mrb[0].mxu0 %v1180
    %v1444 = vpop.f32.mrb[0].mxu0
    %v1445 = vadd.f32 0.0, %v1444
    %v1446 = vpop.f32.mrb[0].mxu0
    %v1447 = vpop.f32.mrb[0].mxu0
    %v1448 = vadd.f32 0.0, %v1447
    %v1449 = vpop.f32.mrb[0].mxu0
    %1450 = vmatprep.mubr.bf16.mxu0 0
    %1451 = vmatmul.mubr.bf16.gmra.mrb[0].mxu0 %v1183
    %v1452 = vpop.f32.mrb[0].mxu0
    %v1453 = vadd.f32 0.0, %v1452
    %v1454 = vpop.f32.mrb[0].mxu0
    %v1455 = vpop.f32.mrb[0].mxu0
    %v1456 = vadd.f32 0.0, %v1455
    %v1457 = vpop.f32.mrb[0].mxu0
    %1458 = vmatprep.mubr.bf16.mxu0 0
    %1459 = vmatmul.mubr.bf16.gmra.mrb[0].mxu0 %v1186
    %v1460 = vpop.f32.mrb[0].mxu0
    %v1461 = vadd.f32 0.0, %v1460
    %v1462 = vpop.f32.mrb[0].mxu0
    %v1463 = vpop.f32.mrb[0].mxu0
    %v1464 = vadd.f32 0.0, %v1463
    %v1465 = vpop.f32.mrb[0].mxu0
    %1466 = vmatprep.mubr.bf16.mxu0 0
    %1467 = vmatmul.mubr.bf16.gmra.mrb[0].mxu0 %v1189
    %v1468 = vpop.f32.mrb[0].mxu0
    %v1469 = vadd.f32 0.0, %v1468
    %v1470 = vpop.f32.mrb[0].mxu0
    %v1471 = vpop.f32.mrb[0].mxu0
    %v1472 = vadd.f32 0.0, %v1471
    %v1473 = vpop.f32.mrb[0].mxu0
    %1474 = vmatprep.mubr.bf16.mxu0 0
    %1475 = vmatmul.mubr.bf16.gmra.mrb[0].mxu0 %v1192
    %v1476 = vpop.f32.mrb[0].mxu0
    %v1477 = vadd.f32 0.0, %v1476
    %v1478 = vpop.f32.mrb[0].mxu0
    %v1479 = vpop.f32.mrb[0].mxu0
    %v1480 = vadd.f32 0.0, %v1479
    %v1481 = vpop.f32.mrb[0].mxu0
    %1482 = vdwg.mxu0
    %v1483 = vld [vmem:[%s3] sm:$0x1]
    %v1485 = vlaneseq
    %v1486 = vshrl.u32 %v1485, 7
    %v1487 = vsub.s32 0, %v1486
    %v1488 = vrot.slane %v1483, %v1487
    %v1490 = vmul.f32 %v1229, %v1488
    %v1491 = vmul.f32 %v1232, %v1488
    %v1492 = vmul.f32 %v1237, %v1488
    %v1493 = vmul.f32 %v1240, %v1488
    %v1494 = vmul.f32 %v1245, %v1488
    %v1495 = vmul.f32 %v1248, %v1488
    %v1496 = vmul.f32 %v1253, %v1488
    %v1497 = vmul.f32 %v1256, %v1488
    %v1498 = vmul.f32 %v1261, %v1488
    %v1499 = vmul.f32 %v1264, %v1488
    %v1500 = vmul.f32 %v1269, %v1488
    %v1501 = vmul.f32 %v1272, %v1488
    %v1502 = vmul.f32 %v1277, %v1488
    %v1503 = vmul.f32 %v1280, %v1488
    %v1504 = vmul.f32 %v1285, %v1488
    %v1505 = vmul.f32 %v1288, %v1488
    %v1506 = vmul.f32 %v1293, %v1488
    %v1507 = vmul.f32 %v1296, %v1488
    %v1508 = vmul.f32 %v1301, %v1488
    %v1509 = vmul.f32 %v1304, %v1488
    %v1510 = vmul.f32 %v1309, %v1488
    %v1511 = vmul.f32 %v1312, %v1488
    %v1512 = vmul.f32 %v1317, %v1488
    %v1513 = vmul.f32 %v1320, %v1488
    %v1514 = vmul.f32 %v1325, %v1488
    %v1515 = vmul.f32 %v1328, %v1488
    %v1516 = vmul.f32 %v1333, %v1488
    %v1517 = vmul.f32 %v1336, %v1488
    %v1518 = vmul.f32 %v1341, %v1488
    %v1519 = vmul.f32 %v1344, %v1488
    %v1520 = vmul.f32 %v1349, %v1488
    %v1521 = vmul.f32 %v1352, %v1488
    %v1522 = vmul.f32 %v1357, %v1488
    %v1523 = vmul.f32 %v1360, %v1488
    %v1524 = vmul.f32 %v1365, %v1488
    %v1525 = vmul.f32 %v1368, %v1488
    %v1526 = vmul.f32 %v1373, %v1488
    %v1527 = vmul.f32 %v1376, %v1488
    %v1528 = vmul.f32 %v1381, %v1488
    %v1529 = vmul.f32 %v1384, %v1488
    %v1530 = vmul.f32 %v1389, %v1488
    %v1531 = vmul.f32 %v1392, %v1488
    %v1532 = vmul.f32 %v1397, %v1488
    %v1533 = vmul.f32 %v1400, %v1488
    %v1534 = vmul.f32 %v1405, %v1488
    %v1535 = vmul.f32 %v1408, %v1488
    %v1536 = vmul.f32 %v1413, %v1488
    %v1537 = vmul.f32 %v1416, %v1488
    %v1538 = vmul.f32 %v1421, %v1488
    %v1539 = vmul.f32 %v1424, %v1488
    %v1540 = vmul.f32 %v1429, %v1488
    %v1541 = vmul.f32 %v1432, %v1488
    %v1542 = vmul.f32 %v1437, %v1488
    %v1543 = vmul.f32 %v1440, %v1488
    %v1544 = vmul.f32 %v1445, %v1488
    %v1545 = vmul.f32 %v1448, %v1488
    %v1546 = vmul.f32 %v1453, %v1488
    %v1547 = vmul.f32 %v1456, %v1488
    %v1548 = vmul.f32 %v1461, %v1488
    %v1549 = vmul.f32 %v1464, %v1488
    %v1550 = vmul.f32 %v1469, %v1488
    %v1551 = vmul.f32 %v1472, %v1488
    %v1552 = vmul.f32 %v1477, %v1488
    %v1553 = vmul.f32 %v1480, %v1488
    %v1554 = vld [vmem:[%s4] sm:$0x1]
    %v1556 = vlaneseq
    %v1557 = vshrl.u32 %v1556, 7
    %v1558 = vsub.s32 0, %v1557
    %v1559 = vrot.slane %v1554, %v1558
    %v1561 = vadd.f32 %v1490, %v1559
    %v1562 = vadd.f32 %v1491, %v1559
    %v1563 = vadd.f32 %v1492, %v1559
    %v1564 = vadd.f32 %v1493, %v1559
    %v1565 = vadd.f32 %v1494, %v1559
    %v1566 = vadd.f32 %v1495, %v1559
    %v1567 = vadd.f32 %v1496, %v1559
    %v1568 = vadd.f32 %v1497, %v1559
    %v1569 = vadd.f32 %v1498, %v1559
    %v1570 = vadd.f32 %v1499, %v1559
    %v1571 = vadd.f32 %v1500, %v1559
    %v1572 = vadd.f32 %v1501, %v1559
    %v1573 = vadd.f32 %v1502, %v1559
    %v1574 = vadd.f32 %v1503, %v1559
    %v1575 = vadd.f32 %v1504, %v1559
    %v1576 = vadd.f32 %v1505, %v1559
    %v1577 = vadd.f32 %v1506, %v1559
    %v1578 = vadd.f32 %v1507, %v1559
    %v1579 = vadd.f32 %v1508, %v1559
    %v1580 = vadd.f32 %v1509, %v1559
    %v1581 = vadd.f32 %v1510, %v1559
    %v1582 = vadd.f32 %v1511, %v1559
    %v1583 = vadd.f32 %v1512, %v1559
    %v1584 = vadd.f32 %v1513, %v1559
    %v1585 = vadd.f32 %v1514, %v1559
    %v1586 = vadd.f32 %v1515, %v1559
    %v1587 = vadd.f32 %v1516, %v1559
    %v1588 = vadd.f32 %v1517, %v1559
    %v1589 = vadd.f32 %v1518, %v1559
    %v1590 = vadd.f32 %v1519, %v1559
    %v1591 = vadd.f32 %v1520, %v1559
    %v1592 = vadd.f32 %v1521, %v1559
    %v1593 = vadd.f32 %v1522, %v1559
    %v1594 = vadd.f32 %v1523, %v1559
    %v1595 = vadd.f32 %v1524, %v1559
    %v1596 = vadd.f32 %v1525, %v1559
    %v1597 = vadd.f32 %v1526, %v1559
    %v1598 = vadd.f32 %v1527, %v1559
    %v1599 = vadd.f32 %v1528, %v1559
    %v1600 = vadd.f32 %v1529, %v1559
    %v1601 = vadd.f32 %v1530, %v1559
    %v1602 = vadd.f32 %v1531, %v1559
    %v1603 = vadd.f32 %v1532, %v1559
    %v1604 = vadd.f32 %v1533, %v1559
    %v1605 = vadd.f32 %v1534, %v1559
    %v1606 = vadd.f32 %v1535, %v1559
    %v1607 = vadd.f32 %v1536, %v1559
    %v1608 = vadd.f32 %v1537, %v1559
    %v1609 = vadd.f32 %v1538, %v1559
    %v1610 = vadd.f32 %v1539, %v1559
    %v1611 = vadd.f32 %v1540, %v1559
    %v1612 = vadd.f32 %v1541, %v1559
    %v1613 = vadd.f32 %v1542, %v1559
    %v1614 = vadd.f32 %v1543, %v1559
    %v1615 = vadd.f32 %v1544, %v1559
    %v1616 = vadd.f32 %v1545, %v1559
    %v1617 = vadd.f32 %v1546, %v1559
    %v1618 = vadd.f32 %v1547, %v1559
    %v1619 = vadd.f32 %v1548, %v1559
    %v1620 = vadd.f32 %v1549, %v1559
    %v1621 = vadd.f32 %v1550, %v1559
    %v1622 = vadd.f32 %v1551, %v1559
    %v1623 = vadd.f32 %v1552, %v1559
    %v1624 = vadd.f32 %v1553, %v1559
    %v1625 = vpack.c.bf16 %v1562, %v1561
    %v1626 = vpack.c.bf16 %v1564, %v1563
    %v1627 = vpack.c.bf16 %v1566, %v1565
    %v1628 = vpack.c.bf16 %v1568, %v1567
    %v1629 = vpack.c.bf16 %v1570, %v1569
    %v1630 = vpack.c.bf16 %v1572, %v1571
    %v1631 = vpack.c.bf16 %v1574, %v1573
    %v1632 = vpack.c.bf16 %v1576, %v1575
    %v1633 = vpack.c.bf16 %v1578, %v1577
    %v1634 = vpack.c.bf16 %v1580, %v1579
    %v1635 = vpack.c.bf16 %v1582, %v1581
    %v1636 = vpack.c.bf16 %v1584, %v1583
    %v1637 = vpack.c.bf16 %v1586, %v1585
    %v1638 = vpack.c.bf16 %v1588, %v1587
    %v1639 = vpack.c.bf16 %v1590, %v1589
    %v1640 = vpack.c.bf16 %v1592, %v1591
    %v1641 = vpack.c.bf16 %v1594, %v1593
    %v1642 = vpack.c.bf16 %v1596, %v1595
    %v1643 = vpack.c.bf16 %v1598, %v1597
    %v1644 = vpack.c.bf16 %v1600, %v1599
    %v1645 = vpack.c.bf16 %v1602, %v1601
    %v1646 = vpack.c.bf16 %v1604, %v1603
    %v1647 = vpack.c.bf16 %v1606, %v1605
    %v1648 = vpack.c.bf16 %v1608, %v1607
    %v1649 = vpack.c.bf16 %v1610, %v1609
    %v1650 = vpack.c.bf16 %v1612, %v1611
    %v1651 = vpack.c.bf16 %v1614, %v1613
    %v1652 = vpack.c.bf16 %v1616, %v1615
    %v1653 = vpack.c.bf16 %v1618, %v1617
    %v1654 = vpack.c.bf16 %v1620, %v1619
    %v1655 = vpack.c.bf16 %v1622, %v1621
    %v1656 = vpack.c.bf16 %v1624, %v1623
    %v1657 = vld [vmem:[%s5] sm:$0xf]
    %v1658 = vld [vmem:[%s5 + $0x4] sm:$0xf]
    %v1661 = vunpack.c.l.b16 %v1657
    %v1662 = vunpack.c.l.b16 %v1658
    %v1663 = vpack.c.b16 %v1662, %v1661
    %v1666 = vsel %vm593, %v1625, 0
    %v1669 = vsel %vm593, %v1626, 0
    %v1672 = vsel %vm593, %v1627, 0
    %v1675 = vsel %vm593, %v1628, 0
    %v1678 = vsel %vm593, %v1629, 0
    %v1681 = vsel %vm593, %v1630, 0
    %v1684 = vsel %vm593, %v1631, 0
    %v1687 = vsel %vm593, %v1632, 0
    %v1690 = vsel %vm593, %v1633, 0
    %v1693 = vsel %vm593, %v1634, 0
    %v1696 = vsel %vm593, %v1635, 0
    %v1699 = vsel %vm593, %v1636, 0
    %v1702 = vsel %vm593, %v1637, 0
    %v1705 = vsel %vm593, %v1638, 0
    %v1708 = vsel %vm593, %v1639, 0
    %v1711 = vsel %vm593, %v1640, 0
    %v1714 = vsel %vm593, %v1641, 0
    %v1717 = vsel %vm593, %v1642, 0
    %v1720 = vsel %vm593, %v1643, 0
    %v1723 = vsel %vm593, %v1644, 0
    %v1726 = vsel %vm593, %v1645, 0
    %v1729 = vsel %vm593, %v1646, 0
    %v1732 = vsel %vm593, %v1647, 0
    %v1735 = vsel %vm593, %v1648, 0
    %v1738 = vsel %vm593, %v1649, 0
    %v1741 = vsel %vm593, %v1650, 0
    %v1744 = vsel %vm593, %v1651, 0
    %v1747 = vsel %vm593, %v1652, 0
    %v1750 = vsel %vm593, %v1653, 0
    %v1753 = vsel %vm593, %v1654, 0
    %v1756 = vsel %vm593, %v1655, 0
    %v1759 = vsel %vm593, %v1656, 0
    %1761 = vmatprep.subr.bf16.mxu0 0
    %1762 = vmatpush1.bf16.msra.mxu0 %v1663
    %1763 = vmatprep.subr.bf16.mxu0 0
    %1764 = vmatpush1.bf16.msra.mxu0 0
    %1765 = vmatprep.subr.bf16.mxu0 0
    %1766 = vmatpush1.bf16.msra.mxu0 0
    %1767 = vmatprep.subr.bf16.mxu0 0
    %1768 = vmatpush1.bf16.msra.mxu0 0
    %1769 = vmatprep.subr.bf16.mxu0 0
    %1770 = vmatpush1.bf16.msra.mxu0 0
    %1771 = vmatprep.subr.bf16.mxu0 0
    %1772 = vmatpush1.bf16.msra.mxu0 0
    %1773 = vmatprep.subr.bf16.mxu0 0
    %1774 = vmatpush1.bf16.msra.mxu0 0
    %1775 = vmatprep.subr.bf16.mxu0 0
    %1776 = vmatpush1.bf16.msra.mxu0 0
    %1777 = vmatprep.subr.bf16.mxu0 0
    %1778 = vmatpush1.bf16.msra.mxu0 0
    %1779 = vmatprep.subr.bf16.mxu0 0
    %1780 = vmatpush1.bf16.msra.mxu0 0
    %1781 = vmatprep.subr.bf16.mxu0 0
    %1782 = vmatpush1.bf16.msra.mxu0 0
    %1783 = vmatprep.subr.bf16.mxu0 0
    %1784 = vmatpush1.bf16.msra.mxu0 0
    %1785 = vmatprep.subr.bf16.mxu0 0
    %1786 = vmatpush1.bf16.msra.mxu0 0
    %1787 = vmatprep.subr.bf16.mxu0 0
    %1788 = vmatpush1.bf16.msra.mxu0 0
    %1789 = vmatprep.subr.bf16.mxu0 0
    %1790 = vmatpush1.bf16.msra.mxu0 0
    %1791 = vmatprep.subr.bf16.mxu0 0
    %1792 = vmatpush1.bf16.msra.mxu0 0
    %1793 = vmatprep.mubr.bf16.mxu0 0
    %1794 = vmatmul.mubr.bf16.gmra.mrb[0].mxu0 %v1666
    %v1795 = vpop.f32.mrb[0].mxu0
    %v1796 = vadd.f32 0.0, %v1795
    %v1797 = vpop.f32.mrb[0].mxu0
    %v1798 = vpop.f32.mrb[0].mxu0
    %v1799 = vadd.f32 0.0, %v1798
    %v1800 = vpop.f32.mrb[0].mxu0
    %1801 = vmatprep.mubr.bf16.mxu0 0
    %1802 = vmatmul.mubr.bf16.gmra.mrb[0].mxu0 %v1669
    %v1803 = vpop.f32.mrb[0].mxu0
    %v1804 = vadd.f32 0.0, %v1803
    %v1805 = vpop.f32.mrb[0].mxu0
    %v1806 = vpop.f32.mrb[0].mxu0
    %v1807 = vadd.f32 0.0, %v1806
    %v1808 = vpop.f32.mrb[0].mxu0
    %1809 = vmatprep.mubr.bf16.mxu0 0
    %1810 = vmatmul.mubr.bf16.gmra.mrb[0].mxu0 %v1672
    %v1811 = vpop.f32.mrb[0].mxu0
    %v1812 = vadd.f32 0.0, %v1811
    %v1813 = vpop.f32.mrb[0].mxu0
    %v1814 = vpop.f32.mrb[0].mxu0
    %v1815 = vadd.f32 0.0, %v1814
    %v1816 = vpop.f32.mrb[0].mxu0
    %1817 = vmatprep.mubr.bf16.mxu0 0
    %1818 = vmatmul.mubr.bf16.gmra.mrb[0].mxu0 %v1675
    %v1819 = vpop.f32.mrb[0].mxu0
    %v1820 = vadd.f32 0.0, %v1819
    %v1821 = vpop.f32.mrb[0].mxu0
    %v1822 = vpop.f32.mrb[0].mxu0
    %v1823 = vadd.f32 0.0, %v1822
    %v1824 = vpop.f32.mrb[0].mxu0
    %1825 = vmatprep.mubr.bf16.mxu0 0
    %1826 = vmatmul.mubr.bf16.gmra.mrb[0].mxu0 %v1678
    %v1827 = vpop.f32.mrb[0].mxu0
    %v1828 = vadd.f32 0.0, %v1827
    %v1829 = vpop.f32.mrb[0].mxu0
    %v1830 = vpop.f32.mrb[0].mxu0
    %v1831 = vadd.f32 0.0, %v1830
    %v1832 = vpop.f32.mrb[0].mxu0
    %1833 = vmatprep.mubr.bf16.mxu0 0
    %1834 = vmatmul.mubr.bf16.gmra.mrb[0].mxu0 %v1681
    %v1835 = vpop.f32.mrb[0].mxu0
    %v1836 = vadd.f32 0.0, %v1835
    %v1837 = vpop.f32.mrb[0].mxu0
    %v1838 = vpop.f32.mrb[0].mxu0
    %v1839 = vadd.f32 0.0, %v1838
    %v1840 = vpop.f32.mrb[0].mxu0
    %1841 = vmatprep.mubr.bf16.mxu0 0
    %1842 = vmatmul.mubr.bf16.gmra.mrb[0].mxu0 %v1684
    %v1843 = vpop.f32.mrb[0].mxu0
    %v1844 = vadd.f32 0.0, %v1843
    %v1845 = vpop.f32.mrb[0].mxu0
    %v1846 = vpop.f32.mrb[0].mxu0
    %v1847 = vadd.f32 0.0, %v1846
    %v1848 = vpop.f32.mrb[0].mxu0
    %1849 = vmatprep.mubr.bf16.mxu0 0
    %1850 = vmatmul.mubr.bf16.gmra.mrb[0].mxu0 %v1687
    %v1851 = vpop.f32.mrb[0].mxu0
    %v1852 = vadd.f32 0.0, %v1851
    %v1853 = vpop.f32.mrb[0].mxu0
    %v1854 = vpop.f32.mrb[0].mxu0
    %v1855 = vadd.f32 0.0, %v1854
    %v1856 = vpop.f32.mrb[0].mxu0
    %1857 = vmatprep.mubr.bf16.mxu0 0
    %1858 = vmatmul.mubr.bf16.gmra.mrb[0].mxu0 %v1690
    %v1859 = vpop.f32.mrb[0].mxu0
    %v1860 = vadd.f32 0.0, %v1859
    %v1861 = vpop.f32.mrb[0].mxu0
    %v1862 = vpop.f32.mrb[0].mxu0
    %v1863 = vadd.f32 0.0, %v1862
    %v1864 = vpop.f32.mrb[0].mxu0
    %1865 = vmatprep.mubr.bf16.mxu0 0
    %1866 = vmatmul.mubr.bf16.gmra.mrb[0].mxu0 %v1693
    %v1867 = vpop.f32.mrb[0].mxu0
    %v1868 = vadd.f32 0.0, %v1867
    %v1869 = vpop.f32.mrb[0].mxu0
    %v1870 = vpop.f32.mrb[0].mxu0
    %v1871 = vadd.f32 0.0, %v1870
    %v1872 = vpop.f32.mrb[0].mxu0
    %1873 = vmatprep.mubr.bf16.mxu0 0
    %1874 = vmatmul.mubr.bf16.gmra.mrb[0].mxu0 %v1696
    %v1875 = vpop.f32.mrb[0].mxu0
    %v1876 = vadd.f32 0.0, %v1875
    %v1877 = vpop.f32.mrb[0].mxu0
    %v1878 = vpop.f32.mrb[0].mxu0
    %v1879 = vadd.f32 0.0, %v1878
    %v1880 = vpop.f32.mrb[0].mxu0
    %1881 = vmatprep.mubr.bf16.mxu0 0
    %1882 = vmatmul.mubr.bf16.gmra.mrb[0].mxu0 %v1699
    %v1883 = vpop.f32.mrb[0].mxu0
    %v1884 = vadd.f32 0.0, %v1883
    %v1885 = vpop.f32.mrb[0].mxu0
    %v1886 = vpop.f32.mrb[0].mxu0
    %v1887 = vadd.f32 0.0, %v1886
    %v1888 = vpop.f32.mrb[0].mxu0
    %1889 = vmatprep.mubr.bf16.mxu0 0
    %1890 = vmatmul.mubr.bf16.gmra.mrb[0].mxu0 %v1702
    %v1891 = vpop.f32.mrb[0].mxu0
    %v1892 = vadd.f32 0.0, %v1891
    %v1893 = vpop.f32.mrb[0].mxu0
    %v1894 = vpop.f32.mrb[0].mxu0
    %v1895 = vadd.f32 0.0, %v1894
    %v1896 = vpop.f32.mrb[0].mxu0
    %1897 = vmatprep.mubr.bf16.mxu0 0
    %1898 = vmatmul.mubr.bf16.gmra.mrb[0].mxu0 %v1705
    %v1899 = vpop.f32.mrb[0].mxu0
    %v1900 = vadd.f32 0.0, %v1899
    %v1901 = vpop.f32.mrb[0].mxu0
    %v1902 = vpop.f32.mrb[0].mxu0
    %v1903 = vadd.f32 0.0, %v1902
    %v1904 = vpop.f32.mrb[0].mxu0
    %1905 = vmatprep.mubr.bf16.mxu0 0
    %1906 = vmatmul.mubr.bf16.gmra.mrb[0].mxu0 %v1708
    %v1907 = vpop.f32.mrb[0].mxu0
    %v1908 = vadd.f32 0.0, %v1907
    %v1909 = vpop.f32.mrb[0].mxu0
    %v1910 = vpop.f32.mrb[0].mxu0
    %v1911 = vadd.f32 0.0, %v1910
    %v1912 = vpop.f32.mrb[0].mxu0
    %1913 = vmatprep.mubr.bf16.mxu0 0
    %1914 = vmatmul.mubr.bf16.gmra.mrb[0].mxu0 %v1711
    %v1915 = vpop.f32.mrb[0].mxu0
    %v1916 = vadd.f32 0.0, %v1915
    %v1917 = vpop.f32.mrb[0].mxu0
    %v1918 = vpop.f32.mrb[0].mxu0
    %v1919 = vadd.f32 0.0, %v1918
    %v1920 = vpop.f32.mrb[0].mxu0
    %1921 = vmatprep.mubr.bf16.mxu0 0
    %1922 = vmatmul.mubr.bf16.gmra.mrb[0].mxu0 %v1714
    %v1923 = vpop.f32.mrb[0].mxu0
    %v1924 = vadd.f32 0.0, %v1923
    %v1925 = vpop.f32.mrb[0].mxu0
    %v1926 = vpop.f32.mrb[0].mxu0
    %v1927 = vadd.f32 0.0, %v1926
    %v1928 = vpop.f32.mrb[0].mxu0
    %1929 = vmatprep.mubr.bf16.mxu0 0
    %1930 = vmatmul.mubr.bf16.gmra.mrb[0].mxu0 %v1717
    %v1931 = vpop.f32.mrb[0].mxu0
    %v1932 = vadd.f32 0.0, %v1931
    %v1933 = vpop.f32.mrb[0].mxu0
    %v1934 = vpop.f32.mrb[0].mxu0
    %v1935 = vadd.f32 0.0, %v1934
    %v1936 = vpop.f32.mrb[0].mxu0
    %1937 = vmatprep.mubr.bf16.mxu0 0
    %1938 = vmatmul.mubr.bf16.gmra.mrb[0].mxu0 %v1720
    %v1939 = vpop.f32.mrb[0].mxu0
    %v1940 = vadd.f32 0.0, %v1939
    %v1941 = vpop.f32.mrb[0].mxu0
    %v1942 = vpop.f32.mrb[0].mxu0
    %v1943 = vadd.f32 0.0, %v1942
    %v1944 = vpop.f32.mrb[0].mxu0
    %1945 = vmatprep.mubr.bf16.mxu0 0
    %1946 = vmatmul.mubr.bf16.gmra.mrb[0].mxu0 %v1723
    %v1947 = vpop.f32.mrb[0].mxu0
    %v1948 = vadd.f32 0.0, %v1947
    %v1949 = vpop.f32.mrb[0].mxu0
    %v1950 = vpop.f32.mrb[0].mxu0
    %v1951 = vadd.f32 0.0, %v1950
    %v1952 = vpop.f32.mrb[0].mxu0
    %1953 = vmatprep.mubr.bf16.mxu0 0
    %1954 = vmatmul.mubr.bf16.gmra.mrb[0].mxu0 %v1726
    %v1955 = vpop.f32.mrb[0].mxu0
    %v1956 = vadd.f32 0.0, %v1955
    %v1957 = vpop.f32.mrb[0].mxu0
    %v1958 = vpop.f32.mrb[0].mxu0
    %v1959 = vadd.f32 0.0, %v1958
    %v1960 = vpop.f32.mrb[0].mxu0
    %1961 = vmatprep.mubr.bf16.mxu0 0
    %1962 = vmatmul.mubr.bf16.gmra.mrb[0].mxu0 %v1729
    %v1963 = vpop.f32.mrb[0].mxu0
    %v1964 = vadd.f32 0.0, %v1963
    %v1965 = vpop.f32.mrb[0].mxu0
    %v1966 = vpop.f32.mrb[0].mxu0
    %v1967 = vadd.f32 0.0, %v1966
    %v1968 = vpop.f32.mrb[0].mxu0
    %1969 = vmatprep.mubr.bf16.mxu0 0
    %1970 = vmatmul.mubr.bf16.gmra.mrb[0].mxu0 %v1732
    %v1971 = vpop.f32.mrb[0].mxu0
    %v1972 = vadd.f32 0.0, %v1971
    %v1973 = vpop.f32.mrb[0].mxu0
    %v1974 = vpop.f32.mrb[0].mxu0
    %v1975 = vadd.f32 0.0, %v1974
    %v1976 = vpop.f32.mrb[0].mxu0
    %1977 = vmatprep.mubr.bf16.mxu0 0
    %1978 = vmatmul.mubr.bf16.gmra.mrb[0].mxu0 %v1735
    %v1979 = vpop.f32.mrb[0].mxu0
    %v1980 = vadd.f32 0.0, %v1979
    %v1981 = vpop.f32.mrb[0].mxu0
    %v1982 = vpop.f32.mrb[0].mxu0
    %v1983 = vadd.f32 0.0, %v1982
    %v1984 = vpop.f32.mrb[0].mxu0
    %1985 = vmatprep.mubr.bf16.mxu0 0
    %1986 = vmatmul.mubr.bf16.gmra.mrb[0].mxu0 %v1738
    %v1987 = vpop.f32.mrb[0].mxu0
    %v1988 = vadd.f32 0.0, %v1987
    %v1989 = vpop.f32.mrb[0].mxu0
    %v1990 = vpop.f32.mrb[0].mxu0
    %v1991 = vadd.f32 0.0, %v1990
    %v1992 = vpop.f32.mrb[0].mxu0
    %1993 = vmatprep.mubr.bf16.mxu0 0
    %1994 = vmatmul.mubr.bf16.gmra.mrb[0].mxu0 %v1741
    %v1995 = vpop.f32.mrb[0].mxu0
    %v1996 = vadd.f32 0.0, %v1995
    %v1997 = vpop.f32.mrb[0].mxu0
    %v1998 = vpop.f32.mrb[0].mxu0
    %v1999 = vadd.f32 0.0, %v1998
    %v2000 = vpop.f32.mrb[0].mxu0
    %2001 = vmatprep.mubr.bf16.mxu0 0
    %2002 = vmatmul.mubr.bf16.gmra.mrb[0].mxu0 %v1744
    %v2003 = vpop.f32.mrb[0].mxu0
    %v2004 = vadd.f32 0.0, %v2003
    %v2005 = vpop.f32.mrb[0].mxu0
    %v2006 = vpop.f32.mrb[0].mxu0
    %v2007 = vadd.f32 0.0, %v2006
    %v2008 = vpop.f32.mrb[0].mxu0
    %2009 = vmatprep.mubr.bf16.mxu0 0
    %2010 = vmatmul.mubr.bf16.gmra.mrb[0].mxu0 %v1747
    %v2011 = vpop.f32.mrb[0].mxu0
    %v2012 = vadd.f32 0.0, %v2011
    %v2013 = vpop.f32.mrb[0].mxu0
    %v2014 = vpop.f32.mrb[0].mxu0
    %v2015 = vadd.f32 0.0, %v2014
    %v2016 = vpop.f32.mrb[0].mxu0
    %2017 = vmatprep.mubr.bf16.mxu0 0
    %2018 = vmatmul.mubr.bf16.gmra.mrb[0].mxu0 %v1750
    %v2019 = vpop.f32.mrb[0].mxu0
    %v2020 = vadd.f32 0.0, %v2019
    %v2021 = vpop.f32.mrb[0].mxu0
    %v2022 = vpop.f32.mrb[0].mxu0
    %v2023 = vadd.f32 0.0, %v2022
    %v2024 = vpop.f32.mrb[0].mxu0
    %2025 = vmatprep.mubr.bf16.mxu0 0
    %2026 = vmatmul.mubr.bf16.gmra.mrb[0].mxu0 %v1753
    %v2027 = vpop.f32.mrb[0].mxu0
    %v2028 = vadd.f32 0.0, %v2027
    %v2029 = vpop.f32.mrb[0].mxu0
    %v2030 = vpop.f32.mrb[0].mxu0
    %v2031 = vadd.f32 0.0, %v2030
    %v2032 = vpop.f32.mrb[0].mxu0
    %2033 = vmatprep.mubr.bf16.mxu0 0
    %2034 = vmatmul.mubr.bf16.gmra.mrb[0].mxu0 %v1756
    %v2035 = vpop.f32.mrb[0].mxu0
    %v2036 = vadd.f32 0.0, %v2035
    %v2037 = vpop.f32.mrb[0].mxu0
    %v2038 = vpop.f32.mrb[0].mxu0
    %v2039 = vadd.f32 0.0, %v2038
    %v2040 = vpop.f32.mrb[0].mxu0
    %2041 = vmatprep.mubr.bf16.mxu0 0
    %2042 = vmatmul.mubr.bf16.gmra.mrb[0].mxu0 %v1759
    %v2043 = vpop.f32.mrb[0].mxu0
    %v2044 = vadd.f32 0.0, %v2043
    %v2045 = vpop.f32.mrb[0].mxu0
    %v2046 = vpop.f32.mrb[0].mxu0
    %v2047 = vadd.f32 0.0, %v2046
    %v2048 = vpop.f32.mrb[0].mxu0
    %2049 = vdwg.mxu0
    %v2050 = vld [vmem:[%s1] sm:$0xf]
    %v2051 = vld [vmem:[%s1 + $0x4] sm:$0xf]
    %v2052 = vld [vmem:[%s1 + $0x8] sm:$0xf]
    %v2053 = vld [vmem:[%s1 + $0xc] sm:$0xf]
    %v2054 = vld [vmem:[%s1 + $0x10] sm:$0xf]
    %v2055 = vld [vmem:[%s1 + $0x14] sm:$0xf]
    %v2056 = vld [vmem:[%s1 + $0x18] sm:$0xf]
    %v2057 = vld [vmem:[%s1 + $0x1c] sm:$0xf]
    %v2058 = vld [vmem:[%s1 + $0x20] sm:$0xf]
    %v2059 = vld [vmem:[%s1 + $0x24] sm:$0xf]
    %v2060 = vld [vmem:[%s1 + $0x28] sm:$0xf]
    %v2061 = vld [vmem:[%s1 + $0x2c] sm:$0xf]
    %v2062 = vld [vmem:[%s1 + $0x30] sm:$0xf]
    %v2063 = vld [vmem:[%s1 + $0x34] sm:$0xf]
    %v2064 = vld [vmem:[%s1 + $0x38] sm:$0xf]
    %v2065 = vld [vmem:[%s1 + $0x3c] sm:$0xf]
    %v2066 = vld [vmem:[%s1 + $0x40] sm:$0xf]
    %v2067 = vld [vmem:[%s1 + $0x44] sm:$0xf]
    %v2068 = vld [vmem:[%s1 + $0x48] sm:$0xf]
    %v2069 = vld [vmem:[%s1 + $0x4c] sm:$0xf]
    %v2070 = vld [vmem:[%s1 + $0x50] sm:$0xf]
    %v2071 = vld [vmem:[%s1 + $0x54] sm:$0xf]
    %v2072 = vld [vmem:[%s1 + $0x58] sm:$0xf]
    %v2073 = vld [vmem:[%s1 + $0x5c] sm:$0xf]
    %v2074 = vld [vmem:[%s1 + $0x60] sm:$0xf]
    %v2075 = vld [vmem:[%s1 + $0x64] sm:$0xf]
    %v2076 = vld [vmem:[%s1 + $0x68] sm:$0xf]
    %v2077 = vld [vmem:[%s1 + $0x6c] sm:$0xf]
    %v2078 = vld [vmem:[%s1 + $0x70] sm:$0xf]
    %v2079 = vld [vmem:[%s1 + $0x74] sm:$0xf]
    %v2080 = vld [vmem:[%s1 + $0x78] sm:$0xf]
    %v2081 = vld [vmem:[%s1 + $0x7c] sm:$0xf]
    %v2082 = vld [vmem:[%s1 + $0x80] sm:$0xf]
    %v2083 = vld [vmem:[%s1 + $0x84] sm:$0xf]
    %v2084 = vld [vmem:[%s1 + $0x88] sm:$0xf]
    %v2085 = vld [vmem:[%s1 + $0x8c] sm:$0xf]
    %v2086 = vld [vmem:[%s1 + $0x90] sm:$0xf]
    %v2087 = vld [vmem:[%s1 + $0x94] sm:$0xf]
    %v2088 = vld [vmem:[%s1 + $0x98] sm:$0xf]
    %v2089 = vld [vmem:[%s1 + $0x9c] sm:$0xf]
    %v2090 = vld [vmem:[%s1 + $0xa0] sm:$0xf]
    %v2091 = vld [vmem:[%s1 + $0xa4] sm:$0xf]
    %v2092 = vld [vmem:[%s1 + $0xa8] sm:$0xf]
    %v2093 = vld [vmem:[%s1 + $0xac] sm:$0xf]
    %v2094 = vld [vmem:[%s1 + $0xb0] sm:$0xf]
    %v2095 = vld [vmem:[%s1 + $0xb4] sm:$0xf]
    %v2096 = vld [vmem:[%s1 + $0xb8] sm:$0xf]
    %v2097 = vld [vmem:[%s1 + $0xbc] sm:$0xf]
    %v2098 = vld [vmem:[%s1 + $0xc0] sm:$0xf]
    %v2099 = vld [vmem:[%s1 + $0xc4] sm:$0xf]
    %v2100 = vld [vmem:[%s1 + $0xc8] sm:$0xf]
    %v2101 = vld [vmem:[%s1 + $0xcc] sm:$0xf]
    %v2102 = vld [vmem:[%s1 + $0xd0] sm:$0xf]
    %v2103 = vld [vmem:[%s1 + $0xd4] sm:$0xf]
    %v2104 = vld [vmem:[%s1 + $0xd8] sm:$0xf]
    %v2105 = vld [vmem:[%s1 + $0xdc] sm:$0xf]
    %v2106 = vld [vmem:[%s1 + $0xe0] sm:$0xf]
    %v2107 = vld [vmem:[%s1 + $0xe4] sm:$0xf]
    %v2108 = vld [vmem:[%s1 + $0xe8] sm:$0xf]
    %v2109 = vld [vmem:[%s1 + $0xec] sm:$0xf]
    %v2110 = vld [vmem:[%s1 + $0xf0] sm:$0xf]
    %v2111 = vld [vmem:[%s1 + $0xf4] sm:$0xf]
    %v2112 = vld [vmem:[%s1 + $0xf8] sm:$0xf]
    %v2113 = vld [vmem:[%s1 + $0xfc] sm:$0xf]
    %v2114 = vunpack.c.l.bf16 %v2050
    %v2115 = vunpack.c.l.bf16 %v2051
    %v2116 = vunpack.c.l.bf16 %v2052
    %v2117 = vunpack.c.l.bf16 %v2053
    %v2118 = vunpack.c.l.bf16 %v2054
    %v2119 = vunpack.c.l.bf16 %v2055
    %v2120 = vunpack.c.l.bf16 %v2056
    %v2121 = vunpack.c.l.bf16 %v2057
    %v2122 = vunpack.c.l.bf16 %v2058
    %v2123 = vunpack.c.l.bf16 %v2059
    %v2124 = vunpack.c.l.bf16 %v2060
    %v2125 = vunpack.c.l.bf16 %v2061
    %v2126 = vunpack.c.l.bf16 %v2062
    %v2127 = vunpack.c.l.bf16 %v2063
    %v2128 = vunpack.c.l.bf16 %v2064
    %v2129 = vunpack.c.l.bf16 %v2065
    %v2130 = vunpack.c.l.bf16 %v2066
    %v2131 = vunpack.c.l.bf16 %v2067
    %v2132 = vunpack.c.l.bf16 %v2068
    %v2133 = vunpack.c.l.bf16 %v2069
    %v2134 = vunpack.c.l.bf16 %v2070
    %v2135 = vunpack.c.l.bf16 %v2071
    %v2136 = vunpack.c.l.bf16 %v2072
    %v2137 = vunpack.c.l.bf16 %v2073
    %v2138 = vunpack.c.l.bf16 %v2074
    %v2139 = vunpack.c.l.bf16 %v2075
    %v2140 = vunpack.c.l.bf16 %v2076
    %v2141 = vunpack.c.l.bf16 %v2077
    %v2142 = vunpack.c.l.bf16 %v2078
    %v2143 = vunpack.c.l.bf16 %v2079
    %v2144 = vunpack.c.l.bf16 %v2080
    %v2145 = vunpack.c.l.bf16 %v2081
    %v2146 = vunpack.c.l.bf16 %v2082
    %v2147 = vunpack.c.l.bf16 %v2083
    %v2148 = vunpack.c.l.bf16 %v2084
    %v2149 = vunpack.c.l.bf16 %v2085
    %v2150 = vunpack.c.l.bf16 %v2086
    %v2151 = vunpack.c.l.bf16 %v2087
    %v2152 = vunpack.c.l.bf16 %v2088
    %v2153 = vunpack.c.l.bf16 %v2089
    %v2154 = vunpack.c.l.bf16 %v2090
    %v2155 = vunpack.c.l.bf16 %v2091
    %v2156 = vunpack.c.l.bf16 %v2092
    %v2157 = vunpack.c.l.bf16 %v2093
    %v2158 = vunpack.c.l.bf16 %v2094
    %v2159 = vunpack.c.l.bf16 %v2095
    %v2160 = vunpack.c.l.bf16 %v2096
    %v2161 = vunpack.c.l.bf16 %v2097
    %v2162 = vunpack.c.l.bf16 %v2098
    %v2163 = vunpack.c.l.bf16 %v2099
    %v2164 = vunpack.c.l.bf16 %v2100
    %v2165 = vunpack.c.l.bf16 %v2101
    %v2166 = vunpack.c.l.bf16 %v2102
    %v2167 = vunpack.c.l.bf16 %v2103
    %v2168 = vunpack.c.l.bf16 %v2104
    %v2169 = vunpack.c.l.bf16 %v2105
    %v2170 = vunpack.c.l.bf16 %v2106
    %v2171 = vunpack.c.l.bf16 %v2107
    %v2172 = vunpack.c.l.bf16 %v2108
    %v2173 = vunpack.c.l.bf16 %v2109
    %v2174 = vunpack.c.l.bf16 %v2110
    %v2175 = vunpack.c.l.bf16 %v2111
    %v2176 = vunpack.c.l.bf16 %v2112
    %v2177 = vunpack.c.l.bf16 %v2113
    %v2178 = vld [vmem:[%s6] sm:$0x1]
    %v2180 = vlaneseq
    %v2181 = vshrl.u32 %v2180, 7
    %v2182 = vsub.s32 0, %v2181
    %v2183 = vrot.slane %v2178, %v2182
    %v2185 = vmul.f32 %v1796, %v2183
    %v2186 = vmul.f32 %v1799, %v2183
    %v2187 = vmul.f32 %v1804, %v2183
    %v2188 = vmul.f32 %v1807, %v2183
    %v2189 = vmul.f32 %v1812, %v2183
    %v2190 = vmul.f32 %v1815, %v2183
    %v2191 = vmul.f32 %v1820, %v2183
    %v2192 = vmul.f32 %v1823, %v2183
    %v2193 = vmul.f32 %v1828, %v2183
    %v2194 = vmul.f32 %v1831, %v2183
    %v2195 = vmul.f32 %v1836, %v2183
    %v2196 = vmul.f32 %v1839, %v2183
    %v2197 = vmul.f32 %v1844, %v2183
    %v2198 = vmul.f32 %v1847, %v2183
    %v2199 = vmul.f32 %v1852, %v2183
    %v2200 = vmul.f32 %v1855, %v2183
    %v2201 = vmul.f32 %v1860, %v2183
    %v2202 = vmul.f32 %v1863, %v2183
    %v2203 = vmul.f32 %v1868, %v2183
    %v2204 = vmul.f32 %v1871, %v2183
    %v2205 = vmul.f32 %v1876, %v2183
    %v2206 = vmul.f32 %v1879, %v2183
    %v2207 = vmul.f32 %v1884, %v2183
    %v2208 = vmul.f32 %v1887, %v2183
    %v2209 = vmul.f32 %v1892, %v2183
    %v2210 = vmul.f32 %v1895, %v2183
    %v2211 = vmul.f32 %v1900, %v2183
    %v2212 = vmul.f32 %v1903, %v2183
    %v2213 = vmul.f32 %v1908, %v2183
    %v2214 = vmul.f32 %v1911, %v2183
    %v2215 = vmul.f32 %v1916, %v2183
    %v2216 = vmul.f32 %v1919, %v2183
    %v2217 = vmul.f32 %v1924, %v2183
    %v2218 = vmul.f32 %v1927, %v2183
    %v2219 = vmul.f32 %v1932, %v2183
    %v2220 = vmul.f32 %v1935, %v2183
    %v2221 = vmul.f32 %v1940, %v2183
    %v2222 = vmul.f32 %v1943, %v2183
    %v2223 = vmul.f32 %v1948, %v2183
    %v2224 = vmul.f32 %v1951, %v2183
    %v2225 = vmul.f32 %v1956, %v2183
    %v2226 = vmul.f32 %v1959, %v2183
    %v2227 = vmul.f32 %v1964, %v2183
    %v2228 = vmul.f32 %v1967, %v2183
    %v2229 = vmul.f32 %v1972, %v2183
    %v2230 = vmul.f32 %v1975, %v2183
    %v2231 = vmul.f32 %v1980, %v2183
    %v2232 = vmul.f32 %v1983, %v2183
    %v2233 = vmul.f32 %v1988, %v2183
    %v2234 = vmul.f32 %v1991, %v2183
    %v2235 = vmul.f32 %v1996, %v2183
    %v2236 = vmul.f32 %v1999, %v2183
    %v2237 = vmul.f32 %v2004, %v2183
    %v2238 = vmul.f32 %v2007, %v2183
    %v2239 = vmul.f32 %v2012, %v2183
    %v2240 = vmul.f32 %v2015, %v2183
    %v2241 = vmul.f32 %v2020, %v2183
    %v2242 = vmul.f32 %v2023, %v2183
    %v2243 = vmul.f32 %v2028, %v2183
    %v2244 = vmul.f32 %v2031, %v2183
    %v2245 = vmul.f32 %v2036, %v2183
    %v2246 = vmul.f32 %v2039, %v2183
    %v2247 = vmul.f32 %v2044, %v2183
    %v2248 = vmul.f32 %v2047, %v2183
    %v2249 = vld [vmem:[%s7] sm:$0x1]
    %v2251 = vlaneseq
    %v2252 = vshrl.u32 %v2251, 7
    %v2253 = vsub.s32 0, %v2252
    %v2254 = vrot.slane %v2249, %v2253
    %v2256 = vadd.f32 %v2185, %v2254
    %v2257 = vadd.f32 %v2186, %v2254
    %v2258 = vadd.f32 %v2187, %v2254
    %v2259 = vadd.f32 %v2188, %v2254
    %v2260 = vadd.f32 %v2189, %v2254
    %v2261 = vadd.f32 %v2190, %v2254
    %v2262 = vadd.f32 %v2191, %v2254
    %v2263 = vadd.f32 %v2192, %v2254
    %v2264 = vadd.f32 %v2193, %v2254
    %v2265 = vadd.f32 %v2194, %v2254
    %v2266 = vadd.f32 %v2195, %v2254
    %v2267 = vadd.f32 %v2196, %v2254
    %v2268 = vadd.f32 %v2197, %v2254
    %v2269 = vadd.f32 %v2198, %v2254
    %v2270 = vadd.f32 %v2199, %v2254
    %v2271 = vadd.f32 %v2200, %v2254
    %v2272 = vadd.f32 %v2201, %v2254
    %v2273 = vadd.f32 %v2202, %v2254
    %v2274 = vadd.f32 %v2203, %v2254
    %v2275 = vadd.f32 %v2204, %v2254
    %v2276 = vadd.f32 %v2205, %v2254
    %v2277 = vadd.f32 %v2206, %v2254
    %v2278 = vadd.f32 %v2207, %v2254
    %v2279 = vadd.f32 %v2208, %v2254
    %v2280 = vadd.f32 %v2209, %v2254
    %v2281 = vadd.f32 %v2210, %v2254
    %v2282 = vadd.f32 %v2211, %v2254
    %v2283 = vadd.f32 %v2212, %v2254
    %v2284 = vadd.f32 %v2213, %v2254
    %v2285 = vadd.f32 %v2214, %v2254
    %v2286 = vadd.f32 %v2215, %v2254
    %v2287 = vadd.f32 %v2216, %v2254
    %v2288 = vadd.f32 %v2217, %v2254
    %v2289 = vadd.f32 %v2218, %v2254
    %v2290 = vadd.f32 %v2219, %v2254
    %v2291 = vadd.f32 %v2220, %v2254
    %v2292 = vadd.f32 %v2221, %v2254
    %v2293 = vadd.f32 %v2222, %v2254
    %v2294 = vadd.f32 %v2223, %v2254
    %v2295 = vadd.f32 %v2224, %v2254
    %v2296 = vadd.f32 %v2225, %v2254
    %v2297 = vadd.f32 %v2226, %v2254
    %v2298 = vadd.f32 %v2227, %v2254
    %v2299 = vadd.f32 %v2228, %v2254
    %v2300 = vadd.f32 %v2229, %v2254
    %v2301 = vadd.f32 %v2230, %v2254
    %v2302 = vadd.f32 %v2231, %v2254
    %v2303 = vadd.f32 %v2232, %v2254
    %v2304 = vadd.f32 %v2233, %v2254
    %v2305 = vadd.f32 %v2234, %v2254
    %v2306 = vadd.f32 %v2235, %v2254
    %v2307 = vadd.f32 %v2236, %v2254
    %v2308 = vadd.f32 %v2237, %v2254
    %v2309 = vadd.f32 %v2238, %v2254
    %v2310 = vadd.f32 %v2239, %v2254
    %v2311 = vadd.f32 %v2240, %v2254
    %v2312 = vadd.f32 %v2241, %v2254
    %v2313 = vadd.f32 %v2242, %v2254
    %v2314 = vadd.f32 %v2243, %v2254
    %v2315 = vadd.f32 %v2244, %v2254
    %v2316 = vadd.f32 %v2245, %v2254
    %v2317 = vadd.f32 %v2246, %v2254
    %v2318 = vadd.f32 %v2247, %v2254
    %v2319 = vadd.f32 %v2248, %v2254
    %v2320 = vadd.f32 %v2256, %v2114
    %v2321 = vadd.f32 %v2257, %v2115
    %v2322 = vadd.f32 %v2258, %v2116
    %v2323 = vadd.f32 %v2259, %v2117
    %v2324 = vadd.f32 %v2260, %v2118
    %v2325 = vadd.f32 %v2261, %v2119
    %v2326 = vadd.f32 %v2262, %v2120
    %v2327 = vadd.f32 %v2263, %v2121
    %v2328 = vadd.f32 %v2264, %v2122
    %v2329 = vadd.f32 %v2265, %v2123
    %v2330 = vadd.f32 %v2266, %v2124
    %v2331 = vadd.f32 %v2267, %v2125
    %v2332 = vadd.f32 %v2268, %v2126
    %v2333 = vadd.f32 %v2269, %v2127
    %v2334 = vadd.f32 %v2270, %v2128
    %v2335 = vadd.f32 %v2271, %v2129
    %v2336 = vadd.f32 %v2272, %v2130
    %v2337 = vadd.f32 %v2273, %v2131
    %v2338 = vadd.f32 %v2274, %v2132
    %v2339 = vadd.f32 %v2275, %v2133
    %v2340 = vadd.f32 %v2276, %v2134
    %v2341 = vadd.f32 %v2277, %v2135
    %v2342 = vadd.f32 %v2278, %v2136
    %v2343 = vadd.f32 %v2279, %v2137
    %v2344 = vadd.f32 %v2280, %v2138
    %v2345 = vadd.f32 %v2281, %v2139
    %v2346 = vadd.f32 %v2282, %v2140
    %v2347 = vadd.f32 %v2283, %v2141
    %v2348 = vadd.f32 %v2284, %v2142
    %v2349 = vadd.f32 %v2285, %v2143
    %v2350 = vadd.f32 %v2286, %v2144
    %v2351 = vadd.f32 %v2287, %v2145
    %v2352 = vadd.f32 %v2288, %v2146
    %v2353 = vadd.f32 %v2289, %v2147
    %v2354 = vadd.f32 %v2290, %v2148
    %v2355 = vadd.f32 %v2291, %v2149
    %v2356 = vadd.f32 %v2292, %v2150
    %v2357 = vadd.f32 %v2293, %v2151
    %v2358 = vadd.f32 %v2294, %v2152
    %v2359 = vadd.f32 %v2295, %v2153
    %v2360 = vadd.f32 %v2296, %v2154
    %v2361 = vadd.f32 %v2297, %v2155
    %v2362 = vadd.f32 %v2298, %v2156
    %v2363 = vadd.f32 %v2299, %v2157
    %v2364 = vadd.f32 %v2300, %v2158
    %v2365 = vadd.f32 %v2301, %v2159
    %v2366 = vadd.f32 %v2302, %v2160
    %v2367 = vadd.f32 %v2303, %v2161
    %v2368 = vadd.f32 %v2304, %v2162
    %v2369 = vadd.f32 %v2305, %v2163
    %v2370 = vadd.f32 %v2306, %v2164
    %v2371 = vadd.f32 %v2307, %v2165
    %v2372 = vadd.f32 %v2308, %v2166
    %v2373 = vadd.f32 %v2309, %v2167
    %v2374 = vadd.f32 %v2310, %v2168
    %v2375 = vadd.f32 %v2311, %v2169
    %v2376 = vadd.f32 %v2312, %v2170
    %v2377 = vadd.f32 %v2313, %v2171
    %v2378 = vadd.f32 %v2314, %v2172
    %v2379 = vadd.f32 %v2315, %v2173
    %v2380 = vadd.f32 %v2316, %v2174
    %v2381 = vadd.f32 %v2317, %v2175
    %v2382 = vadd.f32 %v2318, %v2176
    %v2383 = vadd.f32 %v2319, %v2177
    %v2384 = vmax.f32 %v2320, 0.0
    %v2385 = vmax.f32 %v2321, 0.0
    %v2386 = vmax.f32 %v2322, 0.0
    %v2387 = vmax.f32 %v2323, 0.0
    %v2388 = vmax.f32 %v2324, 0.0
    %v2389 = vmax.f32 %v2325, 0.0
    %v2390 = vmax.f32 %v2326, 0.0
    %v2391 = vmax.f32 %v2327, 0.0
    %v2392 = vmax.f32 %v2328, 0.0
    %v2393 = vmax.f32 %v2329, 0.0
    %v2394 = vmax.f32 %v2330, 0.0
    %v2395 = vmax.f32 %v2331, 0.0
    %v2396 = vmax.f32 %v2332, 0.0
    %v2397 = vmax.f32 %v2333, 0.0
    %v2398 = vmax.f32 %v2334, 0.0
    %v2399 = vmax.f32 %v2335, 0.0
    %v2400 = vmax.f32 %v2336, 0.0
    %v2401 = vmax.f32 %v2337, 0.0
    %v2402 = vmax.f32 %v2338, 0.0
    %v2403 = vmax.f32 %v2339, 0.0
    %v2404 = vmax.f32 %v2340, 0.0
    %v2405 = vmax.f32 %v2341, 0.0
    %v2406 = vmax.f32 %v2342, 0.0
    %v2407 = vmax.f32 %v2343, 0.0
    %v2408 = vmax.f32 %v2344, 0.0
    %v2409 = vmax.f32 %v2345, 0.0
    %v2410 = vmax.f32 %v2346, 0.0
    %v2411 = vmax.f32 %v2347, 0.0
    %v2412 = vmax.f32 %v2348, 0.0
    %v2413 = vmax.f32 %v2349, 0.0
    %v2414 = vmax.f32 %v2350, 0.0
    %v2415 = vmax.f32 %v2351, 0.0
    %v2416 = vmax.f32 %v2352, 0.0
    %v2417 = vmax.f32 %v2353, 0.0
    %v2418 = vmax.f32 %v2354, 0.0
    %v2419 = vmax.f32 %v2355, 0.0
    %v2420 = vmax.f32 %v2356, 0.0
    %v2421 = vmax.f32 %v2357, 0.0
    %v2422 = vmax.f32 %v2358, 0.0
    %v2423 = vmax.f32 %v2359, 0.0
    %v2424 = vmax.f32 %v2360, 0.0
    %v2425 = vmax.f32 %v2361, 0.0
    %v2426 = vmax.f32 %v2362, 0.0
    %v2427 = vmax.f32 %v2363, 0.0
    %v2428 = vmax.f32 %v2364, 0.0
    %v2429 = vmax.f32 %v2365, 0.0
    %v2430 = vmax.f32 %v2366, 0.0
    %v2431 = vmax.f32 %v2367, 0.0
    %v2432 = vmax.f32 %v2368, 0.0
    %v2433 = vmax.f32 %v2369, 0.0
    %v2434 = vmax.f32 %v2370, 0.0
    %v2435 = vmax.f32 %v2371, 0.0
    %v2436 = vmax.f32 %v2372, 0.0
    %v2437 = vmax.f32 %v2373, 0.0
    %v2438 = vmax.f32 %v2374, 0.0
    %v2439 = vmax.f32 %v2375, 0.0
    %v2440 = vmax.f32 %v2376, 0.0
    %v2441 = vmax.f32 %v2377, 0.0
    %v2442 = vmax.f32 %v2378, 0.0
    %v2443 = vmax.f32 %v2379, 0.0
    %v2444 = vmax.f32 %v2380, 0.0
    %v2445 = vmax.f32 %v2381, 0.0
    %v2446 = vmax.f32 %v2382, 0.0
    %v2447 = vmax.f32 %v2383, 0.0
    %2448 = vst [vmem:[#allocation2] sm:$0xff] %v2384
    %2449 = vst [vmem:[#allocation2 + $0x8] sm:$0xff] %v2385
    %2450 = vst [vmem:[#allocation2 + $0x10] sm:$0xff] %v2386
    %2451 = vst [vmem:[#allocation2 + $0x18] sm:$0xff] %v2387
    %2452 = vst [vmem:[#allocation2 + $0x20] sm:$0xff] %v2388
    %2453 = vst [vmem:[#allocation2 + $0x28] sm:$0xff] %v2389
    %2454 = vst [vmem:[#allocation2 + $0x30] sm:$0xff] %v2390
    %2455 = vst [vmem:[#allocation2 + $0x38] sm:$0xff] %v2391
    %2456 = vst [vmem:[#allocation2 + $0x40] sm:$0xff] %v2392
    %2457 = vst [vmem:[#allocation2 + $0x48] sm:$0xff] %v2393
    %2458 = vst [vmem:[#allocation2 + $0x50] sm:$0xff] %v2394
    %2459 = vst [vmem:[#allocation2 + $0x58] sm:$0xff] %v2395
    %2460 = vst [vmem:[#allocation2 + $0x60] sm:$0xff] %v2396
    %2461 = vst [vmem:[#allocation2 + $0x68] sm:$0xff] %v2397
    %2462 = vst [vmem:[#allocation2 + $0x70] sm:$0xff] %v2398
    %2463 = vst [vmem:[#allocation2 + $0x78] sm:$0xff] %v2399
    %2464 = vst [vmem:[#allocation2 + $0x80] sm:$0xff] %v2400
    %2465 = vst [vmem:[#allocation2 + $0x88] sm:$0xff] %v2401
    %2466 = vst [vmem:[#allocation2 + $0x90] sm:$0xff] %v2402
    %2467 = vst [vmem:[#allocation2 + $0x98] sm:$0xff] %v2403
    %2468 = vst [vmem:[#allocation2 + $0xa0] sm:$0xff] %v2404
    %2469 = vst [vmem:[#allocation2 + $0xa8] sm:$0xff] %v2405
    %2470 = vst [vmem:[#allocation2 + $0xb0] sm:$0xff] %v2406
    %2471 = vst [vmem:[#allocation2 + $0xb8] sm:$0xff] %v2407
    %2472 = vst [vmem:[#allocation2 + $0xc0] sm:$0xff] %v2408
    %2473 = vst [vmem:[#allocation2 + $0xc8] sm:$0xff] %v2409
    %2474 = vst [vmem:[#allocation2 + $0xd0] sm:$0xff] %v2410
    %2475 = vst [vmem:[#allocation2 + $0xd8] sm:$0xff] %v2411
    %2476 = vst [vmem:[#allocation2 + $0xe0] sm:$0xff] %v2412
    %2477 = vst [vmem:[#allocation2 + $0xe8] sm:$0xff] %v2413
    %2478 = vst [vmem:[#allocation2 + $0xf0] sm:$0xff] %v2414
    %2479 = vst [vmem:[#allocation2 + $0xf8] sm:$0xff] %v2415
    %2480 = vst [vmem:[#allocation2 + $0x100] sm:$0xff] %v2416
    %2481 = vst [vmem:[#allocation2 + $0x108] sm:$0xff] %v2417
    %2482 = vst [vmem:[#allocation2 + $0x110] sm:$0xff] %v2418
    %2483 = vst [vmem:[#allocation2 + $0x118] sm:$0xff] %v2419
    %2484 = vst [vmem:[#allocation2 + $0x120] sm:$0xff] %v2420
    %2485 = vst [vmem:[#allocation2 + $0x128] sm:$0xff] %v2421
    %2486 = vst [vmem:[#allocation2 + $0x130] sm:$0xff] %v2422
    %2487 = vst [vmem:[#allocation2 + $0x138] sm:$0xff] %v2423
    %2488 = vst [vmem:[#allocation2 + $0x140] sm:$0xff] %v2424
    %2489 = vst [vmem:[#allocation2 + $0x148] sm:$0xff] %v2425
    %2490 = vst [vmem:[#allocation2 + $0x150] sm:$0xff] %v2426
    %2491 = vst [vmem:[#allocation2 + $0x158] sm:$0xff] %v2427
    %2492 = vst [vmem:[#allocation2 + $0x160] sm:$0xff] %v2428
    %2493 = vst [vmem:[#allocation2 + $0x168] sm:$0xff] %v2429
    %2494 = vst [vmem:[#allocation2 + $0x170] sm:$0xff] %v2430
    %2495 = vst [vmem:[#allocation2 + $0x178] sm:$0xff] %v2431
    %2496 = vst [vmem:[#allocation2 + $0x180] sm:$0xff] %v2432
    %2497 = vst [vmem:[#allocation2 + $0x188] sm:$0xff] %v2433
    %2498 = vst [vmem:[#allocation2 + $0x190] sm:$0xff] %v2434
    %2499 = vst [vmem:[#allocation2 + $0x198] sm:$0xff] %v2435
    %2500 = vst [vmem:[#allocation2 + $0x1a0] sm:$0xff] %v2436
    %2501 = vst [vmem:[#allocation2 + $0x1a8] sm:$0xff] %v2437
    %2502 = vst [vmem:[#allocation2 + $0x1b0] sm:$0xff] %v2438
    %2503 = vst [vmem:[#allocation2 + $0x1b8] sm:$0xff] %v2439
    %2504 = vst [vmem:[#allocation2 + $0x1c0] sm:$0xff] %v2440
    %2505 = vst [vmem:[#allocation2 + $0x1c8] sm:$0xff] %v2441
    %2506 = vst [vmem:[#allocation2 + $0x1d0] sm:$0xff] %v2442
    %2507 = vst [vmem:[#allocation2 + $0x1d8] sm:$0xff] %v2443
    %2508 = vst [vmem:[#allocation2 + $0x1e0] sm:$0xff] %v2444
    %2509 = vst [vmem:[#allocation2 + $0x1e8] sm:$0xff] %v2445
    %2510 = vst [vmem:[#allocation2 + $0x1f0] sm:$0xff] %v2446
    %2511 = vst [vmem:[#allocation2 + $0x1f8] sm:$0xff] %v2447
    // Predicated region
    $region34: #{spatial_gcn_forward.3} parent=1 // pred_check
      _
    $region35: #{spatial_gcn_forward.3} parent=1 // pred_check_branch
      %2513 = sbr.rel (0) target = $region37
    $region36: #{spatial_gcn_forward.3} parent=1 // pred_region
      %s2515 = ssub.s32 8192, 8192
      %2516 = vsyncadd [#allocation3], %s2515
      %s2517 = sshll.u32 [#allocation2], 4
      %s2518 = int_to_ptr.vmem [resolvable:$true] %s2517
      %2523 = dma.vmem_to_hbm [thread:$0]  %s2518, 8192, %s8, [#allocation3], 128, 128, 8
    $region37: #{spatial_gcn_forward.3} parent=1 // pred_fallthru
      _
    // Predicated region
    $region38: #{spatial_gcn_forward.3} parent=1 // pred_check
      _
    $region39: #{spatial_gcn_forward.3} parent=1 // pred_check_branch
      %2525 = sbr.rel (0) target = $region41
    $region40: #{spatial_gcn_forward.3} parent=1 // pred_region
      %2526 = dma.done [#allocation3], 8192
    $region41: #{spatial_gcn_forward.3} parent=1 // pred_fallthru
      _
    %2527 = vsyncpa [#allocation3], 1

</llo_original>
